<compile_context>
chip_gen: v7x
topology: tpu7x:2x2x1
jax: 0.10.0
libtpu: 0.0.40
codegen_flags: <defaults>
</compile_context>

<pallas_src>
import jax
import jax.numpy as jnp
from jax.experimental import pallas as pl
from jax.experimental.pallas import tpu as pltpu


# ----------------------------- Pallas kernels ------------------------------

def _matmul_bias_relu_kernel(x_ref, w_ref, b_ref, o_ref):
    # x: (bm, K) f32, w: (K, Cout) bf16, b: (1, Cout) f32 -> o: (bm, Cout) f32
    y = jnp.dot(x_ref[...].astype(jnp.bfloat16), w_ref[...],
                preferred_element_type=jnp.float32)
    o_ref[...] = jnp.maximum(y + b_ref[...], 0.0).astype(o_ref.dtype)


def _fc_head_kernel(x_ref, w1_ref, b1_ref, w2_ref, b2_ref, w3_ref, b3_ref,
                    o_ref):
    # Fused fc1+ReLU -> fc2+ReLU -> fc3 -> log_softmax. All weights bf16,
    # accumulation / bias / softmax math in f32.
    h = jnp.dot(x_ref[...].astype(jnp.bfloat16), w1_ref[...],
                preferred_element_type=jnp.float32) + b1_ref[...]
    h = jnp.maximum(h, 0.0)
    h = jnp.dot(h.astype(jnp.bfloat16), w2_ref[...],
                preferred_element_type=jnp.float32) + b2_ref[...]
    h = jnp.maximum(h, 0.0)
    z = jnp.dot(h.astype(jnp.bfloat16), w3_ref[...],
                preferred_element_type=jnp.float32) + b3_ref[...]
    z = z - jnp.max(z, axis=-1, keepdims=True)
    lse = jnp.log(jnp.sum(jnp.exp(z), axis=-1, keepdims=True))
    o_ref[...] = (z - lse).astype(o_ref.dtype)


# ----------------------------- pallas_call wrappers -------------------------

def _row_block(M):
    # Split rows into 2 parallel blocks (v7x megacore) when (8,·) tiling allows.
    if M % 2 == 0 and (M // 2) % 8 == 0:
        return M // 2
    return M


def matmul_bias_relu(x, w_bf16, b_row):
    M, K = x.shape
    Kw, N = w_bf16.shape
    assert K == Kw
    bm = _row_block(M)
    grid = (M // bm,)
    return pl.pallas_call(
        _matmul_bias_relu_kernel,
        out_shape=jax.ShapeDtypeStruct((M, N), jnp.float32),
        grid_spec=pltpu.PrefetchScalarGridSpec(
            num_scalar_prefetch=0,
            grid=grid,
            in_specs=[
                pl.BlockSpec((bm, K), lambda i: (i, 0)),
                pl.BlockSpec((K, N), lambda i: (0, 0)),
                pl.BlockSpec((1, N), lambda i: (0, 0)),
            ],
            out_specs=pl.BlockSpec((bm, N), lambda i: (i, 0)),
        ),
        compiler_params=pltpu.CompilerParams(
            dimension_semantics=("parallel",)),
    )(x, w_bf16, b_row)


def fc_head(x, w1, b1, w2, b2, w3, b3):
    Nb, _ = x.shape
    C = w3.shape[1]

    def full(arr):
        nd = arr.ndim
        return pl.BlockSpec(arr.shape, lambda i, nd=nd: (0,) * nd)

    return pl.pallas_call(
        _fc_head_kernel,
        out_shape=jax.ShapeDtypeStruct((Nb, C), jnp.float32),
        grid_spec=pltpu.PrefetchScalarGridSpec(
            num_scalar_prefetch=0,
            grid=(1,),
            in_specs=[full(x), full(w1), full(b1), full(w2), full(b2),
                      full(w3), full(b3)],
            out_specs=pl.BlockSpec((Nb, C), lambda i: (0, 0)),
        ),
        compiler_params=pltpu.CompilerParams(
            dimension_semantics=("arbitrary",)),
    )(x, w1, b1, w2, b2, w3, b3)


# ----------------------------- glue (data movement only) --------------------

def _im2col_valid(x_nhwc, ksize=5):
    # K-axis row order is (kh, kw, cin) -> matches prepare_params weight layout.
    # At CIFAR shapes this intermediate is <= ~1 MB, so it stays in fused XLA glue.
    N, H, W, C = x_nhwc.shape
    Ho, Wo = H - ksize + 1, W - ksize + 1
    cols = []
    for kh in range(ksize):
        for kw in range(ksize):
            cols.append(x_nhwc[:, kh:kh + Ho, kw:kw + Wo, :])
    patches = jnp.stack(cols, axis=3)                       # (N, Ho, Wo, k*k, C)
    return patches.reshape(N * Ho * Wo, ksize * ksize * C), (N, Ho, Wo)


def conv5x5_relu(x_nhwc, wmat_bf16, b_row):
    patches, (N, Ho, Wo) = _im2col_valid(x_nhwc)            # (N*Ho*Wo, 25*Cin)
    y = matmul_bias_relu(patches, wmat_bf16, b_row)         # (N*Ho*Wo, Cout)
    return y.reshape(N, Ho, Wo, -1)


def maxpool3x3s2(x_nhwc):
    # nn.MaxPool2d(3, 2): kernel 3, stride 2, no padding, floor mode.
    return jax.lax.reduce_window(
        x_nhwc, jnp.array(-jnp.inf, x_nhwc.dtype), jax.lax.max,
        window_dimensions=(1, 3, 3, 1),
        window_strides=(1, 2, 2, 1),
        padding="VALID")


# ----------------------------- parameters -----------------------------------

def init_params(key, num_classes=10):
    # PyTorch-layout parameters (Conv2d: OIHW, Linear: (out, in)).
    ks = jax.random.split(key, 10)

    def u(k, shape, fan_in):
        bound = 1.0 / float(fan_in) ** 0.5
        return jax.random.uniform(k, shape, jnp.float32, -bound, bound)

    p = {}
    p["conv1_w"], p["conv1_b"] = u(ks[0], (64, 3, 5, 5), 3 * 25), u(ks[1], (64,), 3 * 25)
    p["conv2_w"], p["conv2_b"] = u(ks[2], (64, 64, 5, 5), 64 * 25), u(ks[3], (64,), 64 * 25)
    p["fc1_w"], p["fc1_b"] = u(ks[4], (384, 1024), 1024), u(ks[5], (384,), 1024)
    p["fc2_w"], p["fc2_b"] = u(ks[6], (192, 384), 384), u(ks[7], (192,), 384)
    p["fc3_w"], p["fc3_b"] = u(ks[8], (num_classes, 192), 192), u(ks[9], (num_classes,), 192)
    return p


def prepare_params(p):
    """One-time, OUTSIDE-jit conversion to kernel-friendly layouts.

    Conv weights -> (25*Cin, Cout) bf16 im2col matrices (row order (kh, kw, cin));
    FC weights   -> pre-transposed (K, N) bf16 (no `.T` inside the jitted forward);
    biases       -> (1, N) f32 rows.
    """
    def conv_mat(w_oihw):
        cout, cin, kh, kw = w_oihw.shape
        return (jnp.transpose(w_oihw, (2, 3, 1, 0))
                .reshape(kh * kw * cin, cout).astype(jnp.bfloat16))

    def row(b):
        return b.reshape(1, -1).astype(jnp.float32)

    q = {
        "conv1_w": conv_mat(p["conv1_w"]), "conv1_b": row(p["conv1_b"]),
        "conv2_w": conv_mat(p["conv2_w"]), "conv2_b": row(p["conv2_b"]),
        "fc1_w": jnp.transpose(p["fc1_w"]).astype(jnp.bfloat16), "fc1_b": row(p["fc1_b"]),
        "fc2_w": jnp.transpose(p["fc2_w"]).astype(jnp.bfloat16), "fc2_b": row(p["fc2_b"]),
        "fc3_w": jnp.transpose(p["fc3_w"]).astype(jnp.bfloat16), "fc3_b": row(p["fc3_b"]),
    }
    return jax.tree_util.tree_map(jnp.asarray, q)


# ----------------------------- forward ---------------------------------------

@jax.jit
def cnn_cifar_forward(params, x_nchw):
    p = params
    x = jnp.transpose(x_nchw, (0, 2, 3, 1))                       # NCHW -> NHWC
    x = conv5x5_relu(x, p["conv1_w"], p["conv1_b"])               # (N, 28, 28, 64)
    x = maxpool3x3s2(x)                                           # (N, 13, 13, 64)
    x = conv5x5_relu(x, p["conv2_w"], p["conv2_b"])               # (N, 9, 9, 64)
    x = maxpool3x3s2(x)                                           # (N, 4, 4, 64)
    # PyTorch x.view(-1, 64*4*4) flattens in (C, H, W) order.
    N, H, W, C = x.shape
    x = jnp.transpose(x, (0, 3, 1, 2)).reshape(N, C * H * W)      # (N, 1024)
    # Fused fc1+ReLU, fc2+ReLU, fc3, log_softmax in one Pallas kernel.
    return fc_head(x, p["fc1_w"], p["fc1_b"], p["fc2_w"], p["fc2_b"],
                   p["fc3_w"], p["fc3_b"])                        # (N, num_classes)


if __name__ == "__main__":
    key = jax.random.PRNGKey(0)
    k_params, k_x = jax.random.split(key)
    params = prepare_params(init_params(k_params, num_classes=10))
    # fc1 expects 64*4*4 = 1024 features -> CIFAR-shaped input (N, 3, 32, 32).
    x = jax.random.normal(k_x, (2, 3, 32, 32), jnp.float32)
    out = jax.block_until_ready(cnn_cifar_forward(params, x))
    assert out.shape == (2, 10)
    assert bool(jnp.all(jnp.isfinite(out)))
    print("KERNEL_OK")
</pallas_src>

<mosaic_0001>
module attributes {stable_mosaic.version = 11 : i64} {
  func.func @_matmul_bias_relu_kernel(%arg0: i32, %arg1: memref<784x75xf32, #tpu.memory_space<vmem>>, %arg2: memref<75x64xbf16, #tpu.memory_space<vmem>>, %arg3: memref<1x64xf32, #tpu.memory_space<vmem>>, %arg4: memref<784x64xf32, #tpu.memory_space<vmem>>) attributes {dimension_semantics = [#tpu.dimension_semantics<parallel>], iteration_bounds = array<i64: 2>, scalar_prefetch = 0 : i64, scratch_operands = 0 : i64, tpu.core_type = #tpu.core_type<tc>, window_params = [{transform_indices = @transform_0, window_bounds = array<i64: 784, 75>}, {pipeline_mode = #tpu.pipeline_mode<synchronous>, transform_indices = @transform_1, window_bounds = array<i64: 75, 64>}, {pipeline_mode = #tpu.pipeline_mode<synchronous>, transform_indices = @transform_2, window_bounds = array<i64: 1, 64>}, {transform_indices = @transform_3, window_bounds = array<i64: 784, 64>}]} {
    %c0 = arith.constant 0 : index
    %c0_0 = arith.constant 0 : index
    %0 = vector.load %arg1[%c0, %c0_0] : memref<784x75xf32, #tpu.memory_space<vmem>>, vector<784x75xf32>
    %1 = arith.truncf %0 : vector<784x75xf32> to vector<784x75xbf16>
    %c0_1 = arith.constant 0 : index
    %c0_2 = arith.constant 0 : index
    %2 = vector.load %arg2[%c0_1, %c0_2] : memref<75x64xbf16, #tpu.memory_space<vmem>>, vector<75x64xbf16>
    %cst = arith.constant dense<0.000000e+00> : vector<784x64xf32>
    %3 = tpu.matmul %1, %2, %cst {dimension_numbers = #tpu.dot_dimension_numbers<[1], [0], [0], [1], [0, 0, 1, 1], [], []>} : vector<784x75xbf16>, vector<75x64xbf16>, vector<784x64xf32> -> vector<784x64xf32>
    %c0_3 = arith.constant 0 : index
    %c0_4 = arith.constant 0 : index
    %4 = vector.load %arg3[%c0_3, %c0_4] : memref<1x64xf32, #tpu.memory_space<vmem>>, vector<1x64xf32>
    %5 = vector.broadcast %4 : vector<1x64xf32> to vector<784x64xf32>
    %6 = arith.addf %3, %5 : vector<784x64xf32>
    %cst_5 = arith.constant 0.000000e+00 : f32
    %7 = vector.broadcast %cst_5 : f32 to vector<784x64xf32>
    %8 = arith.maximumf %6, %7 : vector<784x64xf32>
    %c0_6 = arith.constant 0 : index
    %c0_7 = arith.constant 0 : index
    %9 = vector.load %arg4[%c0_6, %c0_7] : memref<784x64xf32, #tpu.memory_space<vmem>>, vector<784x64xf32>
    tpu.vector_store %arg4[%c0_6, %c0_7], %8 {strides = array<i32>} : memref<784x64xf32, #tpu.memory_space<vmem>>, vector<784x64xf32>,
    return
  }
  func.func @transform_0(%arg0: i32) -> (i32, i32) {
    %c0_i32 = arith.constant 0 : i32
    %c0_i32_0 = arith.constant 0 : i32
    return %arg0, %c0_i32 : i32, i32
  }
  func.func @transform_1(%arg0: i32) -> (i32, i32) {
    %c0_i32 = arith.constant 0 : i32
    %c0_i32_0 = arith.constant 0 : i32
    %c0_i32_1 = arith.constant 0 : i32
    return %c0_i32, %c0_i32_0 : i32, i32
  }
  func.func @transform_2(%arg0: i32) -> (i32, i32) {
    %c0_i32 = arith.constant 0 : i32
    %c0_i32_0 = arith.constant 0 : i32
    %c0_i32_1 = arith.constant 0 : i32
    return %c0_i32, %c0_i32_0 : i32, i32
  }
  func.func @transform_3(%arg0: i32) -> (i32, i32) {
    %c0_i32 = arith.constant 0 : i32
    %c0_i32_0 = arith.constant 0 : i32
    return %arg0, %c0_i32 : i32, i32
  }
}

module attributes {stable_mosaic.version = 11 : i64} {
  func.func @_matmul_bias_relu_kernel(%arg0: i32, %arg1: memref<162x1600xf32, #tpu.memory_space<vmem>>, %arg2: memref<1600x64xbf16, #tpu.memory_space<vmem>>, %arg3: memref<1x64xf32, #tpu.memory_space<vmem>>, %arg4: memref<162x64xf32, #tpu.memory_space<vmem>>) attributes {dimension_semantics = [#tpu.dimension_semantics<parallel>], iteration_bounds = array<i64: 1>, scalar_prefetch = 0 : i64, scratch_operands = 0 : i64, tpu.core_type = #tpu.core_type<tc>, window_params = [{transform_indices = @transform_0, window_bounds = array<i64: 162, 1600>}, {pipeline_mode = #tpu.pipeline_mode<synchronous>, transform_indices = @transform_1, window_bounds = array<i64: 1600, 64>}, {pipeline_mode = #tpu.pipeline_mode<synchronous>, transform_indices = @transform_2, window_bounds = array<i64: 1, 64>}, {transform_indices = @transform_3, window_bounds = array<i64: 162, 64>}]} {
    %c0 = arith.constant 0 : index
    %c0_0 = arith.constant 0 : index
    %0 = vector.load %arg1[%c0, %c0_0] : memref<162x1600xf32, #tpu.memory_space<vmem>>, vector<162x1600xf32>
    %1 = arith.truncf %0 : vector<162x1600xf32> to vector<162x1600xbf16>
    %c0_1 = arith.constant 0 : index
    %c0_2 = arith.constant 0 : index
    %2 = vector.load %arg2[%c0_1, %c0_2] : memref<1600x64xbf16, #tpu.memory_space<vmem>>, vector<1600x64xbf16>
    %cst = arith.constant dense<0.000000e+00> : vector<162x64xf32>
    %3 = tpu.matmul %1, %2, %cst {dimension_numbers = #tpu.dot_dimension_numbers<[1], [0], [0], [1], [0, 0, 1, 1], [], []>} : vector<162x1600xbf16>, vector<1600x64xbf16>, vector<162x64xf32> -> vector<162x64xf32>
    %c0_3 = arith.constant 0 : index
    %c0_4 = arith.constant 0 : index
    %4 = vector.load %arg3[%c0_3, %c0_4] : memref<1x64xf32, #tpu.memory_space<vmem>>, vector<1x64xf32>
    %5 = vector.broadcast %4 : vector<1x64xf32> to vector<162x64xf32>
    %6 = arith.addf %3, %5 : vector<162x64xf32>
    %cst_5 = arith.constant 0.000000e+00 : f32
    %7 = vector.broadcast %cst_5 : f32 to vector<162x64xf32>
    %8 = arith.maximumf %6, %7 : vector<162x64xf32>
    %c0_6 = arith.constant 0 : index
    %c0_7 = arith.constant 0 : index
    %9 = vector.load %arg4[%c0_6, %c0_7] : memref<162x64xf32, #tpu.memory_space<vmem>>, vector<162x64xf32>
    tpu.vector_store %arg4[%c0_6, %c0_7], %8 {strides = array<i32>} : memref<162x64xf32, #tpu.memory_space<vmem>>, vector<162x64xf32>,
    return
  }
  func.func @transform_0(%arg0: i32) -> (i32, i32) {
    %c0_i32 = arith.constant 0 : i32
    %c0_i32_0 = arith.constant 0 : i32
    return %arg0, %c0_i32 : i32, i32
  }
  func.func @transform_1(%arg0: i32) -> (i32, i32) {
    %c0_i32 = arith.constant 0 : i32
    %c0_i32_0 = arith.constant 0 : i32
    %c0_i32_1 = arith.constant 0 : i32
    return %c0_i32, %c0_i32_0 : i32, i32
  }
  func.func @transform_2(%arg0: i32) -> (i32, i32) {
    %c0_i32 = arith.constant 0 : i32
    %c0_i32_0 = arith.constant 0 : i32
    %c0_i32_1 = arith.constant 0 : i32
    return %c0_i32, %c0_i32_0 : i32, i32
  }
  func.func @transform_3(%arg0: i32) -> (i32, i32) {
    %c0_i32 = arith.constant 0 : i32
    %c0_i32_0 = arith.constant 0 : i32
    return %arg0, %c0_i32 : i32, i32
  }
}

module attributes {stable_mosaic.version = 11 : i64} {
  func.func @_fc_head_kernel(%arg0: i32, %arg1: memref<2x1024xf32, #tpu.memory_space<vmem>>, %arg2: memref<1024x384xbf16, #tpu.memory_space<vmem>>, %arg3: memref<1x384xf32, #tpu.memory_space<vmem>>, %arg4: memref<384x192xbf16, #tpu.memory_space<vmem>>, %arg5: memref<1x192xf32, #tpu.memory_space<vmem>>, %arg6: memref<192x10xbf16, #tpu.memory_space<vmem>>, %arg7: memref<1x10xf32, #tpu.memory_space<vmem>>, %arg8: memref<2x10xf32, #tpu.memory_space<vmem>>) attributes {dimension_semantics = [#tpu.dimension_semantics<arbitrary>], iteration_bounds = array<i64: 1>, scalar_prefetch = 0 : i64, scratch_operands = 0 : i64, tpu.core_type = #tpu.core_type<tc>, window_params = [{pipeline_mode = #tpu.pipeline_mode<synchronous>, transform_indices = @transform_0, window_bounds = array<i64: 2, 1024>}, {pipeline_mode = #tpu.pipeline_mode<synchronous>, transform_indices = @transform_1, window_bounds = array<i64: 1024, 384>}, {pipeline_mode = #tpu.pipeline_mode<synchronous>, transform_indices = @transform_2, window_bounds = array<i64: 1, 384>}, {pipeline_mode = #tpu.pipeline_mode<synchronous>, transform_indices = @transform_3, window_bounds = array<i64: 384, 192>}, {pipeline_mode = #tpu.pipeline_mode<synchronous>, transform_indices = @transform_4, window_bounds = array<i64: 1, 192>}, {pipeline_mode = #tpu.pipeline_mode<synchronous>, transform_indices = @transform_5, window_bounds = array<i64: 192, 10>}, {pipeline_mode = #tpu.pipeline_mode<synchronous>, transform_indices = @transform_6, window_bounds = array<i64: 1, 10>}, {pipeline_mode = #tpu.pipeline_mode<synchronous>, transform_indices = @transform_7, window_bounds = array<i64: 2, 10>}]} {
    %c0 = arith.constant 0 : index
    %c0_0 = arith.constant 0 : index
    %0 = vector.load %arg1[%c0, %c0_0] : memref<2x1024xf32, #tpu.memory_space<vmem>>, vector<2x1024xf32>
    %1 = arith.truncf %0 : vector<2x1024xf32> to vector<2x1024xbf16>
    %c0_1 = arith.constant 0 : index
    %c0_2 = arith.constant 0 : index
    %2 = vector.load %arg2[%c0_1, %c0_2] : memref<1024x384xbf16, #tpu.memory_space<vmem>>, vector<1024x384xbf16>
    %cst = arith.constant dense<0.000000e+00> : vector<2x384xf32>
    %3 = tpu.matmul %1, %2, %cst {dimension_numbers = #tpu.dot_dimension_numbers<[1], [0], [0], [1], [0, 0, 1, 1], [], []>} : vector<2x1024xbf16>, vector<1024x384xbf16>, vector<2x384xf32> -> vector<2x384xf32>
    %c0_3 = arith.constant 0 : index
    %c0_4 = arith.constant 0 : index
    %4 = vector.load %arg3[%c0_3, %c0_4] : memref<1x384xf32, #tpu.memory_space<vmem>>, vector<1x384xf32>
    %5 = vector.broadcast %4 : vector<1x384xf32> to vector<2x384xf32>
    %6 = arith.addf %3, %5 : vector<2x384xf32>
    %cst_5 = arith.constant 0.000000e+00 : f32
    %7 = vector.broadcast %cst_5 : f32 to vector<2x384xf32>
    %8 = arith.maximumf %6, %7 : vector<2x384xf32>
    %9 = arith.truncf %8 : vector<2x384xf32> to vector<2x384xbf16>
    %c0_6 = arith.constant 0 : index
    %c0_7 = arith.constant 0 : index
    %10 = vector.load %arg4[%c0_6, %c0_7] : memref<384x192xbf16, #tpu.memory_space<vmem>>, vector<384x192xbf16>
    %cst_8 = arith.constant dense<0.000000e+00> : vector<2x192xf32>
    %11 = tpu.matmul %9, %10, %cst_8 {dimension_numbers = #tpu.dot_dimension_numbers<[1], [0], [0], [1], [0, 0, 1, 1], [], []>} : vector<2x384xbf16>, vector<384x192xbf16>, vector<2x192xf32> -> vector<2x192xf32>
    %c0_9 = arith.constant 0 : index
    %c0_10 = arith.constant 0 : index
    %12 = vector.load %arg5[%c0_9, %c0_10] : memref<1x192xf32, #tpu.memory_space<vmem>>, vector<1x192xf32>
    %13 = vector.broadcast %12 : vector<1x192xf32> to vector<2x192xf32>
    %14 = arith.addf %11, %13 : vector<2x192xf32>
    %cst_11 = arith.constant 0.000000e+00 : f32
    %15 = vector.broadcast %cst_11 : f32 to vector<2x192xf32>
    %16 = arith.maximumf %14, %15 : vector<2x192xf32>
    %17 = arith.truncf %16 : vector<2x192xf32> to vector<2x192xbf16>
    %c0_12 = arith.constant 0 : index
    %c0_13 = arith.constant 0 : index
    %18 = vector.load %arg6[%c0_12, %c0_13] : memref<192x10xbf16, #tpu.memory_space<vmem>>, vector<192x10xbf16>
    %cst_14 = arith.constant dense<0.000000e+00> : vector<2x10xf32>
    %19 = tpu.matmul %17, %18, %cst_14 {dimension_numbers = #tpu.dot_dimension_numbers<[1], [0], [0], [1], [0, 0, 1, 1], [], []>} : vector<2x192xbf16>, vector<192x10xbf16>, vector<2x10xf32> -> vector<2x10xf32>
    %c0_15 = arith.constant 0 : index
    %c0_16 = arith.constant 0 : index
    %20 = vector.load %arg7[%c0_15, %c0_16] : memref<1x10xf32, #tpu.memory_space<vmem>>, vector<1x10xf32>
    %21 = vector.broadcast %20 : vector<1x10xf32> to vector<2x10xf32>
    %22 = arith.addf %19, %21 : vector<2x10xf32>
    %cst_17 = arith.constant dense<0xFF800000> : vector<2xf32>
    %23 = vector.multi_reduction <maximumf>, %22, %cst_17 [1] : vector<2x10xf32> to vector<2xf32>
    %24 = vector.shape_cast %23 : vector<2xf32> to vector<2x1xf32>
    %25 = vector.broadcast %24 : vector<2x1xf32> to vector<2x10xf32>
    %26 = arith.subf %22, %25 : vector<2x10xf32>
    %27 = math.exp %26 : vector<2x10xf32>
    %cst_18 = arith.constant dense<0.000000e+00> : vector<2xf32>
    %28 = vector.multi_reduction <add>, %27, %cst_18 [1] : vector<2x10xf32> to vector<2xf32>
    %29 = vector.shape_cast %28 : vector<2xf32> to vector<2x1xf32>
    %30 = math.log %29 : vector<2x1xf32>
    %31 = vector.broadcast %30 : vector<2x1xf32> to vector<2x10xf32>
    %32 = arith.subf %26, %31 : vector<2x10xf32>
    %c0_19 = arith.constant 0 : index
    %c0_20 = arith.constant 0 : index
    %33 = vector.load %arg8[%c0_19, %c0_20] : memref<2x10xf32, #tpu.memory_space<vmem>>, vector<2x10xf32>
    tpu.vector_store %arg8[%c0_19, %c0_20], %32 {strides = array<i32>} : memref<2x10xf32, #tpu.memory_space<vmem>>, vector<2x10xf32>,
    return
  }
  func.func @transform_0(%arg0: i32) -> (i32, i32) {
    %c0_i32 = arith.constant 0 : i32
    %c0_i32_0 = arith.constant 0 : i32
    %c0_i32_1 = arith.constant 0 : i32
    return %c0_i32, %c0_i32_0 : i32, i32
  }
  func.func @transform_1(%arg0: i32) -> (i32, i32) {
    %c0_i32 = arith.constant 0 : i32
    %c0_i32_0 = arith.constant 0 : i32
    %c0_i32_1 = arith.constant 0 : i32
    return %c0_i32, %c0_i32_0 : i32, i32
  }
  func.func @transform_2(%arg0: i32) -> (i32, i32) {
    %c0_i32 = arith.constant 0 : i32
    %c0_i32_0 = arith.constant 0 : i32
    %c0_i32_1 = arith.constant 0 : i32
    return %c0_i32, %c0_i32_0 : i32, i32
  }
  func.func @transform_3(%arg0: i32) -> (i32, i32) {
    %c0_i32 = arith.constant 0 : i32
    %c0_i32_0 = arith.constant 0 : i32
    %c0_i32_1 = arith.constant 0 : i32
    return %c0_i32, %c0_i32_0 : i32, i32
  }
  func.func @transform_4(%arg0: i32) -> (i32, i32) {
    %c0_i32 = arith.constant 0 : i32
    %c0_i32_0 = arith.constant 0 : i32
    %c0_i32_1 = arith.constant 0 : i32
    return %c0_i32, %c0_i32_0 : i32, i32
  }
  func.func @transform_5(%arg0: i32) -> (i32, i32) {
    %c0_i32 = arith.constant 0 : i32
    %c0_i32_0 = arith.constant 0 : i32
    %c0_i32_1 = arith.constant 0 : i32
    return %c0_i32, %c0_i32_0 : i32, i32
  }
  func.func @transform_6(%arg0: i32) -> (i32, i32) {
    %c0_i32 = arith.constant 0 : i32
    %c0_i32_0 = arith.constant 0 : i32
    %c0_i32_1 = arith.constant 0 : i32
    return %c0_i32, %c0_i32_0 : i32, i32
  }
  func.func @transform_7(%arg0: i32) -> (i32, i32) {
    %c0_i32 = arith.constant 0 : i32
    %c0_i32_0 = arith.constant 0 : i32
    %c0_i32_1 = arith.constant 0 : i32
    return %c0_i32, %c0_i32_0 : i32, i32
  }
}

</mosaic_0001>

<llo_original>
// kernel: cnn_cifar_forward.3
$region0: #{cnn_cifar_forward.3}
  #allocation0 [shape = 'u32[]', space=smem, size = 0x4, offset = 0x4, fixed_abs, tag = 'smem constant byte address 0x4 - core index']
  #allocation1 [shape = 'u32[144,128]{1,0:T(1,128)}', space=vmem, size = 0x12000, scoped, tag = 'internal scratch']
  %s0 = inlined_call_operand.vmem [shape: f32[1568,75], index: 0, kind: input, shape index: {}]
  %s1 = inlined_call_operand.vmem [shape: bf16[75,64], index: 1, kind: input, shape index: {}]
  %s2 = inlined_call_operand.vmem [shape: f32[1,64], index: 2, kind: input, shape index: {}]
  %s3 = inlined_call_operand.vmem [shape: f32[1568,64], index: 3, kind: output, shape index: {}]
  %s4 = sld [smem:[#allocation0]]
  $region45: #{cnn_cifar_forward.3} parent=0
    _
  %s6 = ssub.s32 1, %s4
  %s7 = scalar_select 0, %s6, %s4
  loop: start=0, step=1, limit=4
  $region2: #{cnn_cifar_forward.3} parent=0 // loop_pre_header
    _
  $region3: #{cnn_cifar_forward.3} parent=0 // loop_header
    %s9 = sphi 0, %s13
    %p10 = scmp.ge.s32.totalorder %s9, 4
    %s19 = sphi 0, %s21
    %s22 = sphi 0, %s19
    %s23 = sphi 0, %s22
    %s39 = sphi 0, %s23
    %s43 = sphi 0, %s43
    %s45 = sphi 0, %s43
    %s46 = sphi 0, %s45
    %s60 = sphi 0, %s46
    %s64 = sphi 0, %s64
    %s66 = sphi 0, %s64
    %s67 = sphi 0, %s66
    %s81 = sphi 0, %s67
    %s87 = sphi 0, %s89
    %s90 = sphi 0, %s87
    %s91 = sphi 0, %s90
    %s107 = sphi 0, %s91
  $region4: #{cnn_cifar_forward.3} parent=0 // loop_header_branch
    %12 = sbr.rel (%p10) target = $region8
  $region5: #{cnn_cifar_forward.3} parent=0 // loop_body
    %s14 = ssub.s32 %s9, 1
    %s15 = ssub.s32 %s9, 2
    %s16 = sadd.s32 %s9, 1
    %s17 = ssub.s32 %s9, %s16
    %p18 = scmp.eq.s32.totalorder %s17, 0
    %s20 = sadd.s32 %s19, 1
    %s21 = scalar_select %p18, %s19, %s20
    %p24 = pneg %p18
    %p25 = scmp.eq.s32.totalorder %s9, 1
    %p26 = por %p24, %p25
    %p27 = scmp.ne.s32.totalorder %s19, %s22
    %p28 = scmp.eq.s32.totalorder %s9, 0
    %p29 = por %p27, %p28
    %p30 = scmp.ne.s32.totalorder %s19, %s22
    %p31 = scmp.eq.s32.totalorder %s14, 1
    %p32 = por %p30, %p31
    %p33 = scmp.ne.s32.totalorder %s22, %s23
    %p34 = scmp.eq.s32.totalorder %s14, 0
    %p35 = por %p33, %p34
    %p36 = scmp.ne.s32.totalorder %s22, %s23
    %p37 = scmp.eq.s32.totalorder %s15, 1
    %p38 = por %p36, %p37
    %p40 = scmp.ne.s32.totalorder %s23, %s39
    %p41 = scmp.eq.s32.totalorder %s15, 0
    %p42 = por %p40, %p41
    %s44 = sadd.s32 %s43, 1
    %p47 = scmp.eq.s32.totalorder %s9, 1
    %p48 = scmp.ne.s32.totalorder %s43, %s45
    %p49 = scmp.eq.s32.totalorder %s9, 0
    %p50 = por %p48, %p49
    %p51 = scmp.ne.s32.totalorder %s43, %s45
    %p52 = scmp.eq.s32.totalorder %s14, 1
    %p53 = por %p51, %p52
    %p54 = scmp.ne.s32.totalorder %s45, %s46
    %p55 = scmp.eq.s32.totalorder %s14, 0
    %p56 = por %p54, %p55
    %p57 = scmp.ne.s32.totalorder %s45, %s46
    %p58 = scmp.eq.s32.totalorder %s15, 1
    %p59 = por %p57, %p58
    %p61 = scmp.ne.s32.totalorder %s46, %s60
    %p62 = scmp.eq.s32.totalorder %s15, 0
    %p63 = por %p61, %p62
    %s65 = sadd.s32 %s64, 1
    %p68 = scmp.eq.s32.totalorder %s9, 1
    %p69 = scmp.ne.s32.totalorder %s64, %s66
    %p70 = scmp.eq.s32.totalorder %s9, 0
    %p71 = por %p69, %p70
    %p72 = scmp.ne.s32.totalorder %s64, %s66
    %p73 = scmp.eq.s32.totalorder %s14, 1
    %p74 = por %p72, %p73
    %p75 = scmp.ne.s32.totalorder %s66, %s67
    %p76 = scmp.eq.s32.totalorder %s14, 0
    %p77 = por %p75, %p76
    %p78 = scmp.ne.s32.totalorder %s66, %s67
    %p79 = scmp.eq.s32.totalorder %s15, 1
    %p80 = por %p78, %p79
    %p82 = scmp.ne.s32.totalorder %s67, %s81
    %p83 = scmp.eq.s32.totalorder %s15, 0
    %p84 = por %p82, %p83
    %s85 = ssub.s32 %s9, %s16
    %p86 = scmp.eq.s32.totalorder %s85, 0
    %s88 = sadd.s32 %s87, 1
    %s89 = scalar_select %p86, %s87, %s88
    %p92 = pneg %p86
    %p93 = scmp.eq.s32.totalorder %s9, 1
    %p94 = por %p92, %p93
    %p95 = scmp.ne.s32.totalorder %s87, %s90
    %p96 = scmp.eq.s32.totalorder %s9, 0
    %p97 = por %p95, %p96
    %p98 = scmp.ne.s32.totalorder %s87, %s90
    %p99 = scmp.eq.s32.totalorder %s14, 1
    %p100 = por %p98, %p99
    %p101 = scmp.ne.s32.totalorder %s90, %s91
    %p102 = scmp.eq.s32.totalorder %s14, 0
    %p103 = por %p101, %p102
    %p104 = scmp.ne.s32.totalorder %s90, %s91
    %p105 = scmp.eq.s32.totalorder %s15, 1
    %p106 = por %p104, %p105
    %p108 = scmp.ne.s32.totalorder %s91, %s107
    %p109 = scmp.eq.s32.totalorder %s15, 0
    %p110 = por %p108, %p109
    %p111 = scmp.le.s32.totalorder 1, %s9
    %p112 = scmp.lt.s32.totalorder %s9, 3
    %p113 = pnand %p111, %p112
    %p114 = pneg %p113
    // Predicated region
    $region9: #{cnn_cifar_forward.3} parent=5 // pred_check
      _
    $region10: #{cnn_cifar_forward.3} parent=5 // pred_check_branch
      %116 = sbr.rel (%p113) target = $region12
    $region11: #{cnn_cifar_forward.3} parent=5 // pred_region
      %s117 = ssub.s32 %s9, 1
      // Predicated region
      $region13: #{cnn_cifar_forward.3} parent=11 // pred_check
        %p118 = pneg %p56
      $region14: #{cnn_cifar_forward.3} parent=11 // pred_check_branch
        %120 = sbr.rel (%p118) target = $region16
      $region15: #{cnn_cifar_forward.3} parent=11 // pred_region
        _
      $region16: #{cnn_cifar_forward.3} parent=11 // pred_fallthru
        _
      // Predicated region
      $region17: #{cnn_cifar_forward.3} parent=11 // pred_check
        %p121 = pneg %p77
      $region18: #{cnn_cifar_forward.3} parent=11 // pred_check_branch
        %123 = sbr.rel (%p121) target = $region20
      $region19: #{cnn_cifar_forward.3} parent=11 // pred_region
        _
      $region20: #{cnn_cifar_forward.3} parent=11 // pred_fallthru
        _
    $region12: #{cnn_cifar_forward.3} parent=5 // pred_fallthru
      _
    %p124 = scmp.lt.s32.totalorder %s9, 2
    // Predicated region
    $region21: #{cnn_cifar_forward.3} parent=5 // pred_check
      %p125 = pneg %p124
    $region22: #{cnn_cifar_forward.3} parent=5 // pred_check_branch
      %127 = sbr.rel (%p125) target = $region24
    $region23: #{cnn_cifar_forward.3} parent=5 // pred_region
      // Predicated region
      $region25: #{cnn_cifar_forward.3} parent=23 // pred_check
        %p128 = pneg %p29
      $region26: #{cnn_cifar_forward.3} parent=23 // pred_check_branch
        %130 = sbr.rel (%p128) target = $region28
      $region27: #{cnn_cifar_forward.3} parent=23 // pred_region
        %s131 = smul.u32 98, %s9
        %p132 = scmp.lt.s32.totalorder %s131, 195
        %s133 = scalar_select %p132, %s131, 195
        %s134 = smul.addr %s133, 8
        %s135 = scalar_lea.vmem %s0, %s134
        %s136 = smul.u32 98, %s9
      $region28: #{cnn_cifar_forward.3} parent=23 // pred_fallthru
        _
    $region24: #{cnn_cifar_forward.3} parent=5 // pred_fallthru
      _
    %p137 = scmp.le.s32.totalorder 1, %s9
    %p138 = scmp.lt.s32.totalorder %s9, 3
    %p139 = pnand %p137, %p138
    %p140 = pneg %p139
    // Predicated region
    $region29: #{cnn_cifar_forward.3} parent=5 // pred_check
      _
    $region30: #{cnn_cifar_forward.3} parent=5 // pred_check_branch
      %142 = sbr.rel (%p139) target = $region32
    $region31: #{cnn_cifar_forward.3} parent=5 // pred_region
      %s143 = ssub.s32 %s9, 1
      %s144 = smul.u32 98, %s14
      %p145 = scmp.lt.s32.totalorder %s144, 195
      %s146 = scalar_select %p145, %s144, 195
      %s147 = smul.addr %s146, 8
      %s148 = scalar_lea.vmem %s0, %s147
      %p149 = pneg %p35
      %p150 = pneg %p32
      %p151 = pneg %p56
      %p152 = pneg %p53
      %p153 = pneg %p77
      %p154 = pneg %p74
      %p155 = pneg %p103
      %p156 = pneg %p100
      %s157 = smul.u32 98, %s14
      %p158 = scmp.lt.s32.totalorder %s157, 195
      %s159 = scalar_select %p158, %s157, 195
      %s160 = smul.addr %s159, 8
      %s161 = scalar_lea.vmem %s3, %s160
      %s162 = smul.u32 98, %s14
      %p163 = scmp.lt.s32.totalorder %s162, 195
      %s164 = scalar_select %p163, %s162, 195
      %s165 = smul.addr %s164, 8
      %s166 = scalar_lea.vmem %s0, %s165
      %s167 = smul.u32 98, %s14
      %s168 = smul.u32 98, %s14
      %p169 = scmp.lt.s32.totalorder %s168, 195
      %s170 = scalar_select %p169, %s168, 195
      %s171 = smul.addr %s170, 8
      %s172 = scalar_lea.vmem %s3, %s171
      %s173 = smul.u32 98, %s14
      %v175 = vld [vmem:[%s166] sm:$0xff]
      %v176 = vld [vmem:[%s166 + $0x8] sm:$0xff]
      %v177 = vld [vmem:[%s166 + $0x10] sm:$0xff]
      %v178 = vld [vmem:[%s166 + $0x18] sm:$0xff]
      %v179 = vld [vmem:[%s166 + $0x20] sm:$0xff]
      %v180 = vld [vmem:[%s166 + $0x28] sm:$0xff]
      %v181 = vld [vmem:[%s166 + $0x30] sm:$0xff]
      %v182 = vld [vmem:[%s166 + $0x38] sm:$0xff]
      %v183 = vld [vmem:[%s166 + $0x40] sm:$0xff]
      %v184 = vld [vmem:[%s166 + $0x48] sm:$0xff]
      %v185 = vld [vmem:[%s166 + $0x50] sm:$0xff]
      %v186 = vld [vmem:[%s166 + $0x58] sm:$0xff]
      %v187 = vld [vmem:[%s166 + $0x60] sm:$0xff]
      %v188 = vld [vmem:[%s166 + $0x68] sm:$0xff]
      %v189 = vld [vmem:[%s166 + $0x70] sm:$0xff]
      %v190 = vld [vmem:[%s166 + $0x78] sm:$0xff]
      %v191 = vld [vmem:[%s166 + $0x80] sm:$0xff]
      %v192 = vld [vmem:[%s166 + $0x88] sm:$0xff]
      %v193 = vld [vmem:[%s166 + $0x90] sm:$0xff]
      %v194 = vld [vmem:[%s166 + $0x98] sm:$0xff]
      %v195 = vld [vmem:[%s166 + $0xa0] sm:$0xff]
      %v196 = vld [vmem:[%s166 + $0xa8] sm:$0xff]
      %v197 = vld [vmem:[%s166 + $0xb0] sm:$0xff]
      %v198 = vld [vmem:[%s166 + $0xb8] sm:$0xff]
      %v199 = vld [vmem:[%s166 + $0xc0] sm:$0xff]
      %v200 = vld [vmem:[%s166 + $0xc8] sm:$0xff]
      %v201 = vld [vmem:[%s166 + $0xd0] sm:$0xff]
      %v202 = vld [vmem:[%s166 + $0xd8] sm:$0xff]
      %v203 = vld [vmem:[%s166 + $0xe0] sm:$0xff]
      %v204 = vld [vmem:[%s166 + $0xe8] sm:$0xff]
      %v205 = vld [vmem:[%s166 + $0xf0] sm:$0xff]
      %v206 = vld [vmem:[%s166 + $0xf8] sm:$0xff]
      %v207 = vld [vmem:[%s166 + $0x100] sm:$0xff]
      %v208 = vld [vmem:[%s166 + $0x108] sm:$0xff]
      %v209 = vld [vmem:[%s166 + $0x110] sm:$0xff]
      %v210 = vld [vmem:[%s166 + $0x118] sm:$0xff]
      %v211 = vld [vmem:[%s166 + $0x120] sm:$0xff]
      %v212 = vld [vmem:[%s166 + $0x128] sm:$0xff]
      %v213 = vld [vmem:[%s166 + $0x130] sm:$0xff]
      %v214 = vld [vmem:[%s166 + $0x138] sm:$0xff]
      %v215 = vld [vmem:[%s166 + $0x140] sm:$0xff]
      %v216 = vld [vmem:[%s166 + $0x148] sm:$0xff]
      %v217 = vld [vmem:[%s166 + $0x150] sm:$0xff]
      %v218 = vld [vmem:[%s166 + $0x158] sm:$0xff]
      %v219 = vld [vmem:[%s166 + $0x160] sm:$0xff]
      %v220 = vld [vmem:[%s166 + $0x168] sm:$0xff]
      %v221 = vld [vmem:[%s166 + $0x170] sm:$0xff]
      %v222 = vld [vmem:[%s166 + $0x178] sm:$0xff]
      %v223 = vld [vmem:[%s166 + $0x180] sm:$0xff]
      %v224 = vld [vmem:[%s166 + $0x188] sm:$0xff]
      %v225 = vld [vmem:[%s166 + $0x190] sm:$0xff]
      %v226 = vld [vmem:[%s166 + $0x198] sm:$0xff]
      %v227 = vld [vmem:[%s166 + $0x1a0] sm:$0xff]
      %v228 = vld [vmem:[%s166 + $0x1a8] sm:$0xff]
      %v229 = vld [vmem:[%s166 + $0x1b0] sm:$0xff]
      %v230 = vld [vmem:[%s166 + $0x1b8] sm:$0xff]
      %v231 = vld [vmem:[%s166 + $0x1c0] sm:$0xff]
      %v232 = vld [vmem:[%s166 + $0x1c8] sm:$0xff]
      %v233 = vld [vmem:[%s166 + $0x1d0] sm:$0xff]
      %v234 = vld [vmem:[%s166 + $0x1d8] sm:$0xff]
      %v235 = vld [vmem:[%s166 + $0x1e0] sm:$0xff]
      %v236 = vld [vmem:[%s166 + $0x1e8] sm:$0xff]
      %v237 = vld [vmem:[%s166 + $0x1f0] sm:$0xff]
      %v238 = vld [vmem:[%s166 + $0x1f8] sm:$0xff]
      %v239 = vld [vmem:[%s166 + $0x200] sm:$0xff]
      %v240 = vld [vmem:[%s166 + $0x208] sm:$0xff]
      %v241 = vld [vmem:[%s166 + $0x210] sm:$0xff]
      %v242 = vld [vmem:[%s166 + $0x218] sm:$0xff]
      %v243 = vld [vmem:[%s166 + $0x220] sm:$0xff]
      %v244 = vld [vmem:[%s166 + $0x228] sm:$0xff]
      %v245 = vld [vmem:[%s166 + $0x230] sm:$0xff]
      %v246 = vld [vmem:[%s166 + $0x238] sm:$0xff]
      %v247 = vld [vmem:[%s166 + $0x240] sm:$0xff]
      %v248 = vld [vmem:[%s166 + $0x248] sm:$0xff]
      %v249 = vld [vmem:[%s166 + $0x250] sm:$0xff]
      %v250 = vld [vmem:[%s166 + $0x258] sm:$0xff]
      %v251 = vld [vmem:[%s166 + $0x260] sm:$0xff]
      %v252 = vld [vmem:[%s166 + $0x268] sm:$0xff]
      %v253 = vld [vmem:[%s166 + $0x270] sm:$0xff]
      %v254 = vld [vmem:[%s166 + $0x278] sm:$0xff]
      %v255 = vld [vmem:[%s166 + $0x280] sm:$0xff]
      %v256 = vld [vmem:[%s166 + $0x288] sm:$0xff]
      %v257 = vld [vmem:[%s166 + $0x290] sm:$0xff]
      %v258 = vld [vmem:[%s166 + $0x298] sm:$0xff]
      %v259 = vld [vmem:[%s166 + $0x2a0] sm:$0xff]
      %v260 = vld [vmem:[%s166 + $0x2a8] sm:$0xff]
      %v261 = vld [vmem:[%s166 + $0x2b0] sm:$0xff]
      %v262 = vld [vmem:[%s166 + $0x2b8] sm:$0xff]
      %v263 = vld [vmem:[%s166 + $0x2c0] sm:$0xff]
      %v264 = vld [vmem:[%s166 + $0x2c8] sm:$0xff]
      %v265 = vld [vmem:[%s166 + $0x2d0] sm:$0xff]
      %v266 = vld [vmem:[%s166 + $0x2d8] sm:$0xff]
      %v267 = vld [vmem:[%s166 + $0x2e0] sm:$0xff]
      %v268 = vld [vmem:[%s166 + $0x2e8] sm:$0xff]
      %v269 = vld [vmem:[%s166 + $0x2f0] sm:$0xff]
      %v270 = vld [vmem:[%s166 + $0x2f8] sm:$0xff]
      %v271 = vld [vmem:[%s166 + $0x300] sm:$0xff]
      %v272 = vld [vmem:[%s166 + $0x308] sm:$0xff]
      %v273 = vpack.c.bf16 %v176, %v175
      %v274 = vpack.c.bf16 %v178, %v177
      %v275 = vpack.c.bf16 %v180, %v179
      %v276 = vpack.c.bf16 %v182, %v181
      %v277 = vpack.c.bf16 %v184, %v183
      %v278 = vpack.c.bf16 %v186, %v185
      %v279 = vpack.c.bf16 %v188, %v187
      %v280 = vpack.c.bf16 %v190, %v189
      %v281 = vpack.c.bf16 %v192, %v191
      %v282 = vpack.c.bf16 %v194, %v193
      %v283 = vpack.c.bf16 %v196, %v195
      %v284 = vpack.c.bf16 %v198, %v197
      %v285 = vpack.c.bf16 %v200, %v199
      %v286 = vpack.c.bf16 %v202, %v201
      %v287 = vpack.c.bf16 %v204, %v203
      %v288 = vpack.c.bf16 %v206, %v205
      %v289 = vpack.c.bf16 %v208, %v207
      %v290 = vpack.c.bf16 %v210, %v209
      %v291 = vpack.c.bf16 %v212, %v211
      %v292 = vpack.c.bf16 %v214, %v213
      %v293 = vpack.c.bf16 %v216, %v215
      %v294 = vpack.c.bf16 %v218, %v217
      %v295 = vpack.c.bf16 %v220, %v219
      %v296 = vpack.c.bf16 %v222, %v221
      %v297 = vpack.c.bf16 %v224, %v223
      %v298 = vpack.c.bf16 %v226, %v225
      %v299 = vpack.c.bf16 %v228, %v227
      %v300 = vpack.c.bf16 %v230, %v229
      %v301 = vpack.c.bf16 %v232, %v231
      %v302 = vpack.c.bf16 %v234, %v233
      %v303 = vpack.c.bf16 %v236, %v235
      %v304 = vpack.c.bf16 %v238, %v237
      %v305 = vpack.c.bf16 %v240, %v239
      %v306 = vpack.c.bf16 %v242, %v241
      %v307 = vpack.c.bf16 %v244, %v243
      %v308 = vpack.c.bf16 %v246, %v245
      %v309 = vpack.c.bf16 %v248, %v247
      %v310 = vpack.c.bf16 %v250, %v249
      %v311 = vpack.c.bf16 %v252, %v251
      %v312 = vpack.c.bf16 %v254, %v253
      %v313 = vpack.c.bf16 %v256, %v255
      %v314 = vpack.c.bf16 %v258, %v257
      %v315 = vpack.c.bf16 %v260, %v259
      %v316 = vpack.c.bf16 %v262, %v261
      %v317 = vpack.c.bf16 %v264, %v263
      %v318 = vpack.c.bf16 %v266, %v265
      %v319 = vpack.c.bf16 %v268, %v267
      %v320 = vpack.c.bf16 %v270, %v269
      %v321 = vpack.c.bf16 %v272, %v271
      %v322 = vld [vmem:[%s1] sm:$0xf]
      %v323 = vld [vmem:[%s1 + $0x4] sm:$0xf]
      %v324 = vld [vmem:[%s1 + $0x8] sm:$0xf]
      %v325 = vld [vmem:[%s1 + $0xc] sm:$0xf]
      %v326 = vld [vmem:[%s1 + $0x10] sm:$0xf]
      %v327 = vld [vmem:[%s1 + $0x14] sm:$0xf]
      %v328 = vld [vmem:[%s1 + $0x18] sm:$0xf]
      %v329 = vld [vmem:[%s1 + $0x1c] sm:$0xf]
      %v330 = vld [vmem:[%s1 + $0x20] sm:$0xf]
      %v331 = vld [vmem:[%s1 + $0x24] sm:$0x3]
      %v332 = vld [vmem:[%s2] sm:$0x1]
      %v334 = vlaneseq
      %v335 = vshrl.u32 %v334, 7
      %v336 = vsub.s32 0, %v335
      %v337 = vrot.slane %v332, %v336
      %v349 = vunpack.c.l.b16 %v322
      %v350 = vunpack.c.l.b16 %v323
      %v351 = vunpack.c.l.b16 %v324
      %v352 = vunpack.c.l.b16 %v325
      %v353 = vunpack.c.l.b16 %v326
      %v354 = vunpack.c.l.b16 %v327
      %v355 = vunpack.c.l.b16 %v328
      %v356 = vunpack.c.l.b16 %v329
      %v357 = vunpack.c.l.b16 %v330
      %v358 = vunpack.c.l.b16 %v331
      %v359 = vpack.c.b16 %v350, %v349
      %v360 = vpack.c.b16 %v352, %v351
      %v361 = vpack.c.b16 %v354, %v353
      %v362 = vpack.c.b16 %v356, %v355
      %v363 = vpack.c.b16 %v358, %v357
      %vm368 = vcmask 613376
      %v370 = vsel %vm368, %v273, 0
      %v373 = vsel %vm368, %v274, 0
      %v376 = vsel %vm368, %v275, 0
      %v379 = vsel %vm368, %v276, 0
      %v382 = vsel %vm368, %v277, 0
      %v385 = vsel %vm368, %v278, 0
      %v388 = vsel %vm368, %v279, 0
      %v391 = vsel %vm368, %v280, 0
      %v394 = vsel %vm368, %v281, 0
      %v397 = vsel %vm368, %v282, 0
      %v400 = vsel %vm368, %v283, 0
      %v403 = vsel %vm368, %v284, 0
      %v406 = vsel %vm368, %v285, 0
      %v409 = vsel %vm368, %v286, 0
      %v412 = vsel %vm368, %v287, 0
      %v415 = vsel %vm368, %v288, 0
      %v418 = vsel %vm368, %v289, 0
      %v421 = vsel %vm368, %v290, 0
      %v424 = vsel %vm368, %v291, 0
      %v427 = vsel %vm368, %v292, 0
      %v430 = vsel %vm368, %v293, 0
      %v433 = vsel %vm368, %v294, 0
      %v436 = vsel %vm368, %v295, 0
      %v439 = vsel %vm368, %v296, 0
      %v442 = vsel %vm368, %v297, 0
      %v445 = vsel %vm368, %v298, 0
      %v448 = vsel %vm368, %v299, 0
      %v451 = vsel %vm368, %v300, 0
      %v454 = vsel %vm368, %v301, 0
      %v457 = vsel %vm368, %v302, 0
      %v460 = vsel %vm368, %v303, 0
      %v463 = vsel %vm368, %v304, 0
      %v466 = vsel %vm368, %v305, 0
      %v469 = vsel %vm368, %v306, 0
      %v472 = vsel %vm368, %v307, 0
      %v475 = vsel %vm368, %v308, 0
      %v478 = vsel %vm368, %v309, 0
      %v481 = vsel %vm368, %v310, 0
      %v484 = vsel %vm368, %v311, 0
      %v487 = vsel %vm368, %v312, 0
      %v490 = vsel %vm368, %v313, 0
      %v493 = vsel %vm368, %v314, 0
      %v496 = vsel %vm368, %v315, 0
      %v499 = vsel %vm368, %v316, 0
      %v502 = vsel %vm368, %v317, 0
      %v505 = vsel %vm368, %v318, 0
      %v508 = vsel %vm368, %v319, 0
      %v511 = vsel %vm368, %v320, 0
      %v514 = vsel %vm368, %v321, 0
      %vm516 = vcmask 1044480
      %vm517 = vcmask 1045504
      %v518 = vsel %vm516, 4294967295, 65535
      %v519 = vsel %vm517, %v518, 0
      %v521 = vand.u32 %v363, %v519
      %523 = vmatprep.subr.bf16.mxu0 0
      %524 = vmatpush1.bf16.msra.mxu0 %v359
      %525 = vmatprep.subr.bf16.mxu0 0
      %526 = vmatpush1.bf16.msra.mxu0 %v360
      %527 = vmatprep.subr.bf16.mxu0 0
      %528 = vmatpush1.bf16.msra.mxu0 %v361
      %529 = vmatprep.subr.bf16.mxu0 0
      %530 = vmatpush1.bf16.msra.mxu0 %v362
      %531 = vmatprep.subr.bf16.mxu0 0
      %532 = vmatpush1.bf16.msra.mxu0 %v521
      %533 = vmatprep.subr.bf16.mxu0 0
      %534 = vmatpush1.bf16.msra.mxu0 0
      %535 = vmatprep.subr.bf16.mxu0 0
      %536 = vmatpush1.bf16.msra.mxu0 0
      %537 = vmatprep.subr.bf16.mxu0 0
      %538 = vmatpush1.bf16.msra.mxu0 0
      %539 = vmatprep.subr.bf16.mxu0 0
      %540 = vmatpush1.bf16.msra.mxu0 0
      %541 = vmatprep.subr.bf16.mxu0 0
      %542 = vmatpush1.bf16.msra.mxu0 0
      %543 = vmatprep.subr.bf16.mxu0 0
      %544 = vmatpush1.bf16.msra.mxu0 0
      %545 = vmatprep.subr.bf16.mxu0 0
      %546 = vmatpush1.bf16.msra.mxu0 0
      %547 = vmatprep.subr.bf16.mxu0 0
      %548 = vmatpush1.bf16.msra.mxu0 0
      %549 = vmatprep.subr.bf16.mxu0 0
      %550 = vmatpush1.bf16.msra.mxu0 0
      %551 = vmatprep.subr.bf16.mxu0 0
      %552 = vmatpush1.bf16.msra.mxu0 0
      %553 = vmatprep.subr.bf16.mxu0 0
      %554 = vmatpush1.bf16.msra.mxu0 0
      %555 = vmatprep.mubr.bf16.mxu0 0
      %556 = vmatmul.mubr.bf16.gmra.mrb[0].mxu0 %v370
      %v557 = vpop.f32.mrb[0].mxu0
      %v558 = vadd.f32 %v337, %v557
      %v559 = vpop.f32.mrb[0].mxu0
      %v560 = vpop.f32.mrb[0].mxu0
      %v561 = vadd.f32 %v337, %v560
      %v562 = vpop.f32.mrb[0].mxu0
      %563 = vmatprep.mubr.bf16.mxu0 0
      %564 = vmatmul.mubr.bf16.gmra.mrb[0].mxu0 %v373
      %v565 = vpop.f32.mrb[0].mxu0
      %v566 = vadd.f32 %v337, %v565
      %v567 = vpop.f32.mrb[0].mxu0
      %v568 = vpop.f32.mrb[0].mxu0
      %v569 = vadd.f32 %v337, %v568
      %v570 = vpop.f32.mrb[0].mxu0
      %571 = vmatprep.mubr.bf16.mxu0 0
      %572 = vmatmul.mubr.bf16.gmra.mrb[0].mxu0 %v376
      %v573 = vpop.f32.mrb[0].mxu0
      %v574 = vadd.f32 %v337, %v573
      %v575 = vpop.f32.mrb[0].mxu0
      %v576 = vpop.f32.mrb[0].mxu0
      %v577 = vadd.f32 %v337, %v576
      %v578 = vpop.f32.mrb[0].mxu0
      %579 = vmatprep.mubr.bf16.mxu0 0
      %580 = vmatmul.mubr.bf16.gmra.mrb[0].mxu0 %v379
      %v581 = vpop.f32.mrb[0].mxu0
      %v582 = vadd.f32 %v337, %v581
      %v583 = vpop.f32.mrb[0].mxu0
      %v584 = vpop.f32.mrb[0].mxu0
      %v585 = vadd.f32 %v337, %v584
      %v586 = vpop.f32.mrb[0].mxu0
      %587 = vmatprep.mubr.bf16.mxu0 0
      %588 = vmatmul.mubr.bf16.gmra.mrb[0].mxu0 %v382
      %v589 = vpop.f32.mrb[0].mxu0
      %v590 = vadd.f32 %v337, %v589
      %v591 = vpop.f32.mrb[0].mxu0
      %v592 = vpop.f32.mrb[0].mxu0
      %v593 = vadd.f32 %v337, %v592
      %v594 = vpop.f32.mrb[0].mxu0
      %595 = vmatprep.mubr.bf16.mxu0 0
      %596 = vmatmul.mubr.bf16.gmra.mrb[0].mxu0 %v385
      %v597 = vpop.f32.mrb[0].mxu0
      %v598 = vadd.f32 %v337, %v597
      %v599 = vpop.f32.mrb[0].mxu0
      %v600 = vpop.f32.mrb[0].mxu0
      %v601 = vadd.f32 %v337, %v600
      %v602 = vpop.f32.mrb[0].mxu0
      %603 = vmatprep.mubr.bf16.mxu0 0
      %604 = vmatmul.mubr.bf16.gmra.mrb[0].mxu0 %v388
      %v605 = vpop.f32.mrb[0].mxu0
      %v606 = vadd.f32 %v337, %v605
      %v607 = vpop.f32.mrb[0].mxu0
      %v608 = vpop.f32.mrb[0].mxu0
      %v609 = vadd.f32 %v337, %v608
      %v610 = vpop.f32.mrb[0].mxu0
      %611 = vmatprep.mubr.bf16.mxu0 0
      %612 = vmatmul.mubr.bf16.gmra.mrb[0].mxu0 %v391
      %v613 = vpop.f32.mrb[0].mxu0
      %v614 = vadd.f32 %v337, %v613
      %v615 = vpop.f32.mrb[0].mxu0
      %v616 = vpop.f32.mrb[0].mxu0
      %v617 = vadd.f32 %v337, %v616
      %v618 = vpop.f32.mrb[0].mxu0
      %619 = vmatprep.mubr.bf16.mxu0 0
      %620 = vmatmul.mubr.bf16.gmra.mrb[0].mxu0 %v394
      %v621 = vpop.f32.mrb[0].mxu0
      %v622 = vadd.f32 %v337, %v621
      %v623 = vpop.f32.mrb[0].mxu0
      %v624 = vpop.f32.mrb[0].mxu0
      %v625 = vadd.f32 %v337, %v624
      %v626 = vpop.f32.mrb[0].mxu0
      %627 = vmatprep.mubr.bf16.mxu0 0
      %628 = vmatmul.mubr.bf16.gmra.mrb[0].mxu0 %v397
      %v629 = vpop.f32.mrb[0].mxu0
      %v630 = vadd.f32 %v337, %v629
      %v631 = vpop.f32.mrb[0].mxu0
      %v632 = vpop.f32.mrb[0].mxu0
      %v633 = vadd.f32 %v337, %v632
      %v634 = vpop.f32.mrb[0].mxu0
      %635 = vmatprep.mubr.bf16.mxu0 0
      %636 = vmatmul.mubr.bf16.gmra.mrb[0].mxu0 %v400
      %v637 = vpop.f32.mrb[0].mxu0
      %v638 = vadd.f32 %v337, %v637
      %v639 = vpop.f32.mrb[0].mxu0
      %v640 = vpop.f32.mrb[0].mxu0
      %v641 = vadd.f32 %v337, %v640
      %v642 = vpop.f32.mrb[0].mxu0
      %643 = vmatprep.mubr.bf16.mxu0 0
      %644 = vmatmul.mubr.bf16.gmra.mrb[0].mxu0 %v403
      %v645 = vpop.f32.mrb[0].mxu0
      %v646 = vadd.f32 %v337, %v645
      %v647 = vpop.f32.mrb[0].mxu0
      %v648 = vpop.f32.mrb[0].mxu0
      %v649 = vadd.f32 %v337, %v648
      %v650 = vpop.f32.mrb[0].mxu0
      %651 = vmatprep.mubr.bf16.mxu0 0
      %652 = vmatmul.mubr.bf16.gmra.mrb[0].mxu0 %v406
      %v653 = vpop.f32.mrb[0].mxu0
      %v654 = vadd.f32 %v337, %v653
      %v655 = vpop.f32.mrb[0].mxu0
      %v656 = vpop.f32.mrb[0].mxu0
      %v657 = vadd.f32 %v337, %v656
      %v658 = vpop.f32.mrb[0].mxu0
      %659 = vmatprep.mubr.bf16.mxu0 0
      %660 = vmatmul.mubr.bf16.gmra.mrb[0].mxu0 %v409
      %v661 = vpop.f32.mrb[0].mxu0
      %v662 = vadd.f32 %v337, %v661
      %v663 = vpop.f32.mrb[0].mxu0
      %v664 = vpop.f32.mrb[0].mxu0
      %v665 = vadd.f32 %v337, %v664
      %v666 = vpop.f32.mrb[0].mxu0
      %667 = vmatprep.mubr.bf16.mxu0 0
      %668 = vmatmul.mubr.bf16.gmra.mrb[0].mxu0 %v412
      %v669 = vpop.f32.mrb[0].mxu0
      %v670 = vadd.f32 %v337, %v669
      %v671 = vpop.f32.mrb[0].mxu0
      %v672 = vpop.f32.mrb[0].mxu0
      %v673 = vadd.f32 %v337, %v672
      %v674 = vpop.f32.mrb[0].mxu0
      %675 = vmatprep.mubr.bf16.mxu0 0
      %676 = vmatmul.mubr.bf16.gmra.mrb[0].mxu0 %v415
      %v677 = vpop.f32.mrb[0].mxu0
      %v678 = vadd.f32 %v337, %v677
      %v679 = vpop.f32.mrb[0].mxu0
      %v680 = vpop.f32.mrb[0].mxu0
      %v681 = vadd.f32 %v337, %v680
      %v682 = vpop.f32.mrb[0].mxu0
      %683 = vmatprep.mubr.bf16.mxu0 0
      %684 = vmatmul.mubr.bf16.gmra.mrb[0].mxu0 %v418
      %v685 = vpop.f32.mrb[0].mxu0
      %v686 = vadd.f32 %v337, %v685
      %v687 = vpop.f32.mrb[0].mxu0
      %v688 = vpop.f32.mrb[0].mxu0
      %v689 = vadd.f32 %v337, %v688
      %v690 = vpop.f32.mrb[0].mxu0
      %691 = vmatprep.mubr.bf16.mxu0 0
      %692 = vmatmul.mubr.bf16.gmra.mrb[0].mxu0 %v421
      %v693 = vpop.f32.mrb[0].mxu0
      %v694 = vadd.f32 %v337, %v693
      %v695 = vpop.f32.mrb[0].mxu0
      %v696 = vpop.f32.mrb[0].mxu0
      %v697 = vadd.f32 %v337, %v696
      %v698 = vpop.f32.mrb[0].mxu0
      %699 = vmatprep.mubr.bf16.mxu0 0
      %700 = vmatmul.mubr.bf16.gmra.mrb[0].mxu0 %v424
      %v701 = vpop.f32.mrb[0].mxu0
      %v702 = vadd.f32 %v337, %v701
      %v703 = vpop.f32.mrb[0].mxu0
      %v704 = vpop.f32.mrb[0].mxu0
      %v705 = vadd.f32 %v337, %v704
      %v706 = vpop.f32.mrb[0].mxu0
      %707 = vmatprep.mubr.bf16.mxu0 0
      %708 = vmatmul.mubr.bf16.gmra.mrb[0].mxu0 %v427
      %v709 = vpop.f32.mrb[0].mxu0
      %v710 = vadd.f32 %v337, %v709
      %v711 = vpop.f32.mrb[0].mxu0
      %v712 = vpop.f32.mrb[0].mxu0
      %v713 = vadd.f32 %v337, %v712
      %v714 = vpop.f32.mrb[0].mxu0
      %715 = vmatprep.mubr.bf16.mxu0 0
      %716 = vmatmul.mubr.bf16.gmra.mrb[0].mxu0 %v430
      %v717 = vpop.f32.mrb[0].mxu0
      %v718 = vadd.f32 %v337, %v717
      %v719 = vpop.f32.mrb[0].mxu0
      %v720 = vpop.f32.mrb[0].mxu0
      %v721 = vadd.f32 %v337, %v720
      %v722 = vpop.f32.mrb[0].mxu0
      %723 = vmatprep.mubr.bf16.mxu0 0
      %724 = vmatmul.mubr.bf16.gmra.mrb[0].mxu0 %v433
      %v725 = vpop.f32.mrb[0].mxu0
      %v726 = vadd.f32 %v337, %v725
      %v727 = vpop.f32.mrb[0].mxu0
      %v728 = vpop.f32.mrb[0].mxu0
      %v729 = vadd.f32 %v337, %v728
      %v730 = vpop.f32.mrb[0].mxu0
      %731 = vmatprep.mubr.bf16.mxu0 0
      %732 = vmatmul.mubr.bf16.gmra.mrb[0].mxu0 %v436
      %v733 = vpop.f32.mrb[0].mxu0
      %v734 = vadd.f32 %v337, %v733
      %v735 = vpop.f32.mrb[0].mxu0
      %v736 = vpop.f32.mrb[0].mxu0
      %v737 = vadd.f32 %v337, %v736
      %v738 = vpop.f32.mrb[0].mxu0
      %739 = vmatprep.mubr.bf16.mxu0 0
      %740 = vmatmul.mubr.bf16.gmra.mrb[0].mxu0 %v439
      %v741 = vpop.f32.mrb[0].mxu0
      %v742 = vadd.f32 %v337, %v741
      %v743 = vpop.f32.mrb[0].mxu0
      %v744 = vpop.f32.mrb[0].mxu0
      %v745 = vadd.f32 %v337, %v744
      %v746 = vpop.f32.mrb[0].mxu0
      %747 = vmatprep.mubr.bf16.mxu0 0
      %748 = vmatmul.mubr.bf16.gmra.mrb[0].mxu0 %v442
      %v749 = vpop.f32.mrb[0].mxu0
      %v750 = vadd.f32 %v337, %v749
      %v751 = vpop.f32.mrb[0].mxu0
      %v752 = vpop.f32.mrb[0].mxu0
      %v753 = vadd.f32 %v337, %v752
      %v754 = vpop.f32.mrb[0].mxu0
      %755 = vmatprep.mubr.bf16.mxu0 0
      %756 = vmatmul.mubr.bf16.gmra.mrb[0].mxu0 %v445
      %v757 = vpop.f32.mrb[0].mxu0
      %v758 = vadd.f32 %v337, %v757
      %v759 = vpop.f32.mrb[0].mxu0
      %v760 = vpop.f32.mrb[0].mxu0
      %v761 = vadd.f32 %v337, %v760
      %v762 = vpop.f32.mrb[0].mxu0
      %763 = vmatprep.mubr.bf16.mxu0 0
      %764 = vmatmul.mubr.bf16.gmra.mrb[0].mxu0 %v448
      %v765 = vpop.f32.mrb[0].mxu0
      %v766 = vadd.f32 %v337, %v765
      %v767 = vpop.f32.mrb[0].mxu0
      %v768 = vpop.f32.mrb[0].mxu0
      %v769 = vadd.f32 %v337, %v768
      %v770 = vpop.f32.mrb[0].mxu0
      %771 = vmatprep.mubr.bf16.mxu0 0
      %772 = vmatmul.mubr.bf16.gmra.mrb[0].mxu0 %v451
      %v773 = vpop.f32.mrb[0].mxu0
      %v774 = vadd.f32 %v337, %v773
      %v775 = vpop.f32.mrb[0].mxu0
      %v776 = vpop.f32.mrb[0].mxu0
      %v777 = vadd.f32 %v337, %v776
      %v778 = vpop.f32.mrb[0].mxu0
      %779 = vmatprep.mubr.bf16.mxu0 0
      %780 = vmatmul.mubr.bf16.gmra.mrb[0].mxu0 %v454
      %v781 = vpop.f32.mrb[0].mxu0
      %v782 = vadd.f32 %v337, %v781
      %v783 = vpop.f32.mrb[0].mxu0
      %v784 = vpop.f32.mrb[0].mxu0
      %v785 = vadd.f32 %v337, %v784
      %v786 = vpop.f32.mrb[0].mxu0
      %787 = vmatprep.mubr.bf16.mxu0 0
      %788 = vmatmul.mubr.bf16.gmra.mrb[0].mxu0 %v457
      %v789 = vpop.f32.mrb[0].mxu0
      %v790 = vadd.f32 %v337, %v789
      %v791 = vpop.f32.mrb[0].mxu0
      %v792 = vpop.f32.mrb[0].mxu0
      %v793 = vadd.f32 %v337, %v792
      %v794 = vpop.f32.mrb[0].mxu0
      %795 = vmatprep.mubr.bf16.mxu0 0
      %796 = vmatmul.mubr.bf16.gmra.mrb[0].mxu0 %v460
      %v797 = vpop.f32.mrb[0].mxu0
      %v798 = vadd.f32 %v337, %v797
      %v799 = vpop.f32.mrb[0].mxu0
      %v800 = vpop.f32.mrb[0].mxu0
      %v801 = vadd.f32 %v337, %v800
      %v802 = vpop.f32.mrb[0].mxu0
      %803 = vmatprep.mubr.bf16.mxu0 0
      %804 = vmatmul.mubr.bf16.gmra.mrb[0].mxu0 %v463
      %v805 = vpop.f32.mrb[0].mxu0
      %v806 = vadd.f32 %v337, %v805
      %v807 = vpop.f32.mrb[0].mxu0
      %v808 = vpop.f32.mrb[0].mxu0
      %v809 = vadd.f32 %v337, %v808
      %v810 = vpop.f32.mrb[0].mxu0
      %811 = vmatprep.mubr.bf16.mxu0 0
      %812 = vmatmul.mubr.bf16.gmra.mrb[0].mxu0 %v466
      %v813 = vpop.f32.mrb[0].mxu0
      %v814 = vadd.f32 %v337, %v813
      %v815 = vpop.f32.mrb[0].mxu0
      %v816 = vpop.f32.mrb[0].mxu0
      %v817 = vadd.f32 %v337, %v816
      %v818 = vpop.f32.mrb[0].mxu0
      %819 = vmatprep.mubr.bf16.mxu0 0
      %820 = vmatmul.mubr.bf16.gmra.mrb[0].mxu0 %v469
      %v821 = vpop.f32.mrb[0].mxu0
      %v822 = vadd.f32 %v337, %v821
      %v823 = vpop.f32.mrb[0].mxu0
      %v824 = vpop.f32.mrb[0].mxu0
      %v825 = vadd.f32 %v337, %v824
      %v826 = vpop.f32.mrb[0].mxu0
      %827 = vmatprep.mubr.bf16.mxu0 0
      %828 = vmatmul.mubr.bf16.gmra.mrb[0].mxu0 %v472
      %v829 = vpop.f32.mrb[0].mxu0
      %v830 = vadd.f32 %v337, %v829
      %v831 = vpop.f32.mrb[0].mxu0
      %v832 = vpop.f32.mrb[0].mxu0
      %v833 = vadd.f32 %v337, %v832
      %v834 = vpop.f32.mrb[0].mxu0
      %835 = vmatprep.mubr.bf16.mxu0 0
      %836 = vmatmul.mubr.bf16.gmra.mrb[0].mxu0 %v475
      %v837 = vpop.f32.mrb[0].mxu0
      %v838 = vadd.f32 %v337, %v837
      %v839 = vpop.f32.mrb[0].mxu0
      %v840 = vpop.f32.mrb[0].mxu0
      %v841 = vadd.f32 %v337, %v840
      %v842 = vpop.f32.mrb[0].mxu0
      %843 = vmatprep.mubr.bf16.mxu0 0
      %844 = vmatmul.mubr.bf16.gmra.mrb[0].mxu0 %v478
      %v845 = vpop.f32.mrb[0].mxu0
      %v846 = vadd.f32 %v337, %v845
      %v847 = vpop.f32.mrb[0].mxu0
      %v848 = vpop.f32.mrb[0].mxu0
      %v849 = vadd.f32 %v337, %v848
      %v850 = vpop.f32.mrb[0].mxu0
      %851 = vmatprep.mubr.bf16.mxu0 0
      %852 = vmatmul.mubr.bf16.gmra.mrb[0].mxu0 %v481
      %v853 = vpop.f32.mrb[0].mxu0
      %v854 = vadd.f32 %v337, %v853
      %v855 = vpop.f32.mrb[0].mxu0
      %v856 = vpop.f32.mrb[0].mxu0
      %v857 = vadd.f32 %v337, %v856
      %v858 = vpop.f32.mrb[0].mxu0
      %859 = vmatprep.mubr.bf16.mxu0 0
      %860 = vmatmul.mubr.bf16.gmra.mrb[0].mxu0 %v484
      %v861 = vpop.f32.mrb[0].mxu0
      %v862 = vadd.f32 %v337, %v861
      %v863 = vpop.f32.mrb[0].mxu0
      %v864 = vpop.f32.mrb[0].mxu0
      %v865 = vadd.f32 %v337, %v864
      %v866 = vpop.f32.mrb[0].mxu0
      %867 = vmatprep.mubr.bf16.mxu0 0
      %868 = vmatmul.mubr.bf16.gmra.mrb[0].mxu0 %v487
      %v869 = vpop.f32.mrb[0].mxu0
      %v870 = vadd.f32 %v337, %v869
      %v871 = vpop.f32.mrb[0].mxu0
      %v872 = vpop.f32.mrb[0].mxu0
      %v873 = vadd.f32 %v337, %v872
      %v874 = vpop.f32.mrb[0].mxu0
      %875 = vmatprep.mubr.bf16.mxu0 0
      %876 = vmatmul.mubr.bf16.gmra.mrb[0].mxu0 %v490
      %v877 = vpop.f32.mrb[0].mxu0
      %v878 = vadd.f32 %v337, %v877
      %v879 = vpop.f32.mrb[0].mxu0
      %v880 = vpop.f32.mrb[0].mxu0
      %v881 = vadd.f32 %v337, %v880
      %v882 = vpop.f32.mrb[0].mxu0
      %883 = vmatprep.mubr.bf16.mxu0 0
      %884 = vmatmul.mubr.bf16.gmra.mrb[0].mxu0 %v493
      %v885 = vpop.f32.mrb[0].mxu0
      %v886 = vadd.f32 %v337, %v885
      %v887 = vpop.f32.mrb[0].mxu0
      %v888 = vpop.f32.mrb[0].mxu0
      %v889 = vadd.f32 %v337, %v888
      %v890 = vpop.f32.mrb[0].mxu0
      %891 = vmatprep.mubr.bf16.mxu0 0
      %892 = vmatmul.mubr.bf16.gmra.mrb[0].mxu0 %v496
      %v893 = vpop.f32.mrb[0].mxu0
      %v894 = vadd.f32 %v337, %v893
      %v895 = vpop.f32.mrb[0].mxu0
      %v896 = vpop.f32.mrb[0].mxu0
      %v897 = vadd.f32 %v337, %v896
      %v898 = vpop.f32.mrb[0].mxu0
      %899 = vmatprep.mubr.bf16.mxu0 0
      %900 = vmatmul.mubr.bf16.gmra.mrb[0].mxu0 %v499
      %v901 = vpop.f32.mrb[0].mxu0
      %v902 = vadd.f32 %v337, %v901
      %v903 = vpop.f32.mrb[0].mxu0
      %v904 = vpop.f32.mrb[0].mxu0
      %v905 = vadd.f32 %v337, %v904
      %v906 = vpop.f32.mrb[0].mxu0
      %907 = vmatprep.mubr.bf16.mxu0 0
      %908 = vmatmul.mubr.bf16.gmra.mrb[0].mxu0 %v502
      %v909 = vpop.f32.mrb[0].mxu0
      %v910 = vadd.f32 %v337, %v909
      %v911 = vpop.f32.mrb[0].mxu0
      %v912 = vpop.f32.mrb[0].mxu0
      %v913 = vadd.f32 %v337, %v912
      %v914 = vpop.f32.mrb[0].mxu0
      %915 = vmatprep.mubr.bf16.mxu0 0
      %916 = vmatmul.mubr.bf16.gmra.mrb[0].mxu0 %v505
      %v917 = vpop.f32.mrb[0].mxu0
      %v918 = vadd.f32 %v337, %v917
      %v919 = vpop.f32.mrb[0].mxu0
      %v920 = vpop.f32.mrb[0].mxu0
      %v921 = vadd.f32 %v337, %v920
      %v922 = vpop.f32.mrb[0].mxu0
      %923 = vmatprep.mubr.bf16.mxu0 0
      %924 = vmatmul.mubr.bf16.gmra.mrb[0].mxu0 %v508
      %v925 = vpop.f32.mrb[0].mxu0
      %v926 = vadd.f32 %v337, %v925
      %v927 = vpop.f32.mrb[0].mxu0
      %v928 = vpop.f32.mrb[0].mxu0
      %v929 = vadd.f32 %v337, %v928
      %v930 = vpop.f32.mrb[0].mxu0
      %931 = vmatprep.mubr.bf16.mxu0 0
      %932 = vmatmul.mubr.bf16.gmra.mrb[0].mxu0 %v511
      %v933 = vpop.f32.mrb[0].mxu0
      %v934 = vadd.f32 %v337, %v933
      %v935 = vpop.f32.mrb[0].mxu0
      %v936 = vpop.f32.mrb[0].mxu0
      %v937 = vadd.f32 %v337, %v936
      %v938 = vpop.f32.mrb[0].mxu0
      %939 = vmatprep.mubr.bf16.mxu0 0
      %940 = vmatmul.mubr.bf16.gmra.mrb[0].mxu0 %v514
      %v941 = vpop.f32.mrb[0].mxu0
      %v942 = vadd.f32 %v337, %v941
      %v943 = vpop.f32.mrb[0].mxu0
      %v944 = vpop.f32.mrb[0].mxu0
      %v945 = vadd.f32 %v337, %v944
      %v946 = vpop.f32.mrb[0].mxu0
      %947 = vdwg.mxu0
      %v948 = vmax.f32 %v558, 0.0
      %v949 = vmax.f32 %v561, 0.0
      %v950 = vmax.f32 %v566, 0.0
      %v951 = vmax.f32 %v569, 0.0
      %v952 = vmax.f32 %v574, 0.0
      %v953 = vmax.f32 %v577, 0.0
      %v954 = vmax.f32 %v582, 0.0
      %v955 = vmax.f32 %v585, 0.0
      %v956 = vmax.f32 %v590, 0.0
      %v957 = vmax.f32 %v593, 0.0
      %v958 = vmax.f32 %v598, 0.0
      %v959 = vmax.f32 %v601, 0.0
      %v960 = vmax.f32 %v606, 0.0
      %v961 = vmax.f32 %v609, 0.0
      %v962 = vmax.f32 %v614, 0.0
      %v963 = vmax.f32 %v617, 0.0
      %v964 = vmax.f32 %v622, 0.0
      %v965 = vmax.f32 %v625, 0.0
      %v966 = vmax.f32 %v630, 0.0
      %v967 = vmax.f32 %v633, 0.0
      %v968 = vmax.f32 %v638, 0.0
      %v969 = vmax.f32 %v641, 0.0
      %v970 = vmax.f32 %v646, 0.0
      %v971 = vmax.f32 %v649, 0.0
      %v972 = vmax.f32 %v654, 0.0
      %v973 = vmax.f32 %v657, 0.0
      %v974 = vmax.f32 %v662, 0.0
      %v975 = vmax.f32 %v665, 0.0
      %v976 = vmax.f32 %v670, 0.0
      %v977 = vmax.f32 %v673, 0.0
      %v978 = vmax.f32 %v678, 0.0
      %v979 = vmax.f32 %v681, 0.0
      %v980 = vmax.f32 %v686, 0.0
      %v981 = vmax.f32 %v689, 0.0
      %v982 = vmax.f32 %v694, 0.0
      %v983 = vmax.f32 %v697, 0.0
      %v984 = vmax.f32 %v702, 0.0
      %v985 = vmax.f32 %v705, 0.0
      %v986 = vmax.f32 %v710, 0.0
      %v987 = vmax.f32 %v713, 0.0
      %v988 = vmax.f32 %v718, 0.0
      %v989 = vmax.f32 %v721, 0.0
      %v990 = vmax.f32 %v726, 0.0
      %v991 = vmax.f32 %v729, 0.0
      %v992 = vmax.f32 %v734, 0.0
      %v993 = vmax.f32 %v737, 0.0
      %v994 = vmax.f32 %v742, 0.0
      %v995 = vmax.f32 %v745, 0.0
      %v996 = vmax.f32 %v750, 0.0
      %v997 = vmax.f32 %v753, 0.0
      %v998 = vmax.f32 %v758, 0.0
      %v999 = vmax.f32 %v761, 0.0
      %v1000 = vmax.f32 %v766, 0.0
      %v1001 = vmax.f32 %v769, 0.0
      %v1002 = vmax.f32 %v774, 0.0
      %v1003 = vmax.f32 %v777, 0.0
      %v1004 = vmax.f32 %v782, 0.0
      %v1005 = vmax.f32 %v785, 0.0
      %v1006 = vmax.f32 %v790, 0.0
      %v1007 = vmax.f32 %v793, 0.0
      %v1008 = vmax.f32 %v798, 0.0
      %v1009 = vmax.f32 %v801, 0.0
      %v1010 = vmax.f32 %v806, 0.0
      %v1011 = vmax.f32 %v809, 0.0
      %v1012 = vmax.f32 %v814, 0.0
      %v1013 = vmax.f32 %v817, 0.0
      %v1014 = vmax.f32 %v822, 0.0
      %v1015 = vmax.f32 %v825, 0.0
      %v1016 = vmax.f32 %v830, 0.0
      %v1017 = vmax.f32 %v833, 0.0
      %v1018 = vmax.f32 %v838, 0.0
      %v1019 = vmax.f32 %v841, 0.0
      %v1020 = vmax.f32 %v846, 0.0
      %v1021 = vmax.f32 %v849, 0.0
      %v1022 = vmax.f32 %v854, 0.0
      %v1023 = vmax.f32 %v857, 0.0
      %v1024 = vmax.f32 %v862, 0.0
      %v1025 = vmax.f32 %v865, 0.0
      %v1026 = vmax.f32 %v870, 0.0
      %v1027 = vmax.f32 %v873, 0.0
      %v1028 = vmax.f32 %v878, 0.0
      %v1029 = vmax.f32 %v881, 0.0
      %v1030 = vmax.f32 %v886, 0.0
      %v1031 = vmax.f32 %v889, 0.0
      %v1032 = vmax.f32 %v894, 0.0
      %v1033 = vmax.f32 %v897, 0.0
      %v1034 = vmax.f32 %v902, 0.0
      %v1035 = vmax.f32 %v905, 0.0
      %v1036 = vmax.f32 %v910, 0.0
      %v1037 = vmax.f32 %v913, 0.0
      %v1038 = vmax.f32 %v918, 0.0
      %v1039 = vmax.f32 %v921, 0.0
      %v1040 = vmax.f32 %v926, 0.0
      %v1041 = vmax.f32 %v929, 0.0
      %v1042 = vmax.f32 %v934, 0.0
      %v1043 = vmax.f32 %v937, 0.0
      %v1044 = vmax.f32 %v942, 0.0
      %v1045 = vmax.f32 %v945, 0.0
      %vm1046 = vcmask 523264
      %1047 = vst.msk [vmem:[%s172] sm:$0xff] %vm1046, %v948
      %1048 = vst.msk [vmem:[%s172 + $0x8] sm:$0xff] %vm1046, %v949
      %1049 = vst.msk [vmem:[%s172 + $0x10] sm:$0xff] %vm1046, %v950
      %1050 = vst.msk [vmem:[%s172 + $0x18] sm:$0xff] %vm1046, %v951
      %1051 = vst.msk [vmem:[%s172 + $0x20] sm:$0xff] %vm1046, %v952
      %1052 = vst.msk [vmem:[%s172 + $0x28] sm:$0xff] %vm1046, %v953
      %1053 = vst.msk [vmem:[%s172 + $0x30] sm:$0xff] %vm1046, %v954
      %1054 = vst.msk [vmem:[%s172 + $0x38] sm:$0xff] %vm1046, %v955
      %1055 = vst.msk [vmem:[%s172 + $0x40] sm:$0xff] %vm1046, %v956
      %1056 = vst.msk [vmem:[%s172 + $0x48] sm:$0xff] %vm1046, %v957
      %1057 = vst.msk [vmem:[%s172 + $0x50] sm:$0xff] %vm1046, %v958
      %1058 = vst.msk [vmem:[%s172 + $0x58] sm:$0xff] %vm1046, %v959
      %1059 = vst.msk [vmem:[%s172 + $0x60] sm:$0xff] %vm1046, %v960
      %1060 = vst.msk [vmem:[%s172 + $0x68] sm:$0xff] %vm1046, %v961
      %1061 = vst.msk [vmem:[%s172 + $0x70] sm:$0xff] %vm1046, %v962
      %1062 = vst.msk [vmem:[%s172 + $0x78] sm:$0xff] %vm1046, %v963
      %1063 = vst.msk [vmem:[%s172 + $0x80] sm:$0xff] %vm1046, %v964
      %1064 = vst.msk [vmem:[%s172 + $0x88] sm:$0xff] %vm1046, %v965
      %1065 = vst.msk [vmem:[%s172 + $0x90] sm:$0xff] %vm1046, %v966
      %1066 = vst.msk [vmem:[%s172 + $0x98] sm:$0xff] %vm1046, %v967
      %1067 = vst.msk [vmem:[%s172 + $0xa0] sm:$0xff] %vm1046, %v968
      %1068 = vst.msk [vmem:[%s172 + $0xa8] sm:$0xff] %vm1046, %v969
      %1069 = vst.msk [vmem:[%s172 + $0xb0] sm:$0xff] %vm1046, %v970
      %1070 = vst.msk [vmem:[%s172 + $0xb8] sm:$0xff] %vm1046, %v971
      %1071 = vst.msk [vmem:[%s172 + $0xc0] sm:$0xff] %vm1046, %v972
      %1072 = vst.msk [vmem:[%s172 + $0xc8] sm:$0xff] %vm1046, %v973
      %1073 = vst.msk [vmem:[%s172 + $0xd0] sm:$0xff] %vm1046, %v974
      %1074 = vst.msk [vmem:[%s172 + $0xd8] sm:$0xff] %vm1046, %v975
      %1075 = vst.msk [vmem:[%s172 + $0xe0] sm:$0xff] %vm1046, %v976
      %1076 = vst.msk [vmem:[%s172 + $0xe8] sm:$0xff] %vm1046, %v977
      %1077 = vst.msk [vmem:[%s172 + $0xf0] sm:$0xff] %vm1046, %v978
      %1078 = vst.msk [vmem:[%s172 + $0xf8] sm:$0xff] %vm1046, %v979
      %1079 = vst.msk [vmem:[%s172 + $0x100] sm:$0xff] %vm1046, %v980
      %1080 = vst.msk [vmem:[%s172 + $0x108] sm:$0xff] %vm1046, %v981
      %1081 = vst.msk [vmem:[%s172 + $0x110] sm:$0xff] %vm1046, %v982
      %1082 = vst.msk [vmem:[%s172 + $0x118] sm:$0xff] %vm1046, %v983
      %1083 = vst.msk [vmem:[%s172 + $0x120] sm:$0xff] %vm1046, %v984
      %1084 = vst.msk [vmem:[%s172 + $0x128] sm:$0xff] %vm1046, %v985
      %1085 = vst.msk [vmem:[%s172 + $0x130] sm:$0xff] %vm1046, %v986
      %1086 = vst.msk [vmem:[%s172 + $0x138] sm:$0xff] %vm1046, %v987
      %1087 = vst.msk [vmem:[%s172 + $0x140] sm:$0xff] %vm1046, %v988
      %1088 = vst.msk [vmem:[%s172 + $0x148] sm:$0xff] %vm1046, %v989
      %1089 = vst.msk [vmem:[%s172 + $0x150] sm:$0xff] %vm1046, %v990
      %1090 = vst.msk [vmem:[%s172 + $0x158] sm:$0xff] %vm1046, %v991
      %1091 = vst.msk [vmem:[%s172 + $0x160] sm:$0xff] %vm1046, %v992
      %1092 = vst.msk [vmem:[%s172 + $0x168] sm:$0xff] %vm1046, %v993
      %1093 = vst.msk [vmem:[%s172 + $0x170] sm:$0xff] %vm1046, %v994
      %1094 = vst.msk [vmem:[%s172 + $0x178] sm:$0xff] %vm1046, %v995
      %1095 = vst.msk [vmem:[%s172 + $0x180] sm:$0xff] %vm1046, %v996
      %1096 = vst.msk [vmem:[%s172 + $0x188] sm:$0xff] %vm1046, %v997
      %1097 = vst.msk [vmem:[%s172 + $0x190] sm:$0xff] %vm1046, %v998
      %1098 = vst.msk [vmem:[%s172 + $0x198] sm:$0xff] %vm1046, %v999
      %1099 = vst.msk [vmem:[%s172 + $0x1a0] sm:$0xff] %vm1046, %v1000
      %1100 = vst.msk [vmem:[%s172 + $0x1a8] sm:$0xff] %vm1046, %v1001
      %1101 = vst.msk [vmem:[%s172 + $0x1b0] sm:$0xff] %vm1046, %v1002
      %1102 = vst.msk [vmem:[%s172 + $0x1b8] sm:$0xff] %vm1046, %v1003
      %1103 = vst.msk [vmem:[%s172 + $0x1c0] sm:$0xff] %vm1046, %v1004
      %1104 = vst.msk [vmem:[%s172 + $0x1c8] sm:$0xff] %vm1046, %v1005
      %1105 = vst.msk [vmem:[%s172 + $0x1d0] sm:$0xff] %vm1046, %v1006
      %1106 = vst.msk [vmem:[%s172 + $0x1d8] sm:$0xff] %vm1046, %v1007
      %1107 = vst.msk [vmem:[%s172 + $0x1e0] sm:$0xff] %vm1046, %v1008
      %1108 = vst.msk [vmem:[%s172 + $0x1e8] sm:$0xff] %vm1046, %v1009
      %1109 = vst.msk [vmem:[%s172 + $0x1f0] sm:$0xff] %vm1046, %v1010
      %1110 = vst.msk [vmem:[%s172 + $0x1f8] sm:$0xff] %vm1046, %v1011
      %1111 = vst.msk [vmem:[%s172 + $0x200] sm:$0xff] %vm1046, %v1012
      %1112 = vst.msk [vmem:[%s172 + $0x208] sm:$0xff] %vm1046, %v1013
      %1113 = vst.msk [vmem:[%s172 + $0x210] sm:$0xff] %vm1046, %v1014
      %1114 = vst.msk [vmem:[%s172 + $0x218] sm:$0xff] %vm1046, %v1015
      %1115 = vst.msk [vmem:[%s172 + $0x220] sm:$0xff] %vm1046, %v1016
      %1116 = vst.msk [vmem:[%s172 + $0x228] sm:$0xff] %vm1046, %v1017
      %1117 = vst.msk [vmem:[%s172 + $0x230] sm:$0xff] %vm1046, %v1018
      %1118 = vst.msk [vmem:[%s172 + $0x238] sm:$0xff] %vm1046, %v1019
      %1119 = vst.msk [vmem:[%s172 + $0x240] sm:$0xff] %vm1046, %v1020
      %1120 = vst.msk [vmem:[%s172 + $0x248] sm:$0xff] %vm1046, %v1021
      %1121 = vst.msk [vmem:[%s172 + $0x250] sm:$0xff] %vm1046, %v1022
      %1122 = vst.msk [vmem:[%s172 + $0x258] sm:$0xff] %vm1046, %v1023
      %1123 = vst.msk [vmem:[%s172 + $0x260] sm:$0xff] %vm1046, %v1024
      %1124 = vst.msk [vmem:[%s172 + $0x268] sm:$0xff] %vm1046, %v1025
      %1125 = vst.msk [vmem:[%s172 + $0x270] sm:$0xff] %vm1046, %v1026
      %1126 = vst.msk [vmem:[%s172 + $0x278] sm:$0xff] %vm1046, %v1027
      %1127 = vst.msk [vmem:[%s172 + $0x280] sm:$0xff] %vm1046, %v1028
      %1128 = vst.msk [vmem:[%s172 + $0x288] sm:$0xff] %vm1046, %v1029
      %1129 = vst.msk [vmem:[%s172 + $0x290] sm:$0xff] %vm1046, %v1030
      %1130 = vst.msk [vmem:[%s172 + $0x298] sm:$0xff] %vm1046, %v1031
      %1131 = vst.msk [vmem:[%s172 + $0x2a0] sm:$0xff] %vm1046, %v1032
      %1132 = vst.msk [vmem:[%s172 + $0x2a8] sm:$0xff] %vm1046, %v1033
      %1133 = vst.msk [vmem:[%s172 + $0x2b0] sm:$0xff] %vm1046, %v1034
      %1134 = vst.msk [vmem:[%s172 + $0x2b8] sm:$0xff] %vm1046, %v1035
      %1135 = vst.msk [vmem:[%s172 + $0x2c0] sm:$0xff] %vm1046, %v1036
      %1136 = vst.msk [vmem:[%s172 + $0x2c8] sm:$0xff] %vm1046, %v1037
      %1137 = vst.msk [vmem:[%s172 + $0x2d0] sm:$0xff] %vm1046, %v1038
      %1138 = vst.msk [vmem:[%s172 + $0x2d8] sm:$0xff] %vm1046, %v1039
      %1139 = vst.msk [vmem:[%s172 + $0x2e0] sm:$0xff] %vm1046, %v1040
      %1140 = vst.msk [vmem:[%s172 + $0x2e8] sm:$0xff] %vm1046, %v1041
      %1141 = vst.msk [vmem:[%s172 + $0x2f0] sm:$0xff] %vm1046, %v1042
      %1142 = vst.msk [vmem:[%s172 + $0x2f8] sm:$0xff] %vm1046, %v1043
      %1143 = vst.msk [vmem:[%s172 + $0x300] sm:$0xff] %vm1046, %v1044
      %1144 = vst.msk [vmem:[%s172 + $0x308] sm:$0xff] %vm1046, %v1045
      %s1145 = smul.u32 98, %s14
      %p1146 = scmp.lt.s32.totalorder %s1145, 195
      %s1147 = scalar_select %p1146, %s1145, 195
      %s1148 = smul.addr %s1147, 8
      %s1149 = scalar_lea.vmem %s3, %s1148
      // Predicated region
      $region33: #{cnn_cifar_forward.3} parent=31 // pred_check
        %p1150 = pneg %p100
      $region34: #{cnn_cifar_forward.3} parent=31 // pred_check_branch
        %1152 = sbr.rel (%p1150) target = $region36
      $region35: #{cnn_cifar_forward.3} parent=31 // pred_region
        %s1153 = smul.u32 98, %s14
      $region36: #{cnn_cifar_forward.3} parent=31 // pred_fallthru
        _
    $region32: #{cnn_cifar_forward.3} parent=5 // pred_fallthru
      _
    %p1154 = scmp.le.s32.totalorder 2, %s9
    // Predicated region
    $region37: #{cnn_cifar_forward.3} parent=5 // pred_check
      %p1155 = pneg %p1154
    $region38: #{cnn_cifar_forward.3} parent=5 // pred_check_branch
      %1157 = sbr.rel (%p1155) target = $region40
    $region39: #{cnn_cifar_forward.3} parent=5 // pred_region
      %s1158 = ssub.s32 %s9, 2
      // Predicated region
      $region41: #{cnn_cifar_forward.3} parent=39 // pred_check
        %p1159 = pneg %p106
      $region42: #{cnn_cifar_forward.3} parent=39 // pred_check_branch
        %1161 = sbr.rel (%p1159) target = $region44
      $region43: #{cnn_cifar_forward.3} parent=39 // pred_region
        %s1162 = smul.u32 98, %s15
        %p1163 = scmp.lt.s32.totalorder %s1162, 195
        %s1164 = scalar_select %p1163, %s1162, 195
        %s1165 = smul.addr %s1164, 8
        %s1166 = scalar_lea.vmem %s3, %s1165
      $region44: #{cnn_cifar_forward.3} parent=39 // pred_fallthru
        _
    $region40: #{cnn_cifar_forward.3} parent=5 // pred_fallthru
      _
  $region6: #{cnn_cifar_forward.3} parent=0 // loop_footer
    %s13 = sadd.s32 1, %s9
  $region7: #{cnn_cifar_forward.3} parent=0 // loop_footer_branch
    %8 = sbr.rel target = $region3
  $region8: #{cnn_cifar_forward.3} parent=0 // loop_exit
    _

// kernel: cnn_cifar_forward.4
$region0: #{cnn_cifar_forward.4}
  #allocation0 [shape = 'u32[]', space=smem, size = 0x4, offset = 0x4, fixed_abs, tag = 'smem constant byte address 0x4 - core index']
  #allocation1 [shape = 'u32[144,128]{1,0:T(1,128)}', space=vmem, size = 0x12000, scoped, tag = 'internal scratch']
  %s0 = inlined_call_operand.vmem [shape: f32[162,1600], index: 0, kind: input, shape index: {}]
  %s1 = inlined_call_operand.vmem [shape: bf16[1600,64], index: 1, kind: input, shape index: {}]
  %s2 = inlined_call_operand.vmem [shape: f32[1,64], index: 2, kind: input, shape index: {}]
  %s3 = inlined_call_operand.vmem [shape: f32[162,64], index: 3, kind: output, shape index: {}]
  %s4 = sld [smem:[#allocation0]]
  $region22: #{cnn_cifar_forward.4} parent=0
    _
  %s6 = ssub.s32 1, %s4
  %s7 = scalar_select 0, %s6, %s4
  // Predicated region
  $region2: #{cnn_cifar_forward.4} parent=0 // pred_check
    _
  $region3: #{cnn_cifar_forward.4} parent=0 // pred_check_branch
    %9 = sbr.rel (0) target = $region5
  $region4: #{cnn_cifar_forward.4} parent=0 // pred_region
    _
  $region5: #{cnn_cifar_forward.4} parent=0 // pred_fallthru
    _
  // Predicated region
  $region6: #{cnn_cifar_forward.4} parent=0 // pred_check
    _
  $region7: #{cnn_cifar_forward.4} parent=0 // pred_check_branch
    %11 = sbr.rel (0) target = $region9
  $region8: #{cnn_cifar_forward.4} parent=0 // pred_region
    _
  $region9: #{cnn_cifar_forward.4} parent=0 // pred_fallthru
    _
  // Predicated region
  $region10: #{cnn_cifar_forward.4} parent=0 // pred_check
    _
  $region11: #{cnn_cifar_forward.4} parent=0 // pred_check_branch
    %13 = sbr.rel (0) target = $region13
  $region12: #{cnn_cifar_forward.4} parent=0 // pred_region
    _
  $region13: #{cnn_cifar_forward.4} parent=0 // pred_fallthru
    _
  %v15 = vld [vmem:[%s0] sm:$0xff]
  %v16 = vld [vmem:[%s0 + $0x8] sm:$0xff]
  %v17 = vld [vmem:[%s0 + $0x10] sm:$0xff]
  %v18 = vld [vmem:[%s0 + $0x18] sm:$0xff]
  %v19 = vld [vmem:[%s0 + $0x20] sm:$0xff]
  %v20 = vld [vmem:[%s0 + $0x28] sm:$0xff]
  %v21 = vld [vmem:[%s0 + $0x30] sm:$0xff]
  %v22 = vld [vmem:[%s0 + $0x38] sm:$0xff]
  %v23 = vld [vmem:[%s0 + $0x40] sm:$0xff]
  %v24 = vld [vmem:[%s0 + $0x48] sm:$0xff]
  %v25 = vld [vmem:[%s0 + $0x50] sm:$0xff]
  %v26 = vld [vmem:[%s0 + $0x58] sm:$0xff]
  %v27 = vld [vmem:[%s0 + $0x60] sm:$0xff]
  %v28 = vld [vmem:[%s0 + $0x68] sm:$0xff]
  %v29 = vld [vmem:[%s0 + $0x70] sm:$0xff]
  %v30 = vld [vmem:[%s0 + $0x78] sm:$0xff]
  %v31 = vld [vmem:[%s0 + $0x80] sm:$0xff]
  %v32 = vld [vmem:[%s0 + $0x88] sm:$0xff]
  %v33 = vld [vmem:[%s0 + $0x90] sm:$0xff]
  %v34 = vld [vmem:[%s0 + $0x98] sm:$0xff]
  %v35 = vld [vmem:[%s0 + $0xa0] sm:$0xff]
  %v36 = vld [vmem:[%s0 + $0xa8] sm:$0xff]
  %v37 = vld [vmem:[%s0 + $0xb0] sm:$0xff]
  %v38 = vld [vmem:[%s0 + $0xb8] sm:$0xff]
  %v39 = vld [vmem:[%s0 + $0xc0] sm:$0xff]
  %v40 = vld [vmem:[%s0 + $0xc8] sm:$0xff]
  %v41 = vld [vmem:[%s0 + $0xd0] sm:$0xff]
  %v42 = vld [vmem:[%s0 + $0xd8] sm:$0xff]
  %v43 = vld [vmem:[%s0 + $0xe0] sm:$0xff]
  %v44 = vld [vmem:[%s0 + $0xe8] sm:$0xff]
  %v45 = vld [vmem:[%s0 + $0xf0] sm:$0xff]
  %v46 = vld [vmem:[%s0 + $0xf8] sm:$0xff]
  %v47 = vld [vmem:[%s0 + $0x100] sm:$0xff]
  %v48 = vld [vmem:[%s0 + $0x108] sm:$0xff]
  %v49 = vld [vmem:[%s0 + $0x110] sm:$0xff]
  %v50 = vld [vmem:[%s0 + $0x118] sm:$0xff]
  %v51 = vld [vmem:[%s0 + $0x120] sm:$0xff]
  %v52 = vld [vmem:[%s0 + $0x128] sm:$0xff]
  %v53 = vld [vmem:[%s0 + $0x130] sm:$0xff]
  %v54 = vld [vmem:[%s0 + $0x138] sm:$0xff]
  %v55 = vld [vmem:[%s0 + $0x140] sm:$0xff]
  %v56 = vld [vmem:[%s0 + $0x148] sm:$0xff]
  %v57 = vld [vmem:[%s0 + $0x150] sm:$0xff]
  %v58 = vld [vmem:[%s0 + $0x158] sm:$0xff]
  %v59 = vld [vmem:[%s0 + $0x160] sm:$0xff]
  %v60 = vld [vmem:[%s0 + $0x168] sm:$0xff]
  %v61 = vld [vmem:[%s0 + $0x170] sm:$0xff]
  %v62 = vld [vmem:[%s0 + $0x178] sm:$0xff]
  %v63 = vld [vmem:[%s0 + $0x180] sm:$0xff]
  %v64 = vld [vmem:[%s0 + $0x188] sm:$0xff]
  %v65 = vld [vmem:[%s0 + $0x190] sm:$0xff]
  %v66 = vld [vmem:[%s0 + $0x198] sm:$0xff]
  %v67 = vld [vmem:[%s0 + $0x1a0] sm:$0xff]
  %v68 = vld [vmem:[%s0 + $0x1a8] sm:$0xff]
  %v69 = vld [vmem:[%s0 + $0x1b0] sm:$0xff]
  %v70 = vld [vmem:[%s0 + $0x1b8] sm:$0xff]
  %v71 = vld [vmem:[%s0 + $0x1c0] sm:$0xff]
  %v72 = vld [vmem:[%s0 + $0x1c8] sm:$0xff]
  %v73 = vld [vmem:[%s0 + $0x1d0] sm:$0xff]
  %v74 = vld [vmem:[%s0 + $0x1d8] sm:$0xff]
  %v75 = vld [vmem:[%s0 + $0x1e0] sm:$0xff]
  %v76 = vld [vmem:[%s0 + $0x1e8] sm:$0xff]
  %v77 = vld [vmem:[%s0 + $0x1f0] sm:$0xff]
  %v78 = vld [vmem:[%s0 + $0x1f8] sm:$0xff]
  %v79 = vld [vmem:[%s0 + $0x200] sm:$0xff]
  %v80 = vld [vmem:[%s0 + $0x208] sm:$0xff]
  %v81 = vld [vmem:[%s0 + $0x210] sm:$0xff]
  %v82 = vld [vmem:[%s0 + $0x218] sm:$0xff]
  %v83 = vld [vmem:[%s0 + $0x220] sm:$0xff]
  %v84 = vld [vmem:[%s0 + $0x228] sm:$0xff]
  %v85 = vld [vmem:[%s0 + $0x230] sm:$0xff]
  %v86 = vld [vmem:[%s0 + $0x238] sm:$0xff]
  %v87 = vld [vmem:[%s0 + $0x240] sm:$0xff]
  %v88 = vld [vmem:[%s0 + $0x248] sm:$0xff]
  %v89 = vld [vmem:[%s0 + $0x250] sm:$0xff]
  %v90 = vld [vmem:[%s0 + $0x258] sm:$0xff]
  %v91 = vld [vmem:[%s0 + $0x260] sm:$0xff]
  %v92 = vld [vmem:[%s0 + $0x268] sm:$0xff]
  %v93 = vld [vmem:[%s0 + $0x270] sm:$0xff]
  %v94 = vld [vmem:[%s0 + $0x278] sm:$0xff]
  %v95 = vld [vmem:[%s0 + $0x280] sm:$0xff]
  %v96 = vld [vmem:[%s0 + $0x288] sm:$0xff]
  %v97 = vld [vmem:[%s0 + $0x290] sm:$0xff]
  %v98 = vld [vmem:[%s0 + $0x298] sm:$0xff]
  %v99 = vld [vmem:[%s0 + $0x2a0] sm:$0xff]
  %v100 = vld [vmem:[%s0 + $0x2a8] sm:$0xff]
  %v101 = vld [vmem:[%s0 + $0x2b0] sm:$0xff]
  %v102 = vld [vmem:[%s0 + $0x2b8] sm:$0xff]
  %v103 = vld [vmem:[%s0 + $0x2c0] sm:$0xff]
  %v104 = vld [vmem:[%s0 + $0x2c8] sm:$0xff]
  %v105 = vld [vmem:[%s0 + $0x2d0] sm:$0xff]
  %v106 = vld [vmem:[%s0 + $0x2d8] sm:$0xff]
  %v107 = vld [vmem:[%s0 + $0x2e0] sm:$0xff]
  %v108 = vld [vmem:[%s0 + $0x2e8] sm:$0xff]
  %v109 = vld [vmem:[%s0 + $0x2f0] sm:$0xff]
  %v110 = vld [vmem:[%s0 + $0x2f8] sm:$0xff]
  %v111 = vld [vmem:[%s0 + $0x300] sm:$0xff]
  %v112 = vld [vmem:[%s0 + $0x308] sm:$0xff]
  %v113 = vld [vmem:[%s0 + $0x310] sm:$0xff]
  %v114 = vld [vmem:[%s0 + $0x318] sm:$0xff]
  %v115 = vld [vmem:[%s0 + $0x320] sm:$0xff]
  %v116 = vld [vmem:[%s0 + $0x328] sm:$0xff]
  %v117 = vld [vmem:[%s0 + $0x330] sm:$0xff]
  %v118 = vld [vmem:[%s0 + $0x338] sm:$0xff]
  %v119 = vld [vmem:[%s0 + $0x340] sm:$0xff]
  %v120 = vld [vmem:[%s0 + $0x348] sm:$0xff]
  %v121 = vld [vmem:[%s0 + $0x350] sm:$0xff]
  %v122 = vld [vmem:[%s0 + $0x358] sm:$0xff]
  %v123 = vld [vmem:[%s0 + $0x360] sm:$0xff]
  %v124 = vld [vmem:[%s0 + $0x368] sm:$0xff]
  %v125 = vld [vmem:[%s0 + $0x370] sm:$0xff]
  %v126 = vld [vmem:[%s0 + $0x378] sm:$0xff]
  %v127 = vld [vmem:[%s0 + $0x380] sm:$0xff]
  %v128 = vld [vmem:[%s0 + $0x388] sm:$0xff]
  %v129 = vld [vmem:[%s0 + $0x390] sm:$0xff]
  %v130 = vld [vmem:[%s0 + $0x398] sm:$0xff]
  %v131 = vld [vmem:[%s0 + $0x3a0] sm:$0xff]
  %v132 = vld [vmem:[%s0 + $0x3a8] sm:$0xff]
  %v133 = vld [vmem:[%s0 + $0x3b0] sm:$0xff]
  %v134 = vld [vmem:[%s0 + $0x3b8] sm:$0xff]
  %v135 = vld [vmem:[%s0 + $0x3c0] sm:$0xff]
  %v136 = vld [vmem:[%s0 + $0x3c8] sm:$0xff]
  %v137 = vld [vmem:[%s0 + $0x3d0] sm:$0xff]
  %v138 = vld [vmem:[%s0 + $0x3d8] sm:$0xff]
  %v139 = vld [vmem:[%s0 + $0x3e0] sm:$0xff]
  %v140 = vld [vmem:[%s0 + $0x3e8] sm:$0xff]
  %v141 = vld [vmem:[%s0 + $0x3f0] sm:$0xff]
  %v142 = vld [vmem:[%s0 + $0x3f8] sm:$0xff]
  %v143 = vld [vmem:[%s0 + $0x400] sm:$0xff]
  %v144 = vld [vmem:[%s0 + $0x408] sm:$0xff]
  %v145 = vld [vmem:[%s0 + $0x410] sm:$0xff]
  %v146 = vld [vmem:[%s0 + $0x418] sm:$0xff]
  %v147 = vld [vmem:[%s0 + $0x420] sm:$0xff]
  %v148 = vld [vmem:[%s0 + $0x428] sm:$0xff]
  %v149 = vld [vmem:[%s0 + $0x430] sm:$0xff]
  %v150 = vld [vmem:[%s0 + $0x438] sm:$0xff]
  %v151 = vld [vmem:[%s0 + $0x440] sm:$0xff]
  %v152 = vld [vmem:[%s0 + $0x448] sm:$0xff]
  %v153 = vld [vmem:[%s0 + $0x450] sm:$0xff]
  %v154 = vld [vmem:[%s0 + $0x458] sm:$0xff]
  %v155 = vld [vmem:[%s0 + $0x460] sm:$0xff]
  %v156 = vld [vmem:[%s0 + $0x468] sm:$0xff]
  %v157 = vld [vmem:[%s0 + $0x470] sm:$0xff]
  %v158 = vld [vmem:[%s0 + $0x478] sm:$0xff]
  %v159 = vld [vmem:[%s0 + $0x480] sm:$0xff]
  %v160 = vld [vmem:[%s0 + $0x488] sm:$0xff]
  %v161 = vld [vmem:[%s0 + $0x490] sm:$0xff]
  %v162 = vld [vmem:[%s0 + $0x498] sm:$0xff]
  %v163 = vld [vmem:[%s0 + $0x4a0] sm:$0xff]
  %v164 = vld [vmem:[%s0 + $0x4a8] sm:$0xff]
  %v165 = vld [vmem:[%s0 + $0x4b0] sm:$0xff]
  %v166 = vld [vmem:[%s0 + $0x4b8] sm:$0xff]
  %v167 = vld [vmem:[%s0 + $0x4c0] sm:$0xff]
  %v168 = vld [vmem:[%s0 + $0x4c8] sm:$0xff]
  %v169 = vld [vmem:[%s0 + $0x4d0] sm:$0xff]
  %v170 = vld [vmem:[%s0 + $0x4d8] sm:$0xff]
  %v171 = vld [vmem:[%s0 + $0x4e0] sm:$0xff]
  %v172 = vld [vmem:[%s0 + $0x4e8] sm:$0xff]
  %v173 = vld [vmem:[%s0 + $0x4f0] sm:$0xff]
  %v174 = vld [vmem:[%s0 + $0x4f8] sm:$0xff]
  %v175 = vld [vmem:[%s0 + $0x500] sm:$0xff]
  %v176 = vld [vmem:[%s0 + $0x508] sm:$0xff]
  %v177 = vld [vmem:[%s0 + $0x510] sm:$0xff]
  %v178 = vld [vmem:[%s0 + $0x518] sm:$0xff]
  %v179 = vld [vmem:[%s0 + $0x520] sm:$0xff]
  %v180 = vld [vmem:[%s0 + $0x528] sm:$0xff]
  %v181 = vld [vmem:[%s0 + $0x530] sm:$0xff]
  %v182 = vld [vmem:[%s0 + $0x538] sm:$0xff]
  %v183 = vld [vmem:[%s0 + $0x540] sm:$0xff]
  %v184 = vld [vmem:[%s0 + $0x548] sm:$0xff]
  %v185 = vld [vmem:[%s0 + $0x550] sm:$0xff]
  %v186 = vld [vmem:[%s0 + $0x558] sm:$0xff]
  %v187 = vld [vmem:[%s0 + $0x560] sm:$0xff]
  %v188 = vld [vmem:[%s0 + $0x568] sm:$0xff]
  %v189 = vld [vmem:[%s0 + $0x570] sm:$0xff]
  %v190 = vld [vmem:[%s0 + $0x578] sm:$0xff]
  %v191 = vld [vmem:[%s0 + $0x580] sm:$0xff]
  %v192 = vld [vmem:[%s0 + $0x588] sm:$0xff]
  %v193 = vld [vmem:[%s0 + $0x590] sm:$0xff]
  %v194 = vld [vmem:[%s0 + $0x598] sm:$0xff]
  %v195 = vld [vmem:[%s0 + $0x5a0] sm:$0xff]
  %v196 = vld [vmem:[%s0 + $0x5a8] sm:$0xff]
  %v197 = vld [vmem:[%s0 + $0x5b0] sm:$0xff]
  %v198 = vld [vmem:[%s0 + $0x5b8] sm:$0xff]
  %v199 = vld [vmem:[%s0 + $0x5c0] sm:$0xff]
  %v200 = vld [vmem:[%s0 + $0x5c8] sm:$0xff]
  %v201 = vld [vmem:[%s0 + $0x5d0] sm:$0xff]
  %v202 = vld [vmem:[%s0 + $0x5d8] sm:$0xff]
  %v203 = vld [vmem:[%s0 + $0x5e0] sm:$0xff]
  %v204 = vld [vmem:[%s0 + $0x5e8] sm:$0xff]
  %v205 = vld [vmem:[%s0 + $0x5f0] sm:$0xff]
  %v206 = vld [vmem:[%s0 + $0x5f8] sm:$0xff]
  %v207 = vld [vmem:[%s0 + $0x600] sm:$0xff]
  %v208 = vld [vmem:[%s0 + $0x608] sm:$0xff]
  %v209 = vld [vmem:[%s0 + $0x610] sm:$0xff]
  %v210 = vld [vmem:[%s0 + $0x618] sm:$0xff]
  %v211 = vld [vmem:[%s0 + $0x620] sm:$0xff]
  %v212 = vld [vmem:[%s0 + $0x628] sm:$0xff]
  %v213 = vld [vmem:[%s0 + $0x630] sm:$0xff]
  %v214 = vld [vmem:[%s0 + $0x638] sm:$0xff]
  %v215 = vld [vmem:[%s0 + $0x640] sm:$0xff]
  %v216 = vld [vmem:[%s0 + $0x648] sm:$0xff]
  %v217 = vld [vmem:[%s0 + $0x650] sm:$0xff]
  %v218 = vld [vmem:[%s0 + $0x658] sm:$0xff]
  %v219 = vld [vmem:[%s0 + $0x660] sm:$0xff]
  %v220 = vld [vmem:[%s0 + $0x668] sm:$0xff]
  %v221 = vld [vmem:[%s0 + $0x670] sm:$0xff]
  %v222 = vld [vmem:[%s0 + $0x678] sm:$0xff]
  %v223 = vld [vmem:[%s0 + $0x680] sm:$0xff]
  %v224 = vld [vmem:[%s0 + $0x688] sm:$0xff]
  %v225 = vld [vmem:[%s0 + $0x690] sm:$0xff]
  %v226 = vld [vmem:[%s0 + $0x698] sm:$0xff]
  %v227 = vld [vmem:[%s0 + $0x6a0] sm:$0xff]
  %v228 = vld [vmem:[%s0 + $0x6a8] sm:$0xff]
  %v229 = vld [vmem:[%s0 + $0x6b0] sm:$0xff]
  %v230 = vld [vmem:[%s0 + $0x6b8] sm:$0xff]
  %v231 = vld [vmem:[%s0 + $0x6c0] sm:$0xff]
  %v232 = vld [vmem:[%s0 + $0x6c8] sm:$0xff]
  %v233 = vld [vmem:[%s0 + $0x6d0] sm:$0xff]
  %v234 = vld [vmem:[%s0 + $0x6d8] sm:$0xff]
  %v235 = vld [vmem:[%s0 + $0x6e0] sm:$0xff]
  %v236 = vld [vmem:[%s0 + $0x6e8] sm:$0xff]
  %v237 = vld [vmem:[%s0 + $0x6f0] sm:$0xff]
  %v238 = vld [vmem:[%s0 + $0x6f8] sm:$0xff]
  %v239 = vld [vmem:[%s0 + $0x700] sm:$0xff]
  %v240 = vld [vmem:[%s0 + $0x708] sm:$0xff]
  %v241 = vld [vmem:[%s0 + $0x710] sm:$0xff]
  %v242 = vld [vmem:[%s0 + $0x718] sm:$0xff]
  %v243 = vld [vmem:[%s0 + $0x720] sm:$0xff]
  %v244 = vld [vmem:[%s0 + $0x728] sm:$0xff]
  %v245 = vld [vmem:[%s0 + $0x730] sm:$0xff]
  %v246 = vld [vmem:[%s0 + $0x738] sm:$0xff]
  %v247 = vld [vmem:[%s0 + $0x740] sm:$0xff]
  %v248 = vld [vmem:[%s0 + $0x748] sm:$0xff]
  %v249 = vld [vmem:[%s0 + $0x750] sm:$0xff]
  %v250 = vld [vmem:[%s0 + $0x758] sm:$0xff]
  %v251 = vld [vmem:[%s0 + $0x760] sm:$0xff]
  %v252 = vld [vmem:[%s0 + $0x768] sm:$0xff]
  %v253 = vld [vmem:[%s0 + $0x770] sm:$0xff]
  %v254 = vld [vmem:[%s0 + $0x778] sm:$0xff]
  %v255 = vld [vmem:[%s0 + $0x780] sm:$0xff]
  %v256 = vld [vmem:[%s0 + $0x788] sm:$0xff]
  %v257 = vld [vmem:[%s0 + $0x790] sm:$0xff]
  %v258 = vld [vmem:[%s0 + $0x798] sm:$0xff]
  %v259 = vld [vmem:[%s0 + $0x7a0] sm:$0xff]
  %v260 = vld [vmem:[%s0 + $0x7a8] sm:$0xff]
  %v261 = vld [vmem:[%s0 + $0x7b0] sm:$0xff]
  %v262 = vld [vmem:[%s0 + $0x7b8] sm:$0xff]
  %v263 = vld [vmem:[%s0 + $0x7c0] sm:$0xff]
  %v264 = vld [vmem:[%s0 + $0x7c8] sm:$0xff]
  %v265 = vld [vmem:[%s0 + $0x7d0] sm:$0xff]
  %v266 = vld [vmem:[%s0 + $0x7d8] sm:$0xff]
  %v267 = vld [vmem:[%s0 + $0x7e0] sm:$0xff]
  %v268 = vld [vmem:[%s0 + $0x7e8] sm:$0xff]
  %v269 = vld [vmem:[%s0 + $0x7f0] sm:$0xff]
  %v270 = vld [vmem:[%s0 + $0x7f8] sm:$0xff]
  %v271 = vld [vmem:[%s0 + $0x800] sm:$0xff]
  %v272 = vld [vmem:[%s0 + $0x808] sm:$0xff]
  %v273 = vld [vmem:[%s0 + $0x810] sm:$0xff]
  %v274 = vld [vmem:[%s0 + $0x818] sm:$0xff]
  %v275 = vld [vmem:[%s0 + $0x820] sm:$0x3]
  %v276 = vld [vmem:[%s0 + $0x828] sm:$0x3]
  %v277 = vld [vmem:[%s0 + $0x830] sm:$0x3]
  %v278 = vld [vmem:[%s0 + $0x838] sm:$0x3]
  %v279 = vld [vmem:[%s0 + $0x840] sm:$0x3]
  %v280 = vld [vmem:[%s0 + $0x848] sm:$0x3]
  %v281 = vld [vmem:[%s0 + $0x850] sm:$0x3]
  %v282 = vld [vmem:[%s0 + $0x858] sm:$0x3]
  %v283 = vld [vmem:[%s0 + $0x860] sm:$0x3]
  %v284 = vld [vmem:[%s0 + $0x868] sm:$0x3]
  %v285 = vld [vmem:[%s0 + $0x870] sm:$0x3]
  %v286 = vld [vmem:[%s0 + $0x878] sm:$0x3]
  %v287 = vld [vmem:[%s0 + $0x880] sm:$0x3]
  %v288 = vpack.c.bf16 %v28, %v15
  %v289 = vpack.c.bf16 %v29, %v16
  %v290 = vpack.c.bf16 %v30, %v17
  %v291 = vpack.c.bf16 %v31, %v18
  %v292 = vpack.c.bf16 %v32, %v19
  %v293 = vpack.c.bf16 %v33, %v20
  %v294 = vpack.c.bf16 %v34, %v21
  %v295 = vpack.c.bf16 %v35, %v22
  %v296 = vpack.c.bf16 %v36, %v23
  %v297 = vpack.c.bf16 %v37, %v24
  %v298 = vpack.c.bf16 %v38, %v25
  %v299 = vpack.c.bf16 %v39, %v26
  %v300 = vpack.c.bf16 %v40, %v27
  %v301 = vpack.c.bf16 %v54, %v41
  %v302 = vpack.c.bf16 %v55, %v42
  %v303 = vpack.c.bf16 %v56, %v43
  %v304 = vpack.c.bf16 %v57, %v44
  %v305 = vpack.c.bf16 %v58, %v45
  %v306 = vpack.c.bf16 %v59, %v46
  %v307 = vpack.c.bf16 %v60, %v47
  %v308 = vpack.c.bf16 %v61, %v48
  %v309 = vpack.c.bf16 %v62, %v49
  %v310 = vpack.c.bf16 %v63, %v50
  %v311 = vpack.c.bf16 %v64, %v51
  %v312 = vpack.c.bf16 %v65, %v52
  %v313 = vpack.c.bf16 %v66, %v53
  %v314 = vpack.c.bf16 %v80, %v67
  %v315 = vpack.c.bf16 %v81, %v68
  %v316 = vpack.c.bf16 %v82, %v69
  %v317 = vpack.c.bf16 %v83, %v70
  %v318 = vpack.c.bf16 %v84, %v71
  %v319 = vpack.c.bf16 %v85, %v72
  %v320 = vpack.c.bf16 %v86, %v73
  %v321 = vpack.c.bf16 %v87, %v74
  %v322 = vpack.c.bf16 %v88, %v75
  %v323 = vpack.c.bf16 %v89, %v76
  %v324 = vpack.c.bf16 %v90, %v77
  %v325 = vpack.c.bf16 %v91, %v78
  %v326 = vpack.c.bf16 %v92, %v79
  %v327 = vpack.c.bf16 %v106, %v93
  %v328 = vpack.c.bf16 %v107, %v94
  %v329 = vpack.c.bf16 %v108, %v95
  %v330 = vpack.c.bf16 %v109, %v96
  %v331 = vpack.c.bf16 %v110, %v97
  %v332 = vpack.c.bf16 %v111, %v98
  %v333 = vpack.c.bf16 %v112, %v99
  %v334 = vpack.c.bf16 %v113, %v100
  %v335 = vpack.c.bf16 %v114, %v101
  %v336 = vpack.c.bf16 %v115, %v102
  %v337 = vpack.c.bf16 %v116, %v103
  %v338 = vpack.c.bf16 %v117, %v104
  %v339 = vpack.c.bf16 %v118, %v105
  %v340 = vpack.c.bf16 %v132, %v119
  %v341 = vpack.c.bf16 %v133, %v120
  %v342 = vpack.c.bf16 %v134, %v121
  %v343 = vpack.c.bf16 %v135, %v122
  %v344 = vpack.c.bf16 %v136, %v123
  %v345 = vpack.c.bf16 %v137, %v124
  %v346 = vpack.c.bf16 %v138, %v125
  %v347 = vpack.c.bf16 %v139, %v126
  %v348 = vpack.c.bf16 %v140, %v127
  %v349 = vpack.c.bf16 %v141, %v128
  %v350 = vpack.c.bf16 %v142, %v129
  %v351 = vpack.c.bf16 %v143, %v130
  %v352 = vpack.c.bf16 %v144, %v131
  %v353 = vpack.c.bf16 %v158, %v145
  %v354 = vpack.c.bf16 %v159, %v146
  %v355 = vpack.c.bf16 %v160, %v147
  %v356 = vpack.c.bf16 %v161, %v148
  %v357 = vpack.c.bf16 %v162, %v149
  %v358 = vpack.c.bf16 %v163, %v150
  %v359 = vpack.c.bf16 %v164, %v151
  %v360 = vpack.c.bf16 %v165, %v152
  %v361 = vpack.c.bf16 %v166, %v153
  %v362 = vpack.c.bf16 %v167, %v154
  %v363 = vpack.c.bf16 %v168, %v155
  %v364 = vpack.c.bf16 %v169, %v156
  %v365 = vpack.c.bf16 %v170, %v157
  %v366 = vpack.c.bf16 %v184, %v171
  %v367 = vpack.c.bf16 %v185, %v172
  %v368 = vpack.c.bf16 %v186, %v173
  %v369 = vpack.c.bf16 %v187, %v174
  %v370 = vpack.c.bf16 %v188, %v175
  %v371 = vpack.c.bf16 %v189, %v176
  %v372 = vpack.c.bf16 %v190, %v177
  %v373 = vpack.c.bf16 %v191, %v178
  %v374 = vpack.c.bf16 %v192, %v179
  %v375 = vpack.c.bf16 %v193, %v180
  %v376 = vpack.c.bf16 %v194, %v181
  %v377 = vpack.c.bf16 %v195, %v182
  %v378 = vpack.c.bf16 %v196, %v183
  %v379 = vpack.c.bf16 %v210, %v197
  %v380 = vpack.c.bf16 %v211, %v198
  %v381 = vpack.c.bf16 %v212, %v199
  %v382 = vpack.c.bf16 %v213, %v200
  %v383 = vpack.c.bf16 %v214, %v201
  %v384 = vpack.c.bf16 %v215, %v202
  %v385 = vpack.c.bf16 %v216, %v203
  %v386 = vpack.c.bf16 %v217, %v204
  %v387 = vpack.c.bf16 %v218, %v205
  %v388 = vpack.c.bf16 %v219, %v206
  %v389 = vpack.c.bf16 %v220, %v207
  %v390 = vpack.c.bf16 %v221, %v208
  %v391 = vpack.c.bf16 %v222, %v209
  %v392 = vpack.c.bf16 %v236, %v223
  %v393 = vpack.c.bf16 %v237, %v224
  %v394 = vpack.c.bf16 %v238, %v225
  %v395 = vpack.c.bf16 %v239, %v226
  %v396 = vpack.c.bf16 %v240, %v227
  %v397 = vpack.c.bf16 %v241, %v228
  %v398 = vpack.c.bf16 %v242, %v229
  %v399 = vpack.c.bf16 %v243, %v230
  %v400 = vpack.c.bf16 %v244, %v231
  %v401 = vpack.c.bf16 %v245, %v232
  %v402 = vpack.c.bf16 %v246, %v233
  %v403 = vpack.c.bf16 %v247, %v234
  %v404 = vpack.c.bf16 %v248, %v235
  %v405 = vpack.c.bf16 %v262, %v249
  %v406 = vpack.c.bf16 %v263, %v250
  %v407 = vpack.c.bf16 %v264, %v251
  %v408 = vpack.c.bf16 %v265, %v252
  %v409 = vpack.c.bf16 %v266, %v253
  %v410 = vpack.c.bf16 %v267, %v254
  %v411 = vpack.c.bf16 %v268, %v255
  %v412 = vpack.c.bf16 %v269, %v256
  %v413 = vpack.c.bf16 %v270, %v257
  %v414 = vpack.c.bf16 %v271, %v258
  %v415 = vpack.c.bf16 %v272, %v259
  %v416 = vpack.c.bf16 %v273, %v260
  %v417 = vpack.c.bf16 %v274, %v261
  %v418 = vpack.c.bf16 %v275, %v275
  %v419 = vpack.c.bf16 %v276, %v276
  %v420 = vpack.c.bf16 %v277, %v277
  %v421 = vpack.c.bf16 %v278, %v278
  %v422 = vpack.c.bf16 %v279, %v279
  %v423 = vpack.c.bf16 %v280, %v280
  %v424 = vpack.c.bf16 %v281, %v281
  %v425 = vpack.c.bf16 %v282, %v282
  %v426 = vpack.c.bf16 %v283, %v283
  %v427 = vpack.c.bf16 %v284, %v284
  %v428 = vpack.c.bf16 %v285, %v285
  %v429 = vpack.c.bf16 %v286, %v286
  %v430 = vpack.c.bf16 %v287, %v287
  %v431 = vld [vmem:[%s1] sm:$0xf]
  %v432 = vld [vmem:[%s1 + $0x4] sm:$0xf]
  %v433 = vld [vmem:[%s1 + $0x8] sm:$0xf]
  %v434 = vld [vmem:[%s1 + $0xc] sm:$0xf]
  %v435 = vld [vmem:[%s1 + $0x10] sm:$0xf]
  %v436 = vld [vmem:[%s1 + $0x14] sm:$0xf]
  %v437 = vld [vmem:[%s1 + $0x18] sm:$0xf]
  %v438 = vld [vmem:[%s1 + $0x1c] sm:$0xf]
  %v439 = vld [vmem:[%s1 + $0x20] sm:$0xf]
  %v440 = vld [vmem:[%s1 + $0x24] sm:$0xf]
  %v441 = vld [vmem:[%s1 + $0x28] sm:$0xf]
  %v442 = vld [vmem:[%s1 + $0x2c] sm:$0xf]
  %v443 = vld [vmem:[%s1 + $0x30] sm:$0xf]
  %v444 = vld [vmem:[%s1 + $0x34] sm:$0xf]
  %v445 = vld [vmem:[%s1 + $0x38] sm:$0xf]
  %v446 = vld [vmem:[%s1 + $0x3c] sm:$0xf]
  %v447 = vld [vmem:[%s1 + $0x40] sm:$0xf]
  %v448 = vld [vmem:[%s1 + $0x44] sm:$0xf]
  %v449 = vld [vmem:[%s1 + $0x48] sm:$0xf]
  %v450 = vld [vmem:[%s1 + $0x4c] sm:$0xf]
  %v451 = vld [vmem:[%s1 + $0x50] sm:$0xf]
  %v452 = vld [vmem:[%s1 + $0x54] sm:$0xf]
  %v453 = vld [vmem:[%s1 + $0x58] sm:$0xf]
  %v454 = vld [vmem:[%s1 + $0x5c] sm:$0xf]
  %v455 = vld [vmem:[%s1 + $0x60] sm:$0xf]
  %v456 = vld [vmem:[%s1 + $0x64] sm:$0xf]
  %v457 = vld [vmem:[%s1 + $0x68] sm:$0xf]
  %v458 = vld [vmem:[%s1 + $0x6c] sm:$0xf]
  %v459 = vld [vmem:[%s1 + $0x70] sm:$0xf]
  %v460 = vld [vmem:[%s1 + $0x74] sm:$0xf]
  %v461 = vld [vmem:[%s1 + $0x78] sm:$0xf]
  %v462 = vld [vmem:[%s1 + $0x7c] sm:$0xf]
  %v463 = vld [vmem:[%s1 + $0x80] sm:$0xf]
  %v464 = vld [vmem:[%s1 + $0x84] sm:$0xf]
  %v465 = vld [vmem:[%s1 + $0x88] sm:$0xf]
  %v466 = vld [vmem:[%s1 + $0x8c] sm:$0xf]
  %v467 = vld [vmem:[%s1 + $0x90] sm:$0xf]
  %v468 = vld [vmem:[%s1 + $0x94] sm:$0xf]
  %v469 = vld [vmem:[%s1 + $0x98] sm:$0xf]
  %v470 = vld [vmem:[%s1 + $0x9c] sm:$0xf]
  %v471 = vld [vmem:[%s1 + $0xa0] sm:$0xf]
  %v472 = vld [vmem:[%s1 + $0xa4] sm:$0xf]
  %v473 = vld [vmem:[%s1 + $0xa8] sm:$0xf]
  %v474 = vld [vmem:[%s1 + $0xac] sm:$0xf]
  %v475 = vld [vmem:[%s1 + $0xb0] sm:$0xf]
  %v476 = vld [vmem:[%s1 + $0xb4] sm:$0xf]
  %v477 = vld [vmem:[%s1 + $0xb8] sm:$0xf]
  %v478 = vld [vmem:[%s1 + $0xbc] sm:$0xf]
  %v479 = vld [vmem:[%s1 + $0xc0] sm:$0xf]
  %v480 = vld [vmem:[%s1 + $0xc4] sm:$0xf]
  %v481 = vld [vmem:[%s1 + $0xc8] sm:$0xf]
  %v482 = vld [vmem:[%s1 + $0xcc] sm:$0xf]
  %v483 = vld [vmem:[%s1 + $0xd0] sm:$0xf]
  %v484 = vld [vmem:[%s1 + $0xd4] sm:$0xf]
  %v485 = vld [vmem:[%s1 + $0xd8] sm:$0xf]
  %v486 = vld [vmem:[%s1 + $0xdc] sm:$0xf]
  %v487 = vld [vmem:[%s1 + $0xe0] sm:$0xf]
  %v488 = vld [vmem:[%s1 + $0xe4] sm:$0xf]
  %v489 = vld [vmem:[%s1 + $0xe8] sm:$0xf]
  %v490 = vld [vmem:[%s1 + $0xec] sm:$0xf]
  %v491 = vld [vmem:[%s1 + $0xf0] sm:$0xf]
  %v492 = vld [vmem:[%s1 + $0xf4] sm:$0xf]
  %v493 = vld [vmem:[%s1 + $0xf8] sm:$0xf]
  %v494 = vld [vmem:[%s1 + $0xfc] sm:$0xf]
  %v495 = vld [vmem:[%s1 + $0x100] sm:$0xf]
  %v496 = vld [vmem:[%s1 + $0x104] sm:$0xf]
  %v497 = vld [vmem:[%s1 + $0x108] sm:$0xf]
  %v498 = vld [vmem:[%s1 + $0x10c] sm:$0xf]
  %v499 = vld [vmem:[%s1 + $0x110] sm:$0xf]
  %v500 = vld [vmem:[%s1 + $0x114] sm:$0xf]
  %v501 = vld [vmem:[%s1 + $0x118] sm:$0xf]
  %v502 = vld [vmem:[%s1 + $0x11c] sm:$0xf]
  %v503 = vld [vmem:[%s1 + $0x120] sm:$0xf]
  %v504 = vld [vmem:[%s1 + $0x124] sm:$0xf]
  %v505 = vld [vmem:[%s1 + $0x128] sm:$0xf]
  %v506 = vld [vmem:[%s1 + $0x12c] sm:$0xf]
  %v507 = vld [vmem:[%s1 + $0x130] sm:$0xf]
  %v508 = vld [vmem:[%s1 + $0x134] sm:$0xf]
  %v509 = vld [vmem:[%s1 + $0x138] sm:$0xf]
  %v510 = vld [vmem:[%s1 + $0x13c] sm:$0xf]
  %v511 = vld [vmem:[%s1 + $0x140] sm:$0xf]
  %v512 = vld [vmem:[%s1 + $0x144] sm:$0xf]
  %v513 = vld [vmem:[%s1 + $0x148] sm:$0xf]
  %v514 = vld [vmem:[%s1 + $0x14c] sm:$0xf]
  %v515 = vld [vmem:[%s1 + $0x150] sm:$0xf]
  %v516 = vld [vmem:[%s1 + $0x154] sm:$0xf]
  %v517 = vld [vmem:[%s1 + $0x158] sm:$0xf]
  %v518 = vld [vmem:[%s1 + $0x15c] sm:$0xf]
  %v519 = vld [vmem:[%s1 + $0x160] sm:$0xf]
  %v520 = vld [vmem:[%s1 + $0x164] sm:$0xf]
  %v521 = vld [vmem:[%s1 + $0x168] sm:$0xf]
  %v522 = vld [vmem:[%s1 + $0x16c] sm:$0xf]
  %v523 = vld [vmem:[%s1 + $0x170] sm:$0xf]
  %v524 = vld [vmem:[%s1 + $0x174] sm:$0xf]
  %v525 = vld [vmem:[%s1 + $0x178] sm:$0xf]
  %v526 = vld [vmem:[%s1 + $0x17c] sm:$0xf]
  %v527 = vld [vmem:[%s1 + $0x180] sm:$0xf]
  %v528 = vld [vmem:[%s1 + $0x184] sm:$0xf]
  %v529 = vld [vmem:[%s1 + $0x188] sm:$0xf]
  %v530 = vld [vmem:[%s1 + $0x18c] sm:$0xf]
  %v531 = vld [vmem:[%s1 + $0x190] sm:$0xf]
  %v532 = vld [vmem:[%s1 + $0x194] sm:$0xf]
  %v533 = vld [vmem:[%s1 + $0x198] sm:$0xf]
  %v534 = vld [vmem:[%s1 + $0x19c] sm:$0xf]
  %v535 = vld [vmem:[%s1 + $0x1a0] sm:$0xf]
  %v536 = vld [vmem:[%s1 + $0x1a4] sm:$0xf]
  %v537 = vld [vmem:[%s1 + $0x1a8] sm:$0xf]
  %v538 = vld [vmem:[%s1 + $0x1ac] sm:$0xf]
  %v539 = vld [vmem:[%s1 + $0x1b0] sm:$0xf]
  %v540 = vld [vmem:[%s1 + $0x1b4] sm:$0xf]
  %v541 = vld [vmem:[%s1 + $0x1b8] sm:$0xf]
  %v542 = vld [vmem:[%s1 + $0x1bc] sm:$0xf]
  %v543 = vld [vmem:[%s1 + $0x1c0] sm:$0xf]
  %v544 = vld [vmem:[%s1 + $0x1c4] sm:$0xf]
  %v545 = vld [vmem:[%s1 + $0x1c8] sm:$0xf]
  %v546 = vld [vmem:[%s1 + $0x1cc] sm:$0xf]
  %v547 = vld [vmem:[%s1 + $0x1d0] sm:$0xf]
  %v548 = vld [vmem:[%s1 + $0x1d4] sm:$0xf]
  %v549 = vld [vmem:[%s1 + $0x1d8] sm:$0xf]
  %v550 = vld [vmem:[%s1 + $0x1dc] sm:$0xf]
  %v551 = vld [vmem:[%s1 + $0x1e0] sm:$0xf]
  %v552 = vld [vmem:[%s1 + $0x1e4] sm:$0xf]
  %v553 = vld [vmem:[%s1 + $0x1e8] sm:$0xf]
  %v554 = vld [vmem:[%s1 + $0x1ec] sm:$0xf]
  %v555 = vld [vmem:[%s1 + $0x1f0] sm:$0xf]
  %v556 = vld [vmem:[%s1 + $0x1f4] sm:$0xf]
  %v557 = vld [vmem:[%s1 + $0x1f8] sm:$0xf]
  %v558 = vld [vmem:[%s1 + $0x1fc] sm:$0xf]
  %v559 = vld [vmem:[%s1 + $0x200] sm:$0xf]
  %v560 = vld [vmem:[%s1 + $0x204] sm:$0xf]
  %v561 = vld [vmem:[%s1 + $0x208] sm:$0xf]
  %v562 = vld [vmem:[%s1 + $0x20c] sm:$0xf]
  %v563 = vld [vmem:[%s1 + $0x210] sm:$0xf]
  %v564 = vld [vmem:[%s1 + $0x214] sm:$0xf]
  %v565 = vld [vmem:[%s1 + $0x218] sm:$0xf]
  %v566 = vld [vmem:[%s1 + $0x21c] sm:$0xf]
  %v567 = vld [vmem:[%s1 + $0x220] sm:$0xf]
  %v568 = vld [vmem:[%s1 + $0x224] sm:$0xf]
  %v569 = vld [vmem:[%s1 + $0x228] sm:$0xf]
  %v570 = vld [vmem:[%s1 + $0x22c] sm:$0xf]
  %v571 = vld [vmem:[%s1 + $0x230] sm:$0xf]
  %v572 = vld [vmem:[%s1 + $0x234] sm:$0xf]
  %v573 = vld [vmem:[%s1 + $0x238] sm:$0xf]
  %v574 = vld [vmem:[%s1 + $0x23c] sm:$0xf]
  %v575 = vld [vmem:[%s1 + $0x240] sm:$0xf]
  %v576 = vld [vmem:[%s1 + $0x244] sm:$0xf]
  %v577 = vld [vmem:[%s1 + $0x248] sm:$0xf]
  %v578 = vld [vmem:[%s1 + $0x24c] sm:$0xf]
  %v579 = vld [vmem:[%s1 + $0x250] sm:$0xf]
  %v580 = vld [vmem:[%s1 + $0x254] sm:$0xf]
  %v581 = vld [vmem:[%s1 + $0x258] sm:$0xf]
  %v582 = vld [vmem:[%s1 + $0x25c] sm:$0xf]
  %v583 = vld [vmem:[%s1 + $0x260] sm:$0xf]
  %v584 = vld [vmem:[%s1 + $0x264] sm:$0xf]
  %v585 = vld [vmem:[%s1 + $0x268] sm:$0xf]
  %v586 = vld [vmem:[%s1 + $0x26c] sm:$0xf]
  %v587 = vld [vmem:[%s1 + $0x270] sm:$0xf]
  %v588 = vld [vmem:[%s1 + $0x274] sm:$0xf]
  %v589 = vld [vmem:[%s1 + $0x278] sm:$0xf]
  %v590 = vld [vmem:[%s1 + $0x27c] sm:$0xf]
  %v591 = vld [vmem:[%s1 + $0x280] sm:$0xf]
  %v592 = vld [vmem:[%s1 + $0x284] sm:$0xf]
  %v593 = vld [vmem:[%s1 + $0x288] sm:$0xf]
  %v594 = vld [vmem:[%s1 + $0x28c] sm:$0xf]
  %v595 = vld [vmem:[%s1 + $0x290] sm:$0xf]
  %v596 = vld [vmem:[%s1 + $0x294] sm:$0xf]
  %v597 = vld [vmem:[%s1 + $0x298] sm:$0xf]
  %v598 = vld [vmem:[%s1 + $0x29c] sm:$0xf]
  %v599 = vld [vmem:[%s1 + $0x2a0] sm:$0xf]
  %v600 = vld [vmem:[%s1 + $0x2a4] sm:$0xf]
  %v601 = vld [vmem:[%s1 + $0x2a8] sm:$0xf]
  %v602 = vld [vmem:[%s1 + $0x2ac] sm:$0xf]
  %v603 = vld [vmem:[%s1 + $0x2b0] sm:$0xf]
  %v604 = vld [vmem:[%s1 + $0x2b4] sm:$0xf]
  %v605 = vld [vmem:[%s1 + $0x2b8] sm:$0xf]
  %v606 = vld [vmem:[%s1 + $0x2bc] sm:$0xf]
  %v607 = vld [vmem:[%s1 + $0x2c0] sm:$0xf]
  %v608 = vld [vmem:[%s1 + $0x2c4] sm:$0xf]
  %v609 = vld [vmem:[%s1 + $0x2c8] sm:$0xf]
  %v610 = vld [vmem:[%s1 + $0x2cc] sm:$0xf]
  %v611 = vld [vmem:[%s1 + $0x2d0] sm:$0xf]
  %v612 = vld [vmem:[%s1 + $0x2d4] sm:$0xf]
  %v613 = vld [vmem:[%s1 + $0x2d8] sm:$0xf]
  %v614 = vld [vmem:[%s1 + $0x2dc] sm:$0xf]
  %v615 = vld [vmem:[%s1 + $0x2e0] sm:$0xf]
  %v616 = vld [vmem:[%s1 + $0x2e4] sm:$0xf]
  %v617 = vld [vmem:[%s1 + $0x2e8] sm:$0xf]
  %v618 = vld [vmem:[%s1 + $0x2ec] sm:$0xf]
  %v619 = vld [vmem:[%s1 + $0x2f0] sm:$0xf]
  %v620 = vld [vmem:[%s1 + $0x2f4] sm:$0xf]
  %v621 = vld [vmem:[%s1 + $0x2f8] sm:$0xf]
  %v622 = vld [vmem:[%s1 + $0x2fc] sm:$0xf]
  %v623 = vld [vmem:[%s1 + $0x300] sm:$0xf]
  %v624 = vld [vmem:[%s1 + $0x304] sm:$0xf]
  %v625 = vld [vmem:[%s1 + $0x308] sm:$0xf]
  %v626 = vld [vmem:[%s1 + $0x30c] sm:$0xf]
  %v627 = vld [vmem:[%s1 + $0x310] sm:$0xf]
  %v628 = vld [vmem:[%s1 + $0x314] sm:$0xf]
  %v629 = vld [vmem:[%s1 + $0x318] sm:$0xf]
  %v630 = vld [vmem:[%s1 + $0x31c] sm:$0xf]
  %v631 = vld [vmem:[%s2] sm:$0x1]
  %v633 = vlaneseq
  %v634 = vshrl.u32 %v633, 7
  %v635 = vsub.s32 0, %v634
  %v636 = vrot.slane %v631, %v635
  %v838 = vunpack.c.l.b16 %v431
  %v839 = vunpack.c.l.b16 %v432
  %v840 = vunpack.c.l.b16 %v433
  %v841 = vunpack.c.l.b16 %v434
  %v842 = vunpack.c.l.b16 %v435
  %v843 = vunpack.c.l.b16 %v436
  %v844 = vunpack.c.l.b16 %v437
  %v845 = vunpack.c.l.b16 %v438
  %v846 = vunpack.c.l.b16 %v439
  %v847 = vunpack.c.l.b16 %v440
  %v848 = vunpack.c.l.b16 %v441
  %v849 = vunpack.c.l.b16 %v442
  %v850 = vunpack.c.l.b16 %v443
  %v851 = vunpack.c.l.b16 %v444
  %v852 = vunpack.c.l.b16 %v445
  %v853 = vunpack.c.l.b16 %v446
  %v854 = vunpack.c.l.b16 %v447
  %v855 = vunpack.c.l.b16 %v448
  %v856 = vunpack.c.l.b16 %v449
  %v857 = vunpack.c.l.b16 %v450
  %v858 = vunpack.c.l.b16 %v451
  %v859 = vunpack.c.l.b16 %v452
  %v860 = vunpack.c.l.b16 %v453
  %v861 = vunpack.c.l.b16 %v454
  %v862 = vunpack.c.l.b16 %v455
  %v863 = vunpack.c.l.b16 %v456
  %v864 = vunpack.c.l.b16 %v457
  %v865 = vunpack.c.l.b16 %v458
  %v866 = vunpack.c.l.b16 %v459
  %v867 = vunpack.c.l.b16 %v460
  %v868 = vunpack.c.l.b16 %v461
  %v869 = vunpack.c.l.b16 %v462
  %v870 = vunpack.c.l.b16 %v463
  %v871 = vunpack.c.l.b16 %v464
  %v872 = vunpack.c.l.b16 %v465
  %v873 = vunpack.c.l.b16 %v466
  %v874 = vunpack.c.l.b16 %v467
  %v875 = vunpack.c.l.b16 %v468
  %v876 = vunpack.c.l.b16 %v469
  %v877 = vunpack.c.l.b16 %v470
  %v878 = vunpack.c.l.b16 %v471
  %v879 = vunpack.c.l.b16 %v472
  %v880 = vunpack.c.l.b16 %v473
  %v881 = vunpack.c.l.b16 %v474
  %v882 = vunpack.c.l.b16 %v475
  %v883 = vunpack.c.l.b16 %v476
  %v884 = vunpack.c.l.b16 %v477
  %v885 = vunpack.c.l.b16 %v478
  %v886 = vunpack.c.l.b16 %v479
  %v887 = vunpack.c.l.b16 %v480
  %v888 = vunpack.c.l.b16 %v481
  %v889 = vunpack.c.l.b16 %v482
  %v890 = vunpack.c.l.b16 %v483
  %v891 = vunpack.c.l.b16 %v484
  %v892 = vunpack.c.l.b16 %v485
  %v893 = vunpack.c.l.b16 %v486
  %v894 = vunpack.c.l.b16 %v487
  %v895 = vunpack.c.l.b16 %v488
  %v896 = vunpack.c.l.b16 %v489
  %v897 = vunpack.c.l.b16 %v490
  %v898 = vunpack.c.l.b16 %v491
  %v899 = vunpack.c.l.b16 %v492
  %v900 = vunpack.c.l.b16 %v493
  %v901 = vunpack.c.l.b16 %v494
  %v902 = vunpack.c.l.b16 %v495
  %v903 = vunpack.c.l.b16 %v496
  %v904 = vunpack.c.l.b16 %v497
  %v905 = vunpack.c.l.b16 %v498
  %v906 = vunpack.c.l.b16 %v499
  %v907 = vunpack.c.l.b16 %v500
  %v908 = vunpack.c.l.b16 %v501
  %v909 = vunpack.c.l.b16 %v502
  %v910 = vunpack.c.l.b16 %v503
  %v911 = vunpack.c.l.b16 %v504
  %v912 = vunpack.c.l.b16 %v505
  %v913 = vunpack.c.l.b16 %v506
  %v914 = vunpack.c.l.b16 %v507
  %v915 = vunpack.c.l.b16 %v508
  %v916 = vunpack.c.l.b16 %v509
  %v917 = vunpack.c.l.b16 %v510
  %v918 = vunpack.c.l.b16 %v511
  %v919 = vunpack.c.l.b16 %v512
  %v920 = vunpack.c.l.b16 %v513
  %v921 = vunpack.c.l.b16 %v514
  %v922 = vunpack.c.l.b16 %v515
  %v923 = vunpack.c.l.b16 %v516
  %v924 = vunpack.c.l.b16 %v517
  %v925 = vunpack.c.l.b16 %v518
  %v926 = vunpack.c.l.b16 %v519
  %v927 = vunpack.c.l.b16 %v520
  %v928 = vunpack.c.l.b16 %v521
  %v929 = vunpack.c.l.b16 %v522
  %v930 = vunpack.c.l.b16 %v523
  %v931 = vunpack.c.l.b16 %v524
  %v932 = vunpack.c.l.b16 %v525
  %v933 = vunpack.c.l.b16 %v526
  %v934 = vunpack.c.l.b16 %v527
  %v935 = vunpack.c.l.b16 %v528
  %v936 = vunpack.c.l.b16 %v529
  %v937 = vunpack.c.l.b16 %v530
  %v938 = vunpack.c.l.b16 %v531
  %v939 = vunpack.c.l.b16 %v532
  %v940 = vunpack.c.l.b16 %v533
  %v941 = vunpack.c.l.b16 %v534
  %v942 = vunpack.c.l.b16 %v535
  %v943 = vunpack.c.l.b16 %v536
  %v944 = vunpack.c.l.b16 %v537
  %v945 = vunpack.c.l.b16 %v538
  %v946 = vunpack.c.l.b16 %v539
  %v947 = vunpack.c.l.b16 %v540
  %v948 = vunpack.c.l.b16 %v541
  %v949 = vunpack.c.l.b16 %v542
  %v950 = vunpack.c.l.b16 %v543
  %v951 = vunpack.c.l.b16 %v544
  %v952 = vunpack.c.l.b16 %v545
  %v953 = vunpack.c.l.b16 %v546
  %v954 = vunpack.c.l.b16 %v547
  %v955 = vunpack.c.l.b16 %v548
  %v956 = vunpack.c.l.b16 %v549
  %v957 = vunpack.c.l.b16 %v550
  %v958 = vunpack.c.l.b16 %v551
  %v959 = vunpack.c.l.b16 %v552
  %v960 = vunpack.c.l.b16 %v553
  %v961 = vunpack.c.l.b16 %v554
  %v962 = vunpack.c.l.b16 %v555
  %v963 = vunpack.c.l.b16 %v556
  %v964 = vunpack.c.l.b16 %v557
  %v965 = vunpack.c.l.b16 %v558
  %v966 = vunpack.c.l.b16 %v559
  %v967 = vunpack.c.l.b16 %v560
  %v968 = vunpack.c.l.b16 %v561
  %v969 = vunpack.c.l.b16 %v562
  %v970 = vunpack.c.l.b16 %v563
  %v971 = vunpack.c.l.b16 %v564
  %v972 = vunpack.c.l.b16 %v565
  %v973 = vunpack.c.l.b16 %v566
  %v974 = vunpack.c.l.b16 %v567
  %v975 = vunpack.c.l.b16 %v568
  %v976 = vunpack.c.l.b16 %v569
  %v977 = vunpack.c.l.b16 %v570
  %v978 = vunpack.c.l.b16 %v571
  %v979 = vunpack.c.l.b16 %v572
  %v980 = vunpack.c.l.b16 %v573
  %v981 = vunpack.c.l.b16 %v574
  %v982 = vunpack.c.l.b16 %v575
  %v983 = vunpack.c.l.b16 %v576
  %v984 = vunpack.c.l.b16 %v577
  %v985 = vunpack.c.l.b16 %v578
  %v986 = vunpack.c.l.b16 %v579
  %v987 = vunpack.c.l.b16 %v580
  %v988 = vunpack.c.l.b16 %v581
  %v989 = vunpack.c.l.b16 %v582
  %v990 = vunpack.c.l.b16 %v583
  %v991 = vunpack.c.l.b16 %v584
  %v992 = vunpack.c.l.b16 %v585
  %v993 = vunpack.c.l.b16 %v586
  %v994 = vunpack.c.l.b16 %v587
  %v995 = vunpack.c.l.b16 %v588
  %v996 = vunpack.c.l.b16 %v589
  %v997 = vunpack.c.l.b16 %v590
  %v998 = vunpack.c.l.b16 %v591
  %v999 = vunpack.c.l.b16 %v592
  %v1000 = vunpack.c.l.b16 %v593
  %v1001 = vunpack.c.l.b16 %v594
  %v1002 = vunpack.c.l.b16 %v595
  %v1003 = vunpack.c.l.b16 %v596
  %v1004 = vunpack.c.l.b16 %v597
  %v1005 = vunpack.c.l.b16 %v598
  %v1006 = vunpack.c.l.b16 %v599
  %v1007 = vunpack.c.l.b16 %v600
  %v1008 = vunpack.c.l.b16 %v601
  %v1009 = vunpack.c.l.b16 %v602
  %v1010 = vunpack.c.l.b16 %v603
  %v1011 = vunpack.c.l.b16 %v604
  %v1012 = vunpack.c.l.b16 %v605
  %v1013 = vunpack.c.l.b16 %v606
  %v1014 = vunpack.c.l.b16 %v607
  %v1015 = vunpack.c.l.b16 %v608
  %v1016 = vunpack.c.l.b16 %v609
  %v1017 = vunpack.c.l.b16 %v610
  %v1018 = vunpack.c.l.b16 %v611
  %v1019 = vunpack.c.l.b16 %v612
  %v1020 = vunpack.c.l.b16 %v613
  %v1021 = vunpack.c.l.b16 %v614
  %v1022 = vunpack.c.l.b16 %v615
  %v1023 = vunpack.c.l.b16 %v616
  %v1024 = vunpack.c.l.b16 %v617
  %v1025 = vunpack.c.l.b16 %v618
  %v1026 = vunpack.c.l.b16 %v619
  %v1027 = vunpack.c.l.b16 %v620
  %v1028 = vunpack.c.l.b16 %v621
  %v1029 = vunpack.c.l.b16 %v622
  %v1030 = vunpack.c.l.b16 %v623
  %v1031 = vunpack.c.l.b16 %v624
  %v1032 = vunpack.c.l.b16 %v625
  %v1033 = vunpack.c.l.b16 %v626
  %v1034 = vunpack.c.l.b16 %v627
  %v1035 = vunpack.c.l.b16 %v628
  %v1036 = vunpack.c.l.b16 %v629
  %v1037 = vunpack.c.l.b16 %v630
  %v1038 = vpack.c.b16 %v839, %v838
  %v1039 = vpack.c.b16 %v841, %v840
  %v1040 = vpack.c.b16 %v843, %v842
  %v1041 = vpack.c.b16 %v845, %v844
  %v1042 = vpack.c.b16 %v847, %v846
  %v1043 = vpack.c.b16 %v849, %v848
  %v1044 = vpack.c.b16 %v851, %v850
  %v1045 = vpack.c.b16 %v853, %v852
  %v1046 = vpack.c.b16 %v855, %v854
  %v1047 = vpack.c.b16 %v857, %v856
  %v1048 = vpack.c.b16 %v859, %v858
  %v1049 = vpack.c.b16 %v861, %v860
  %v1050 = vpack.c.b16 %v863, %v862
  %v1051 = vpack.c.b16 %v865, %v864
  %v1052 = vpack.c.b16 %v867, %v866
  %v1053 = vpack.c.b16 %v869, %v868
  %v1054 = vpack.c.b16 %v871, %v870
  %v1055 = vpack.c.b16 %v873, %v872
  %v1056 = vpack.c.b16 %v875, %v874
  %v1057 = vpack.c.b16 %v877, %v876
  %v1058 = vpack.c.b16 %v879, %v878
  %v1059 = vpack.c.b16 %v881, %v880
  %v1060 = vpack.c.b16 %v883, %v882
  %v1061 = vpack.c.b16 %v885, %v884
  %v1062 = vpack.c.b16 %v887, %v886
  %v1063 = vpack.c.b16 %v889, %v888
  %v1064 = vpack.c.b16 %v891, %v890
  %v1065 = vpack.c.b16 %v893, %v892
  %v1066 = vpack.c.b16 %v895, %v894
  %v1067 = vpack.c.b16 %v897, %v896
  %v1068 = vpack.c.b16 %v899, %v898
  %v1069 = vpack.c.b16 %v901, %v900
  %v1070 = vpack.c.b16 %v903, %v902
  %v1071 = vpack.c.b16 %v905, %v904
  %v1072 = vpack.c.b16 %v907, %v906
  %v1073 = vpack.c.b16 %v909, %v908
  %v1074 = vpack.c.b16 %v911, %v910
  %v1075 = vpack.c.b16 %v913, %v912
  %v1076 = vpack.c.b16 %v915, %v914
  %v1077 = vpack.c.b16 %v917, %v916
  %v1078 = vpack.c.b16 %v919, %v918
  %v1079 = vpack.c.b16 %v921, %v920
  %v1080 = vpack.c.b16 %v923, %v922
  %v1081 = vpack.c.b16 %v925, %v924
  %v1082 = vpack.c.b16 %v927, %v926
  %v1083 = vpack.c.b16 %v929, %v928
  %v1084 = vpack.c.b16 %v931, %v930
  %v1085 = vpack.c.b16 %v933, %v932
  %v1086 = vpack.c.b16 %v935, %v934
  %v1087 = vpack.c.b16 %v937, %v936
  %v1088 = vpack.c.b16 %v939, %v938
  %v1089 = vpack.c.b16 %v941, %v940
  %v1090 = vpack.c.b16 %v943, %v942
  %v1091 = vpack.c.b16 %v945, %v944
  %v1092 = vpack.c.b16 %v947, %v946
  %v1093 = vpack.c.b16 %v949, %v948
  %v1094 = vpack.c.b16 %v951, %v950
  %v1095 = vpack.c.b16 %v953, %v952
  %v1096 = vpack.c.b16 %v955, %v954
  %v1097 = vpack.c.b16 %v957, %v956
  %v1098 = vpack.c.b16 %v959, %v958
  %v1099 = vpack.c.b16 %v961, %v960
  %v1100 = vpack.c.b16 %v963, %v962
  %v1101 = vpack.c.b16 %v965, %v964
  %v1102 = vpack.c.b16 %v967, %v966
  %v1103 = vpack.c.b16 %v969, %v968
  %v1104 = vpack.c.b16 %v971, %v970
  %v1105 = vpack.c.b16 %v973, %v972
  %v1106 = vpack.c.b16 %v975, %v974
  %v1107 = vpack.c.b16 %v977, %v976
  %v1108 = vpack.c.b16 %v979, %v978
  %v1109 = vpack.c.b16 %v981, %v980
  %v1110 = vpack.c.b16 %v983, %v982
  %v1111 = vpack.c.b16 %v985, %v984
  %v1112 = vpack.c.b16 %v987, %v986
  %v1113 = vpack.c.b16 %v989, %v988
  %v1114 = vpack.c.b16 %v991, %v990
  %v1115 = vpack.c.b16 %v993, %v992
  %v1116 = vpack.c.b16 %v995, %v994
  %v1117 = vpack.c.b16 %v997, %v996
  %v1118 = vpack.c.b16 %v999, %v998
  %v1119 = vpack.c.b16 %v1001, %v1000
  %v1120 = vpack.c.b16 %v1003, %v1002
  %v1121 = vpack.c.b16 %v1005, %v1004
  %v1122 = vpack.c.b16 %v1007, %v1006
  %v1123 = vpack.c.b16 %v1009, %v1008
  %v1124 = vpack.c.b16 %v1011, %v1010
  %v1125 = vpack.c.b16 %v1013, %v1012
  %v1126 = vpack.c.b16 %v1015, %v1014
  %v1127 = vpack.c.b16 %v1017, %v1016
  %v1128 = vpack.c.b16 %v1019, %v1018
  %v1129 = vpack.c.b16 %v1021, %v1020
  %v1130 = vpack.c.b16 %v1023, %v1022
  %v1131 = vpack.c.b16 %v1025, %v1024
  %v1132 = vpack.c.b16 %v1027, %v1026
  %v1133 = vpack.c.b16 %v1029, %v1028
  %v1134 = vpack.c.b16 %v1031, %v1030
  %v1135 = vpack.c.b16 %v1033, %v1032
  %v1136 = vpack.c.b16 %v1035, %v1034
  %v1137 = vpack.c.b16 %v1037, %v1036
  %vm1238 = vcmask 523264
  %v1240 = vsel %vm1238, %v300, 0
  %v1243 = vsel %vm1238, %v313, 0
  %v1246 = vsel %vm1238, %v326, 0
  %v1249 = vsel %vm1238, %v339, 0
  %v1252 = vsel %vm1238, %v352, 0
  %v1255 = vsel %vm1238, %v365, 0
  %v1258 = vsel %vm1238, %v378, 0
  %v1261 = vsel %vm1238, %v391, 0
  %v1264 = vsel %vm1238, %v404, 0
  %v1267 = vsel %vm1238, %v417, 0
  %v1270 = vsel %vm1238, %v430, 0
  %1272 = vmatprep.subr.bf16.mxu0 0
  %1273 = vmatpush1.bf16.msra.mxu0 %v1038
  %1274 = vmatprep.subr.bf16.mxu0 0
  %1275 = vmatpush1.bf16.msra.mxu0 %v1039
  %1276 = vmatprep.subr.bf16.mxu0 0
  %1277 = vmatpush1.bf16.msra.mxu0 %v1040
  %1278 = vmatprep.subr.bf16.mxu0 0
  %1279 = vmatpush1.bf16.msra.mxu0 %v1041
  %1280 = vmatprep.subr.bf16.mxu0 0
  %1281 = vmatpush1.bf16.msra.mxu0 %v1042
  %1282 = vmatprep.subr.bf16.mxu0 0
  %1283 = vmatpush1.bf16.msra.mxu0 %v1043
  %1284 = vmatprep.subr.bf16.mxu0 0
  %1285 = vmatpush1.bf16.msra.mxu0 %v1044
  %1286 = vmatprep.subr.bf16.mxu0 0
  %1287 = vmatpush1.bf16.msra.mxu0 %v1045
  %1288 = vmatprep.subr.bf16.mxu0 0
  %1289 = vmatpush1.bf16.msra.mxu0 %v1046
  %1290 = vmatprep.subr.bf16.mxu0 0
  %1291 = vmatpush1.bf16.msra.mxu0 %v1047
  %1292 = vmatprep.subr.bf16.mxu0 0
  %1293 = vmatpush1.bf16.msra.mxu0 %v1048
  %1294 = vmatprep.subr.bf16.mxu0 0
  %1295 = vmatpush1.bf16.msra.mxu0 %v1049
  %1296 = vmatprep.subr.bf16.mxu0 0
  %1297 = vmatpush1.bf16.msra.mxu0 %v1050
  %1298 = vmatprep.subr.bf16.mxu0 0
  %1299 = vmatpush1.bf16.msra.mxu0 %v1051
  %1300 = vmatprep.subr.bf16.mxu0 0
  %1301 = vmatpush1.bf16.msra.mxu0 %v1052
  %1302 = vmatprep.subr.bf16.mxu0 0
  %1303 = vmatpush1.bf16.msra.mxu0 %v1053
  %1304 = vmatprep.mubr.bf16.mxu0 %v289
  %1305 = vmatmul.mubr.bf16.gmra.mrb[0].mxu0 %v288
  %v1306 = vpop.f32.mrb[0].mxu0
  %v1307 = vadd.f32 %v636, %v1306
  %v1308 = vpop.f32.mrb[0].mxu0
  %v1309 = vpop.f32.mrb[0].mxu0
  %v1310 = vadd.f32 %v636, %v1309
  %v1311 = vpop.f32.mrb[0].mxu0
  %1312 = vmatprep.mubr.bf16.mxu0 %v302
  %1313 = vmatmul.mubr.bf16.gmra.mrb[0].mxu0 %v301
  %v1314 = vpop.f32.mrb[0].mxu0
  %v1315 = vadd.f32 %v636, %v1314
  %v1316 = vpop.f32.mrb[0].mxu0
  %v1317 = vpop.f32.mrb[0].mxu0
  %v1318 = vadd.f32 %v636, %v1317
  %v1319 = vpop.f32.mrb[0].mxu0
  %1320 = vmatprep.mubr.bf16.mxu0 %v315
  %1321 = vmatmul.mubr.bf16.gmra.mrb[0].mxu0 %v314
  %v1322 = vpop.f32.mrb[0].mxu0
  %v1323 = vadd.f32 %v636, %v1322
  %v1324 = vpop.f32.mrb[0].mxu0
  %v1325 = vpop.f32.mrb[0].mxu0
  %v1326 = vadd.f32 %v636, %v1325
  %v1327 = vpop.f32.mrb[0].mxu0
  %1328 = vmatprep.mubr.bf16.mxu0 %v328
  %1329 = vmatmul.mubr.bf16.gmra.mrb[0].mxu0 %v327
  %v1330 = vpop.f32.mrb[0].mxu0
  %v1331 = vadd.f32 %v636, %v1330
  %v1332 = vpop.f32.mrb[0].mxu0
  %v1333 = vpop.f32.mrb[0].mxu0
  %v1334 = vadd.f32 %v636, %v1333
  %v1335 = vpop.f32.mrb[0].mxu0
  %1336 = vmatprep.mubr.bf16.mxu0 %v341
  %1337 = vmatmul.mubr.bf16.gmra.mrb[0].mxu0 %v340
  %v1338 = vpop.f32.mrb[0].mxu0
  %v1339 = vadd.f32 %v636, %v1338
  %v1340 = vpop.f32.mrb[0].mxu0
  %v1341 = vpop.f32.mrb[0].mxu0
  %v1342 = vadd.f32 %v636, %v1341
  %v1343 = vpop.f32.mrb[0].mxu0
  %1344 = vmatprep.mubr.bf16.mxu0 %v354
  %1345 = vmatmul.mubr.bf16.gmra.mrb[0].mxu0 %v353
  %v1346 = vpop.f32.mrb[0].mxu0
  %v1347 = vadd.f32 %v636, %v1346
  %v1348 = vpop.f32.mrb[0].mxu0
  %v1349 = vpop.f32.mrb[0].mxu0
  %v1350 = vadd.f32 %v636, %v1349
  %v1351 = vpop.f32.mrb[0].mxu0
  %1352 = vmatprep.mubr.bf16.mxu0 %v367
  %1353 = vmatmul.mubr.bf16.gmra.mrb[0].mxu0 %v366
  %v1354 = vpop.f32.mrb[0].mxu0
  %v1355 = vadd.f32 %v636, %v1354
  %v1356 = vpop.f32.mrb[0].mxu0
  %v1357 = vpop.f32.mrb[0].mxu0
  %v1358 = vadd.f32 %v636, %v1357
  %v1359 = vpop.f32.mrb[0].mxu0
  %1360 = vmatprep.mubr.bf16.mxu0 %v380
  %1361 = vmatmul.mubr.bf16.gmra.mrb[0].mxu0 %v379
  %v1362 = vpop.f32.mrb[0].mxu0
  %v1363 = vadd.f32 %v636, %v1362
  %v1364 = vpop.f32.mrb[0].mxu0
  %v1365 = vpop.f32.mrb[0].mxu0
  %v1366 = vadd.f32 %v636, %v1365
  %v1367 = vpop.f32.mrb[0].mxu0
  %1368 = vmatprep.mubr.bf16.mxu0 %v393
  %1369 = vmatmul.mubr.bf16.gmra.mrb[0].mxu0 %v392
  %v1370 = vpop.f32.mrb[0].mxu0
  %v1371 = vadd.f32 %v636, %v1370
  %v1372 = vpop.f32.mrb[0].mxu0
  %v1373 = vpop.f32.mrb[0].mxu0
  %v1374 = vadd.f32 %v636, %v1373
  %v1375 = vpop.f32.mrb[0].mxu0
  %1376 = vmatprep.mubr.bf16.mxu0 %v406
  %1377 = vmatmul.mubr.bf16.gmra.mrb[0].mxu0 %v405
  %v1378 = vpop.f32.mrb[0].mxu0
  %v1379 = vadd.f32 %v636, %v1378
  %v1380 = vpop.f32.mrb[0].mxu0
  %v1381 = vpop.f32.mrb[0].mxu0
  %v1382 = vadd.f32 %v636, %v1381
  %v1383 = vpop.f32.mrb[0].mxu0
  %1384 = vmatprep.mubr.bf16.mxu0 %v419
  %1385 = vmatmul.mubr.bf16.gmra.mrb[0].mxu0 %v418
  %v1386 = vpop.f32.mrb[0].mxu0
  %v1387 = vadd.f32 %v636, %v1386
  %v1388 = vpop.f32.mrb[0].mxu0
  %v1389 = vpop.f32.mrb[0].mxu0
  %v1390 = vpop.f32.mrb[0].mxu0
  %1391 = vdwg.mxu0
  %1392 = vmatprep.subr.bf16.mxu0 0
  %1393 = vmatpush1.bf16.msra.mxu0 %v1054
  %1394 = vmatprep.subr.bf16.mxu0 0
  %1395 = vmatpush1.bf16.msra.mxu0 %v1055
  %1396 = vmatprep.subr.bf16.mxu0 0
  %1397 = vmatpush1.bf16.msra.mxu0 %v1056
  %1398 = vmatprep.subr.bf16.mxu0 0
  %1399 = vmatpush1.bf16.msra.mxu0 %v1057
  %1400 = vmatprep.subr.bf16.mxu0 0
  %1401 = vmatpush1.bf16.msra.mxu0 %v1058
  %1402 = vmatprep.subr.bf16.mxu0 0
  %1403 = vmatpush1.bf16.msra.mxu0 %v1059
  %1404 = vmatprep.subr.bf16.mxu0 0
  %1405 = vmatpush1.bf16.msra.mxu0 %v1060
  %1406 = vmatprep.subr.bf16.mxu0 0
  %1407 = vmatpush1.bf16.msra.mxu0 %v1061
  %1408 = vmatprep.subr.bf16.mxu0 0
  %1409 = vmatpush1.bf16.msra.mxu0 %v1062
  %1410 = vmatprep.subr.bf16.mxu0 0
  %1411 = vmatpush1.bf16.msra.mxu0 %v1063
  %1412 = vmatprep.subr.bf16.mxu0 0
  %1413 = vmatpush1.bf16.msra.mxu0 %v1064
  %1414 = vmatprep.subr.bf16.mxu0 0
  %1415 = vmatpush1.bf16.msra.mxu0 %v1065
  %1416 = vmatprep.subr.bf16.mxu0 0
  %1417 = vmatpush1.bf16.msra.mxu0 %v1066
  %1418 = vmatprep.subr.bf16.mxu0 0
  %1419 = vmatpush1.bf16.msra.mxu0 %v1067
  %1420 = vmatprep.subr.bf16.mxu0 0
  %1421 = vmatpush1.bf16.msra.mxu0 %v1068
  %1422 = vmatprep.subr.bf16.mxu0 0
  %1423 = vmatpush1.bf16.msra.mxu0 %v1069
  %1424 = vmatprep.mubr.bf16.mxu0 %v291
  %1425 = vmatmul.mubr.bf16.gmra.mrb[0].mxu0 %v290
  %v1426 = vpop.f32.mrb[0].mxu0
  %v1427 = vadd.f32 %v1307, %v1426
  %v1428 = vpop.f32.mrb[0].mxu0
  %v1429 = vpop.f32.mrb[0].mxu0
  %v1430 = vadd.f32 %v1310, %v1429
  %v1431 = vpop.f32.mrb[0].mxu0
  %1432 = vmatprep.mubr.bf16.mxu0 %v304
  %1433 = vmatmul.mubr.bf16.gmra.mrb[0].mxu0 %v303
  %v1434 = vpop.f32.mrb[0].mxu0
  %v1435 = vadd.f32 %v1315, %v1434
  %v1436 = vpop.f32.mrb[0].mxu0
  %v1437 = vpop.f32.mrb[0].mxu0
  %v1438 = vadd.f32 %v1318, %v1437
  %v1439 = vpop.f32.mrb[0].mxu0
  %1440 = vmatprep.mubr.bf16.mxu0 %v317
  %1441 = vmatmul.mubr.bf16.gmra.mrb[0].mxu0 %v316
  %v1442 = vpop.f32.mrb[0].mxu0
  %v1443 = vadd.f32 %v1323, %v1442
  %v1444 = vpop.f32.mrb[0].mxu0
  %v1445 = vpop.f32.mrb[0].mxu0
  %v1446 = vadd.f32 %v1326, %v1445
  %v1447 = vpop.f32.mrb[0].mxu0
  %1448 = vmatprep.mubr.bf16.mxu0 %v330
  %1449 = vmatmul.mubr.bf16.gmra.mrb[0].mxu0 %v329
  %v1450 = vpop.f32.mrb[0].mxu0
  %v1451 = vadd.f32 %v1331, %v1450
  %v1452 = vpop.f32.mrb[0].mxu0
  %v1453 = vpop.f32.mrb[0].mxu0
  %v1454 = vadd.f32 %v1334, %v1453
  %v1455 = vpop.f32.mrb[0].mxu0
  %1456 = vmatprep.mubr.bf16.mxu0 %v343
  %1457 = vmatmul.mubr.bf16.gmra.mrb[0].mxu0 %v342
  %v1458 = vpop.f32.mrb[0].mxu0
  %v1459 = vadd.f32 %v1339, %v1458
  %v1460 = vpop.f32.mrb[0].mxu0
  %v1461 = vpop.f32.mrb[0].mxu0
  %v1462 = vadd.f32 %v1342, %v1461
  %v1463 = vpop.f32.mrb[0].mxu0
  %1464 = vmatprep.mubr.bf16.mxu0 %v356
  %1465 = vmatmul.mubr.bf16.gmra.mrb[0].mxu0 %v355
  %v1466 = vpop.f32.mrb[0].mxu0
  %v1467 = vadd.f32 %v1347, %v1466
  %v1468 = vpop.f32.mrb[0].mxu0
  %v1469 = vpop.f32.mrb[0].mxu0
  %v1470 = vadd.f32 %v1350, %v1469
  %v1471 = vpop.f32.mrb[0].mxu0
  %1472 = vmatprep.mubr.bf16.mxu0 %v369
  %1473 = vmatmul.mubr.bf16.gmra.mrb[0].mxu0 %v368
  %v1474 = vpop.f32.mrb[0].mxu0
  %v1475 = vadd.f32 %v1355, %v1474
  %v1476 = vpop.f32.mrb[0].mxu0
  %v1477 = vpop.f32.mrb[0].mxu0
  %v1478 = vadd.f32 %v1358, %v1477
  %v1479 = vpop.f32.mrb[0].mxu0
  %1480 = vmatprep.mubr.bf16.mxu0 %v382
  %1481 = vmatmul.mubr.bf16.gmra.mrb[0].mxu0 %v381
  %v1482 = vpop.f32.mrb[0].mxu0
  %v1483 = vadd.f32 %v1363, %v1482
  %v1484 = vpop.f32.mrb[0].mxu0
  %v1485 = vpop.f32.mrb[0].mxu0
  %v1486 = vadd.f32 %v1366, %v1485
  %v1487 = vpop.f32.mrb[0].mxu0
  %1488 = vmatprep.mubr.bf16.mxu0 %v395
  %1489 = vmatmul.mubr.bf16.gmra.mrb[0].mxu0 %v394
  %v1490 = vpop.f32.mrb[0].mxu0
  %v1491 = vadd.f32 %v1371, %v1490
  %v1492 = vpop.f32.mrb[0].mxu0
  %v1493 = vpop.f32.mrb[0].mxu0
  %v1494 = vadd.f32 %v1374, %v1493
  %v1495 = vpop.f32.mrb[0].mxu0
  %1496 = vmatprep.mubr.bf16.mxu0 %v408
  %1497 = vmatmul.mubr.bf16.gmra.mrb[0].mxu0 %v407
  %v1498 = vpop.f32.mrb[0].mxu0
  %v1499 = vadd.f32 %v1379, %v1498
  %v1500 = vpop.f32.mrb[0].mxu0
  %v1501 = vpop.f32.mrb[0].mxu0
  %v1502 = vadd.f32 %v1382, %v1501
  %v1503 = vpop.f32.mrb[0].mxu0
  %1504 = vmatprep.mubr.bf16.mxu0 %v421
  %1505 = vmatmul.mubr.bf16.gmra.mrb[0].mxu0 %v420
  %v1506 = vpop.f32.mrb[0].mxu0
  %v1507 = vadd.f32 %v1387, %v1506
  %v1508 = vpop.f32.mrb[0].mxu0
  %v1509 = vpop.f32.mrb[0].mxu0
  %v1510 = vpop.f32.mrb[0].mxu0
  %1511 = vdwg.mxu0
  %1512 = vmatprep.subr.bf16.mxu0 0
  %1513 = vmatpush1.bf16.msra.mxu0 %v1070
  %1514 = vmatprep.subr.bf16.mxu0 0
  %1515 = vmatpush1.bf16.msra.mxu0 %v1071
  %1516 = vmatprep.subr.bf16.mxu0 0
  %1517 = vmatpush1.bf16.msra.mxu0 %v1072
  %1518 = vmatprep.subr.bf16.mxu0 0
  %1519 = vmatpush1.bf16.msra.mxu0 %v1073
  %1520 = vmatprep.subr.bf16.mxu0 0
  %1521 = vmatpush1.bf16.msra.mxu0 %v1074
  %1522 = vmatprep.subr.bf16.mxu0 0
  %1523 = vmatpush1.bf16.msra.mxu0 %v1075
  %1524 = vmatprep.subr.bf16.mxu0 0
  %1525 = vmatpush1.bf16.msra.mxu0 %v1076
  %1526 = vmatprep.subr.bf16.mxu0 0
  %1527 = vmatpush1.bf16.msra.mxu0 %v1077
  %1528 = vmatprep.subr.bf16.mxu0 0
  %1529 = vmatpush1.bf16.msra.mxu0 %v1078
  %1530 = vmatprep.subr.bf16.mxu0 0
  %1531 = vmatpush1.bf16.msra.mxu0 %v1079
  %1532 = vmatprep.subr.bf16.mxu0 0
  %1533 = vmatpush1.bf16.msra.mxu0 %v1080
  %1534 = vmatprep.subr.bf16.mxu0 0
  %1535 = vmatpush1.bf16.msra.mxu0 %v1081
  %1536 = vmatprep.subr.bf16.mxu0 0
  %1537 = vmatpush1.bf16.msra.mxu0 %v1082
  %1538 = vmatprep.subr.bf16.mxu0 0
  %1539 = vmatpush1.bf16.msra.mxu0 %v1083
  %1540 = vmatprep.subr.bf16.mxu0 0
  %1541 = vmatpush1.bf16.msra.mxu0 %v1084
  %1542 = vmatprep.subr.bf16.mxu0 0
  %1543 = vmatpush1.bf16.msra.mxu0 %v1085
  %1544 = vmatprep.mubr.bf16.mxu0 %v293
  %1545 = vmatmul.mubr.bf16.gmra.mrb[0].mxu0 %v292
  %v1546 = vpop.f32.mrb[0].mxu0
  %v1547 = vadd.f32 %v1427, %v1546
  %v1548 = vpop.f32.mrb[0].mxu0
  %v1549 = vpop.f32.mrb[0].mxu0
  %v1550 = vadd.f32 %v1430, %v1549
  %v1551 = vpop.f32.mrb[0].mxu0
  %1552 = vmatprep.mubr.bf16.mxu0 %v306
  %1553 = vmatmul.mubr.bf16.gmra.mrb[0].mxu0 %v305
  %v1554 = vpop.f32.mrb[0].mxu0
  %v1555 = vadd.f32 %v1435, %v1554
  %v1556 = vpop.f32.mrb[0].mxu0
  %v1557 = vpop.f32.mrb[0].mxu0
  %v1558 = vadd.f32 %v1438, %v1557
  %v1559 = vpop.f32.mrb[0].mxu0
  %1560 = vmatprep.mubr.bf16.mxu0 %v319
  %1561 = vmatmul.mubr.bf16.gmra.mrb[0].mxu0 %v318
  %v1562 = vpop.f32.mrb[0].mxu0
  %v1563 = vadd.f32 %v1443, %v1562
  %v1564 = vpop.f32.mrb[0].mxu0
  %v1565 = vpop.f32.mrb[0].mxu0
  %v1566 = vadd.f32 %v1446, %v1565
  %v1567 = vpop.f32.mrb[0].mxu0
  %1568 = vmatprep.mubr.bf16.mxu0 %v332
  %1569 = vmatmul.mubr.bf16.gmra.mrb[0].mxu0 %v331
  %v1570 = vpop.f32.mrb[0].mxu0
  %v1571 = vadd.f32 %v1451, %v1570
  %v1572 = vpop.f32.mrb[0].mxu0
  %v1573 = vpop.f32.mrb[0].mxu0
  %v1574 = vadd.f32 %v1454, %v1573
  %v1575 = vpop.f32.mrb[0].mxu0
  %1576 = vmatprep.mubr.bf16.mxu0 %v345
  %1577 = vmatmul.mubr.bf16.gmra.mrb[0].mxu0 %v344
  %v1578 = vpop.f32.mrb[0].mxu0
  %v1579 = vadd.f32 %v1459, %v1578
  %v1580 = vpop.f32.mrb[0].mxu0
  %v1581 = vpop.f32.mrb[0].mxu0
  %v1582 = vadd.f32 %v1462, %v1581
  %v1583 = vpop.f32.mrb[0].mxu0
  %1584 = vmatprep.mubr.bf16.mxu0 %v358
  %1585 = vmatmul.mubr.bf16.gmra.mrb[0].mxu0 %v357
  %v1586 = vpop.f32.mrb[0].mxu0
  %v1587 = vadd.f32 %v1467, %v1586
  %v1588 = vpop.f32.mrb[0].mxu0
  %v1589 = vpop.f32.mrb[0].mxu0
  %v1590 = vadd.f32 %v1470, %v1589
  %v1591 = vpop.f32.mrb[0].mxu0
  %1592 = vmatprep.mubr.bf16.mxu0 %v371
  %1593 = vmatmul.mubr.bf16.gmra.mrb[0].mxu0 %v370
  %v1594 = vpop.f32.mrb[0].mxu0
  %v1595 = vadd.f32 %v1475, %v1594
  %v1596 = vpop.f32.mrb[0].mxu0
  %v1597 = vpop.f32.mrb[0].mxu0
  %v1598 = vadd.f32 %v1478, %v1597
  %v1599 = vpop.f32.mrb[0].mxu0
  %1600 = vmatprep.mubr.bf16.mxu0 %v384
  %1601 = vmatmul.mubr.bf16.gmra.mrb[0].mxu0 %v383
  %v1602 = vpop.f32.mrb[0].mxu0
  %v1603 = vadd.f32 %v1483, %v1602
  %v1604 = vpop.f32.mrb[0].mxu0
  %v1605 = vpop.f32.mrb[0].mxu0
  %v1606 = vadd.f32 %v1486, %v1605
  %v1607 = vpop.f32.mrb[0].mxu0
  %1608 = vmatprep.mubr.bf16.mxu0 %v397
  %1609 = vmatmul.mubr.bf16.gmra.mrb[0].mxu0 %v396
  %v1610 = vpop.f32.mrb[0].mxu0
  %v1611 = vadd.f32 %v1491, %v1610
  %v1612 = vpop.f32.mrb[0].mxu0
  %v1613 = vpop.f32.mrb[0].mxu0
  %v1614 = vadd.f32 %v1494, %v1613
  %v1615 = vpop.f32.mrb[0].mxu0
  %1616 = vmatprep.mubr.bf16.mxu0 %v410
  %1617 = vmatmul.mubr.bf16.gmra.mrb[0].mxu0 %v409
  %v1618 = vpop.f32.mrb[0].mxu0
  %v1619 = vadd.f32 %v1499, %v1618
  %v1620 = vpop.f32.mrb[0].mxu0
  %v1621 = vpop.f32.mrb[0].mxu0
  %v1622 = vadd.f32 %v1502, %v1621
  %v1623 = vpop.f32.mrb[0].mxu0
  %1624 = vmatprep.mubr.bf16.mxu0 %v423
  %1625 = vmatmul.mubr.bf16.gmra.mrb[0].mxu0 %v422
  %v1626 = vpop.f32.mrb[0].mxu0
  %v1627 = vadd.f32 %v1507, %v1626
  %v1628 = vpop.f32.mrb[0].mxu0
  %v1629 = vpop.f32.mrb[0].mxu0
  %v1630 = vpop.f32.mrb[0].mxu0
  %1631 = vdwg.mxu0
  %1632 = vmatprep.subr.bf16.mxu0 0
  %1633 = vmatpush1.bf16.msra.mxu0 %v1086
  %1634 = vmatprep.subr.bf16.mxu0 0
  %1635 = vmatpush1.bf16.msra.mxu0 %v1087
  %1636 = vmatprep.subr.bf16.mxu0 0
  %1637 = vmatpush1.bf16.msra.mxu0 %v1088
  %1638 = vmatprep.subr.bf16.mxu0 0
  %1639 = vmatpush1.bf16.msra.mxu0 %v1089
  %1640 = vmatprep.subr.bf16.mxu0 0
  %1641 = vmatpush1.bf16.msra.mxu0 %v1090
  %1642 = vmatprep.subr.bf16.mxu0 0
  %1643 = vmatpush1.bf16.msra.mxu0 %v1091
  %1644 = vmatprep.subr.bf16.mxu0 0
  %1645 = vmatpush1.bf16.msra.mxu0 %v1092
  %1646 = vmatprep.subr.bf16.mxu0 0
  %1647 = vmatpush1.bf16.msra.mxu0 %v1093
  %1648 = vmatprep.subr.bf16.mxu0 0
  %1649 = vmatpush1.bf16.msra.mxu0 %v1094
  %1650 = vmatprep.subr.bf16.mxu0 0
  %1651 = vmatpush1.bf16.msra.mxu0 %v1095
  %1652 = vmatprep.subr.bf16.mxu0 0
  %1653 = vmatpush1.bf16.msra.mxu0 %v1096
  %1654 = vmatprep.subr.bf16.mxu0 0
  %1655 = vmatpush1.bf16.msra.mxu0 %v1097
  %1656 = vmatprep.subr.bf16.mxu0 0
  %1657 = vmatpush1.bf16.msra.mxu0 %v1098
  %1658 = vmatprep.subr.bf16.mxu0 0
  %1659 = vmatpush1.bf16.msra.mxu0 %v1099
  %1660 = vmatprep.subr.bf16.mxu0 0
  %1661 = vmatpush1.bf16.msra.mxu0 %v1100
  %1662 = vmatprep.subr.bf16.mxu0 0
  %1663 = vmatpush1.bf16.msra.mxu0 %v1101
  %1664 = vmatprep.mubr.bf16.mxu0 %v295
  %1665 = vmatmul.mubr.bf16.gmra.mrb[0].mxu0 %v294
  %v1666 = vpop.f32.mrb[0].mxu0
  %v1667 = vadd.f32 %v1547, %v1666
  %v1668 = vpop.f32.mrb[0].mxu0
  %v1669 = vpop.f32.mrb[0].mxu0
  %v1670 = vadd.f32 %v1550, %v1669
  %v1671 = vpop.f32.mrb[0].mxu0
  %1672 = vmatprep.mubr.bf16.mxu0 %v308
  %1673 = vmatmul.mubr.bf16.gmra.mrb[0].mxu0 %v307
  %v1674 = vpop.f32.mrb[0].mxu0
  %v1675 = vadd.f32 %v1555, %v1674
  %v1676 = vpop.f32.mrb[0].mxu0
  %v1677 = vpop.f32.mrb[0].mxu0
  %v1678 = vadd.f32 %v1558, %v1677
  %v1679 = vpop.f32.mrb[0].mxu0
  %1680 = vmatprep.mubr.bf16.mxu0 %v321
  %1681 = vmatmul.mubr.bf16.gmra.mrb[0].mxu0 %v320
  %v1682 = vpop.f32.mrb[0].mxu0
  %v1683 = vadd.f32 %v1563, %v1682
  %v1684 = vpop.f32.mrb[0].mxu0
  %v1685 = vpop.f32.mrb[0].mxu0
  %v1686 = vadd.f32 %v1566, %v1685
  %v1687 = vpop.f32.mrb[0].mxu0
  %1688 = vmatprep.mubr.bf16.mxu0 %v334
  %1689 = vmatmul.mubr.bf16.gmra.mrb[0].mxu0 %v333
  %v1690 = vpop.f32.mrb[0].mxu0
  %v1691 = vadd.f32 %v1571, %v1690
  %v1692 = vpop.f32.mrb[0].mxu0
  %v1693 = vpop.f32.mrb[0].mxu0
  %v1694 = vadd.f32 %v1574, %v1693
  %v1695 = vpop.f32.mrb[0].mxu0
  %1696 = vmatprep.mubr.bf16.mxu0 %v347
  %1697 = vmatmul.mubr.bf16.gmra.mrb[0].mxu0 %v346
  %v1698 = vpop.f32.mrb[0].mxu0
  %v1699 = vadd.f32 %v1579, %v1698
  %v1700 = vpop.f32.mrb[0].mxu0
  %v1701 = vpop.f32.mrb[0].mxu0
  %v1702 = vadd.f32 %v1582, %v1701
  %v1703 = vpop.f32.mrb[0].mxu0
  %1704 = vmatprep.mubr.bf16.mxu0 %v360
  %1705 = vmatmul.mubr.bf16.gmra.mrb[0].mxu0 %v359
  %v1706 = vpop.f32.mrb[0].mxu0
  %v1707 = vadd.f32 %v1587, %v1706
  %v1708 = vpop.f32.mrb[0].mxu0
  %v1709 = vpop.f32.mrb[0].mxu0
  %v1710 = vadd.f32 %v1590, %v1709
  %v1711 = vpop.f32.mrb[0].mxu0
  %1712 = vmatprep.mubr.bf16.mxu0 %v373
  %1713 = vmatmul.mubr.bf16.gmra.mrb[0].mxu0 %v372
  %v1714 = vpop.f32.mrb[0].mxu0
  %v1715 = vadd.f32 %v1595, %v1714
  %v1716 = vpop.f32.mrb[0].mxu0
  %v1717 = vpop.f32.mrb[0].mxu0
  %v1718 = vadd.f32 %v1598, %v1717
  %v1719 = vpop.f32.mrb[0].mxu0
  %1720 = vmatprep.mubr.bf16.mxu0 %v386
  %1721 = vmatmul.mubr.bf16.gmra.mrb[0].mxu0 %v385
  %v1722 = vpop.f32.mrb[0].mxu0
  %v1723 = vadd.f32 %v1603, %v1722
  %v1724 = vpop.f32.mrb[0].mxu0
  %v1725 = vpop.f32.mrb[0].mxu0
  %v1726 = vadd.f32 %v1606, %v1725
  %v1727 = vpop.f32.mrb[0].mxu0
  %1728 = vmatprep.mubr.bf16.mxu0 %v399
  %1729 = vmatmul.mubr.bf16.gmra.mrb[0].mxu0 %v398
  %v1730 = vpop.f32.mrb[0].mxu0
  %v1731 = vadd.f32 %v1611, %v1730
  %v1732 = vpop.f32.mrb[0].mxu0
  %v1733 = vpop.f32.mrb[0].mxu0
  %v1734 = vadd.f32 %v1614, %v1733
  %v1735 = vpop.f32.mrb[0].mxu0
  %1736 = vmatprep.mubr.bf16.mxu0 %v412
  %1737 = vmatmul.mubr.bf16.gmra.mrb[0].mxu0 %v411
  %v1738 = vpop.f32.mrb[0].mxu0
  %v1739 = vadd.f32 %v1619, %v1738
  %v1740 = vpop.f32.mrb[0].mxu0
  %v1741 = vpop.f32.mrb[0].mxu0
  %v1742 = vadd.f32 %v1622, %v1741
  %v1743 = vpop.f32.mrb[0].mxu0
  %1744 = vmatprep.mubr.bf16.mxu0 %v425
  %1745 = vmatmul.mubr.bf16.gmra.mrb[0].mxu0 %v424
  %v1746 = vpop.f32.mrb[0].mxu0
  %v1747 = vadd.f32 %v1627, %v1746
  %v1748 = vpop.f32.mrb[0].mxu0
  %v1749 = vpop.f32.mrb[0].mxu0
  %v1750 = vpop.f32.mrb[0].mxu0
  %1751 = vdwg.mxu0
  %1752 = vmatprep.subr.bf16.mxu0 0
  %1753 = vmatpush1.bf16.msra.mxu0 %v1102
  %1754 = vmatprep.subr.bf16.mxu0 0
  %1755 = vmatpush1.bf16.msra.mxu0 %v1103
  %1756 = vmatprep.subr.bf16.mxu0 0
  %1757 = vmatpush1.bf16.msra.mxu0 %v1104
  %1758 = vmatprep.subr.bf16.mxu0 0
  %1759 = vmatpush1.bf16.msra.mxu0 %v1105
  %1760 = vmatprep.subr.bf16.mxu0 0
  %1761 = vmatpush1.bf16.msra.mxu0 %v1106
  %1762 = vmatprep.subr.bf16.mxu0 0
  %1763 = vmatpush1.bf16.msra.mxu0 %v1107
  %1764 = vmatprep.subr.bf16.mxu0 0
  %1765 = vmatpush1.bf16.msra.mxu0 %v1108
  %1766 = vmatprep.subr.bf16.mxu0 0
  %1767 = vmatpush1.bf16.msra.mxu0 %v1109
  %1768 = vmatprep.subr.bf16.mxu0 0
  %1769 = vmatpush1.bf16.msra.mxu0 %v1110
  %1770 = vmatprep.subr.bf16.mxu0 0
  %1771 = vmatpush1.bf16.msra.mxu0 %v1111
  %1772 = vmatprep.subr.bf16.mxu0 0
  %1773 = vmatpush1.bf16.msra.mxu0 %v1112
  %1774 = vmatprep.subr.bf16.mxu0 0
  %1775 = vmatpush1.bf16.msra.mxu0 %v1113
  %1776 = vmatprep.subr.bf16.mxu0 0
  %1777 = vmatpush1.bf16.msra.mxu0 %v1114
  %1778 = vmatprep.subr.bf16.mxu0 0
  %1779 = vmatpush1.bf16.msra.mxu0 %v1115
  %1780 = vmatprep.subr.bf16.mxu0 0
  %1781 = vmatpush1.bf16.msra.mxu0 %v1116
  %1782 = vmatprep.subr.bf16.mxu0 0
  %1783 = vmatpush1.bf16.msra.mxu0 %v1117
  %1784 = vmatprep.mubr.bf16.mxu0 %v297
  %1785 = vmatmul.mubr.bf16.gmra.mrb[0].mxu0 %v296
  %v1786 = vpop.f32.mrb[0].mxu0
  %v1787 = vadd.f32 %v1667, %v1786
  %v1788 = vpop.f32.mrb[0].mxu0
  %v1789 = vpop.f32.mrb[0].mxu0
  %v1790 = vadd.f32 %v1670, %v1789
  %v1791 = vpop.f32.mrb[0].mxu0
  %1792 = vmatprep.mubr.bf16.mxu0 %v310
  %1793 = vmatmul.mubr.bf16.gmra.mrb[0].mxu0 %v309
  %v1794 = vpop.f32.mrb[0].mxu0
  %v1795 = vadd.f32 %v1675, %v1794
  %v1796 = vpop.f32.mrb[0].mxu0
  %v1797 = vpop.f32.mrb[0].mxu0
  %v1798 = vadd.f32 %v1678, %v1797
  %v1799 = vpop.f32.mrb[0].mxu0
  %1800 = vmatprep.mubr.bf16.mxu0 %v323
  %1801 = vmatmul.mubr.bf16.gmra.mrb[0].mxu0 %v322
  %v1802 = vpop.f32.mrb[0].mxu0
  %v1803 = vadd.f32 %v1683, %v1802
  %v1804 = vpop.f32.mrb[0].mxu0
  %v1805 = vpop.f32.mrb[0].mxu0
  %v1806 = vadd.f32 %v1686, %v1805
  %v1807 = vpop.f32.mrb[0].mxu0
  %1808 = vmatprep.mubr.bf16.mxu0 %v336
  %1809 = vmatmul.mubr.bf16.gmra.mrb[0].mxu0 %v335
  %v1810 = vpop.f32.mrb[0].mxu0
  %v1811 = vadd.f32 %v1691, %v1810
  %v1812 = vpop.f32.mrb[0].mxu0
  %v1813 = vpop.f32.mrb[0].mxu0
  %v1814 = vadd.f32 %v1694, %v1813
  %v1815 = vpop.f32.mrb[0].mxu0
  %1816 = vmatprep.mubr.bf16.mxu0 %v349
  %1817 = vmatmul.mubr.bf16.gmra.mrb[0].mxu0 %v348
  %v1818 = vpop.f32.mrb[0].mxu0
  %v1819 = vadd.f32 %v1699, %v1818
  %v1820 = vpop.f32.mrb[0].mxu0
  %v1821 = vpop.f32.mrb[0].mxu0
  %v1822 = vadd.f32 %v1702, %v1821
  %v1823 = vpop.f32.mrb[0].mxu0
  %1824 = vmatprep.mubr.bf16.mxu0 %v362
  %1825 = vmatmul.mubr.bf16.gmra.mrb[0].mxu0 %v361
  %v1826 = vpop.f32.mrb[0].mxu0
  %v1827 = vadd.f32 %v1707, %v1826
  %v1828 = vpop.f32.mrb[0].mxu0
  %v1829 = vpop.f32.mrb[0].mxu0
  %v1830 = vadd.f32 %v1710, %v1829
  %v1831 = vpop.f32.mrb[0].mxu0
  %1832 = vmatprep.mubr.bf16.mxu0 %v375
  %1833 = vmatmul.mubr.bf16.gmra.mrb[0].mxu0 %v374
  %v1834 = vpop.f32.mrb[0].mxu0
  %v1835 = vadd.f32 %v1715, %v1834
  %v1836 = vpop.f32.mrb[0].mxu0
  %v1837 = vpop.f32.mrb[0].mxu0
  %v1838 = vadd.f32 %v1718, %v1837
  %v1839 = vpop.f32.mrb[0].mxu0
  %1840 = vmatprep.mubr.bf16.mxu0 %v388
  %1841 = vmatmul.mubr.bf16.gmra.mrb[0].mxu0 %v387
  %v1842 = vpop.f32.mrb[0].mxu0
  %v1843 = vadd.f32 %v1723, %v1842
  %v1844 = vpop.f32.mrb[0].mxu0
  %v1845 = vpop.f32.mrb[0].mxu0
  %v1846 = vadd.f32 %v1726, %v1845
  %v1847 = vpop.f32.mrb[0].mxu0
  %1848 = vmatprep.mubr.bf16.mxu0 %v401
  %1849 = vmatmul.mubr.bf16.gmra.mrb[0].mxu0 %v400
  %v1850 = vpop.f32.mrb[0].mxu0
  %v1851 = vadd.f32 %v1731, %v1850
  %v1852 = vpop.f32.mrb[0].mxu0
  %v1853 = vpop.f32.mrb[0].mxu0
  %v1854 = vadd.f32 %v1734, %v1853
  %v1855 = vpop.f32.mrb[0].mxu0
  %1856 = vmatprep.mubr.bf16.mxu0 %v414
  %1857 = vmatmul.mubr.bf16.gmra.mrb[0].mxu0 %v413
  %v1858 = vpop.f32.mrb[0].mxu0
  %v1859 = vadd.f32 %v1739, %v1858
  %v1860 = vpop.f32.mrb[0].mxu0
  %v1861 = vpop.f32.mrb[0].mxu0
  %v1862 = vadd.f32 %v1742, %v1861
  %v1863 = vpop.f32.mrb[0].mxu0
  %1864 = vmatprep.mubr.bf16.mxu0 %v427
  %1865 = vmatmul.mubr.bf16.gmra.mrb[0].mxu0 %v426
  %v1866 = vpop.f32.mrb[0].mxu0
  %v1867 = vadd.f32 %v1747, %v1866
  %v1868 = vpop.f32.mrb[0].mxu0
  %v1869 = vpop.f32.mrb[0].mxu0
  %v1870 = vpop.f32.mrb[0].mxu0
  %1871 = vdwg.mxu0
  %1872 = vmatprep.subr.bf16.mxu0 0
  %1873 = vmatpush1.bf16.msra.mxu0 %v1118
  %1874 = vmatprep.subr.bf16.mxu0 0
  %1875 = vmatpush1.bf16.msra.mxu0 %v1119
  %1876 = vmatprep.subr.bf16.mxu0 0
  %1877 = vmatpush1.bf16.msra.mxu0 %v1120
  %1878 = vmatprep.subr.bf16.mxu0 0
  %1879 = vmatpush1.bf16.msra.mxu0 %v1121
  %1880 = vmatprep.subr.bf16.mxu0 0
  %1881 = vmatpush1.bf16.msra.mxu0 %v1122
  %1882 = vmatprep.subr.bf16.mxu0 0
  %1883 = vmatpush1.bf16.msra.mxu0 %v1123
  %1884 = vmatprep.subr.bf16.mxu0 0
  %1885 = vmatpush1.bf16.msra.mxu0 %v1124
  %1886 = vmatprep.subr.bf16.mxu0 0
  %1887 = vmatpush1.bf16.msra.mxu0 %v1125
  %1888 = vmatprep.subr.bf16.mxu0 0
  %1889 = vmatpush1.bf16.msra.mxu0 %v1126
  %1890 = vmatprep.subr.bf16.mxu0 0
  %1891 = vmatpush1.bf16.msra.mxu0 %v1127
  %1892 = vmatprep.subr.bf16.mxu0 0
  %1893 = vmatpush1.bf16.msra.mxu0 %v1128
  %1894 = vmatprep.subr.bf16.mxu0 0
  %1895 = vmatpush1.bf16.msra.mxu0 %v1129
  %1896 = vmatprep.subr.bf16.mxu0 0
  %1897 = vmatpush1.bf16.msra.mxu0 %v1130
  %1898 = vmatprep.subr.bf16.mxu0 0
  %1899 = vmatpush1.bf16.msra.mxu0 %v1131
  %1900 = vmatprep.subr.bf16.mxu0 0
  %1901 = vmatpush1.bf16.msra.mxu0 %v1132
  %1902 = vmatprep.subr.bf16.mxu0 0
  %1903 = vmatpush1.bf16.msra.mxu0 %v1133
  %1904 = vmatprep.mubr.bf16.mxu0 %v299
  %1905 = vmatmul.mubr.bf16.gmra.mrb[0].mxu0 %v298
  %v1906 = vpop.f32.mrb[0].mxu0
  %v1907 = vadd.f32 %v1787, %v1906
  %v1908 = vpop.f32.mrb[0].mxu0
  %v1909 = vpop.f32.mrb[0].mxu0
  %v1910 = vadd.f32 %v1790, %v1909
  %v1911 = vpop.f32.mrb[0].mxu0
  %1912 = vmatprep.mubr.bf16.mxu0 %v312
  %1913 = vmatmul.mubr.bf16.gmra.mrb[0].mxu0 %v311
  %v1914 = vpop.f32.mrb[0].mxu0
  %v1915 = vadd.f32 %v1795, %v1914
  %v1916 = vpop.f32.mrb[0].mxu0
  %v1917 = vpop.f32.mrb[0].mxu0
  %v1918 = vadd.f32 %v1798, %v1917
  %v1919 = vpop.f32.mrb[0].mxu0
  %1920 = vmatprep.mubr.bf16.mxu0 %v325
  %1921 = vmatmul.mubr.bf16.gmra.mrb[0].mxu0 %v324
  %v1922 = vpop.f32.mrb[0].mxu0
  %v1923 = vadd.f32 %v1803, %v1922
  %v1924 = vpop.f32.mrb[0].mxu0
  %v1925 = vpop.f32.mrb[0].mxu0
  %v1926 = vadd.f32 %v1806, %v1925
  %v1927 = vpop.f32.mrb[0].mxu0
  %1928 = vmatprep.mubr.bf16.mxu0 %v338
  %1929 = vmatmul.mubr.bf16.gmra.mrb[0].mxu0 %v337
  %v1930 = vpop.f32.mrb[0].mxu0
  %v1931 = vadd.f32 %v1811, %v1930
  %v1932 = vpop.f32.mrb[0].mxu0
  %v1933 = vpop.f32.mrb[0].mxu0
  %v1934 = vadd.f32 %v1814, %v1933
  %v1935 = vpop.f32.mrb[0].mxu0
  %1936 = vmatprep.mubr.bf16.mxu0 %v351
  %1937 = vmatmul.mubr.bf16.gmra.mrb[0].mxu0 %v350
  %v1938 = vpop.f32.mrb[0].mxu0
  %v1939 = vadd.f32 %v1819, %v1938
  %v1940 = vpop.f32.mrb[0].mxu0
  %v1941 = vpop.f32.mrb[0].mxu0
  %v1942 = vadd.f32 %v1822, %v1941
  %v1943 = vpop.f32.mrb[0].mxu0
  %1944 = vmatprep.mubr.bf16.mxu0 %v364
  %1945 = vmatmul.mubr.bf16.gmra.mrb[0].mxu0 %v363
  %v1946 = vpop.f32.mrb[0].mxu0
  %v1947 = vadd.f32 %v1827, %v1946
  %v1948 = vpop.f32.mrb[0].mxu0
  %v1949 = vpop.f32.mrb[0].mxu0
  %v1950 = vadd.f32 %v1830, %v1949
  %v1951 = vpop.f32.mrb[0].mxu0
  %1952 = vmatprep.mubr.bf16.mxu0 %v377
  %1953 = vmatmul.mubr.bf16.gmra.mrb[0].mxu0 %v376
  %v1954 = vpop.f32.mrb[0].mxu0
  %v1955 = vadd.f32 %v1835, %v1954
  %v1956 = vpop.f32.mrb[0].mxu0
  %v1957 = vpop.f32.mrb[0].mxu0
  %v1958 = vadd.f32 %v1838, %v1957
  %v1959 = vpop.f32.mrb[0].mxu0
  %1960 = vmatprep.mubr.bf16.mxu0 %v390
  %1961 = vmatmul.mubr.bf16.gmra.mrb[0].mxu0 %v389
  %v1962 = vpop.f32.mrb[0].mxu0
  %v1963 = vadd.f32 %v1843, %v1962
  %v1964 = vpop.f32.mrb[0].mxu0
  %v1965 = vpop.f32.mrb[0].mxu0
  %v1966 = vadd.f32 %v1846, %v1965
  %v1967 = vpop.f32.mrb[0].mxu0
  %1968 = vmatprep.mubr.bf16.mxu0 %v403
  %1969 = vmatmul.mubr.bf16.gmra.mrb[0].mxu0 %v402
  %v1970 = vpop.f32.mrb[0].mxu0
  %v1971 = vadd.f32 %v1851, %v1970
  %v1972 = vpop.f32.mrb[0].mxu0
  %v1973 = vpop.f32.mrb[0].mxu0
  %v1974 = vadd.f32 %v1854, %v1973
  %v1975 = vpop.f32.mrb[0].mxu0
  %1976 = vmatprep.mubr.bf16.mxu0 %v416
  %1977 = vmatmul.mubr.bf16.gmra.mrb[0].mxu0 %v415
  %v1978 = vpop.f32.mrb[0].mxu0
  %v1979 = vadd.f32 %v1859, %v1978
  %v1980 = vpop.f32.mrb[0].mxu0
  %v1981 = vpop.f32.mrb[0].mxu0
  %v1982 = vadd.f32 %v1862, %v1981
  %v1983 = vpop.f32.mrb[0].mxu0
  %1984 = vmatprep.mubr.bf16.mxu0 %v429
  %1985 = vmatmul.mubr.bf16.gmra.mrb[0].mxu0 %v428
  %v1986 = vpop.f32.mrb[0].mxu0
  %v1987 = vadd.f32 %v1867, %v1986
  %v1988 = vpop.f32.mrb[0].mxu0
  %v1989 = vpop.f32.mrb[0].mxu0
  %v1990 = vpop.f32.mrb[0].mxu0
  %1991 = vdwg.mxu0
  %1992 = vmatprep.subr.bf16.mxu0 0
  %1993 = vmatpush1.bf16.msra.mxu0 %v1134
  %1994 = vmatprep.subr.bf16.mxu0 0
  %1995 = vmatpush1.bf16.msra.mxu0 %v1135
  %1996 = vmatprep.subr.bf16.mxu0 0
  %1997 = vmatpush1.bf16.msra.mxu0 %v1136
  %1998 = vmatprep.subr.bf16.mxu0 0
  %1999 = vmatpush1.bf16.msra.mxu0 %v1137
  %2000 = vmatprep.subr.bf16.mxu0 0
  %2001 = vmatpush1.bf16.msra.mxu0 0
  %2002 = vmatprep.subr.bf16.mxu0 0
  %2003 = vmatpush1.bf16.msra.mxu0 0
  %2004 = vmatprep.subr.bf16.mxu0 0
  %2005 = vmatpush1.bf16.msra.mxu0 0
  %2006 = vmatprep.subr.bf16.mxu0 0
  %2007 = vmatpush1.bf16.msra.mxu0 0
  %2008 = vmatprep.subr.bf16.mxu0 0
  %2009 = vmatpush1.bf16.msra.mxu0 0
  %2010 = vmatprep.subr.bf16.mxu0 0
  %2011 = vmatpush1.bf16.msra.mxu0 0
  %2012 = vmatprep.subr.bf16.mxu0 0
  %2013 = vmatpush1.bf16.msra.mxu0 0
  %2014 = vmatprep.subr.bf16.mxu0 0
  %2015 = vmatpush1.bf16.msra.mxu0 0
  %2016 = vmatprep.subr.bf16.mxu0 0
  %2017 = vmatpush1.bf16.msra.mxu0 0
  %2018 = vmatprep.subr.bf16.mxu0 0
  %2019 = vmatpush1.bf16.msra.mxu0 0
  %2020 = vmatprep.subr.bf16.mxu0 0
  %2021 = vmatpush1.bf16.msra.mxu0 0
  %2022 = vmatprep.subr.bf16.mxu0 0
  %2023 = vmatpush1.bf16.msra.mxu0 0
  %2024 = vmatprep.mubr.bf16.mxu0 0
  %2025 = vmatmul.mubr.bf16.gmra.mrb[0].mxu0 %v1240
  %v2026 = vpop.f32.mrb[0].mxu0
  %v2027 = vadd.f32 %v1907, %v2026
  %v2028 = vpop.f32.mrb[0].mxu0
  %v2029 = vpop.f32.mrb[0].mxu0
  %v2030 = vadd.f32 %v1910, %v2029
  %v2031 = vpop.f32.mrb[0].mxu0
  %2032 = vmatprep.mubr.bf16.mxu0 0
  %2033 = vmatmul.mubr.bf16.gmra.mrb[0].mxu0 %v1243
  %v2034 = vpop.f32.mrb[0].mxu0
  %v2035 = vadd.f32 %v1915, %v2034
  %v2036 = vpop.f32.mrb[0].mxu0
  %v2037 = vpop.f32.mrb[0].mxu0
  %v2038 = vadd.f32 %v1918, %v2037
  %v2039 = vpop.f32.mrb[0].mxu0
  %2040 = vmatprep.mubr.bf16.mxu0 0
  %2041 = vmatmul.mubr.bf16.gmra.mrb[0].mxu0 %v1246
  %v2042 = vpop.f32.mrb[0].mxu0
  %v2043 = vadd.f32 %v1923, %v2042
  %v2044 = vpop.f32.mrb[0].mxu0
  %v2045 = vpop.f32.mrb[0].mxu0
  %v2046 = vadd.f32 %v1926, %v2045
  %v2047 = vpop.f32.mrb[0].mxu0
  %2048 = vmatprep.mubr.bf16.mxu0 0
  %2049 = vmatmul.mubr.bf16.gmra.mrb[0].mxu0 %v1249
  %v2050 = vpop.f32.mrb[0].mxu0
  %v2051 = vadd.f32 %v1931, %v2050
  %v2052 = vpop.f32.mrb[0].mxu0
  %v2053 = vpop.f32.mrb[0].mxu0
  %v2054 = vadd.f32 %v1934, %v2053
  %v2055 = vpop.f32.mrb[0].mxu0
  %2056 = vmatprep.mubr.bf16.mxu0 0
  %2057 = vmatmul.mubr.bf16.gmra.mrb[0].mxu0 %v1252
  %v2058 = vpop.f32.mrb[0].mxu0
  %v2059 = vadd.f32 %v1939, %v2058
  %v2060 = vpop.f32.mrb[0].mxu0
  %v2061 = vpop.f32.mrb[0].mxu0
  %v2062 = vadd.f32 %v1942, %v2061
  %v2063 = vpop.f32.mrb[0].mxu0
  %2064 = vmatprep.mubr.bf16.mxu0 0
  %2065 = vmatmul.mubr.bf16.gmra.mrb[0].mxu0 %v1255
  %v2066 = vpop.f32.mrb[0].mxu0
  %v2067 = vadd.f32 %v1947, %v2066
  %v2068 = vpop.f32.mrb[0].mxu0
  %v2069 = vpop.f32.mrb[0].mxu0
  %v2070 = vadd.f32 %v1950, %v2069
  %v2071 = vpop.f32.mrb[0].mxu0
  %2072 = vmatprep.mubr.bf16.mxu0 0
  %2073 = vmatmul.mubr.bf16.gmra.mrb[0].mxu0 %v1258
  %v2074 = vpop.f32.mrb[0].mxu0
  %v2075 = vadd.f32 %v1955, %v2074
  %v2076 = vpop.f32.mrb[0].mxu0
  %v2077 = vpop.f32.mrb[0].mxu0
  %v2078 = vadd.f32 %v1958, %v2077
  %v2079 = vpop.f32.mrb[0].mxu0
  %2080 = vmatprep.mubr.bf16.mxu0 0
  %2081 = vmatmul.mubr.bf16.gmra.mrb[0].mxu0 %v1261
  %v2082 = vpop.f32.mrb[0].mxu0
  %v2083 = vadd.f32 %v1963, %v2082
  %v2084 = vpop.f32.mrb[0].mxu0
  %v2085 = vpop.f32.mrb[0].mxu0
  %v2086 = vadd.f32 %v1966, %v2085
  %v2087 = vpop.f32.mrb[0].mxu0
  %2088 = vmatprep.mubr.bf16.mxu0 0
  %2089 = vmatmul.mubr.bf16.gmra.mrb[0].mxu0 %v1264
  %v2090 = vpop.f32.mrb[0].mxu0
  %v2091 = vadd.f32 %v1971, %v2090
  %v2092 = vpop.f32.mrb[0].mxu0
  %v2093 = vpop.f32.mrb[0].mxu0
  %v2094 = vadd.f32 %v1974, %v2093
  %v2095 = vpop.f32.mrb[0].mxu0
  %2096 = vmatprep.mubr.bf16.mxu0 0
  %2097 = vmatmul.mubr.bf16.gmra.mrb[0].mxu0 %v1267
  %v2098 = vpop.f32.mrb[0].mxu0
  %v2099 = vadd.f32 %v1979, %v2098
  %v2100 = vpop.f32.mrb[0].mxu0
  %v2101 = vpop.f32.mrb[0].mxu0
  %v2102 = vadd.f32 %v1982, %v2101
  %v2103 = vpop.f32.mrb[0].mxu0
  %2104 = vmatprep.mubr.bf16.mxu0 0
  %2105 = vmatmul.mubr.bf16.gmra.mrb[0].mxu0 %v1270
  %v2106 = vpop.f32.mrb[0].mxu0
  %v2107 = vadd.f32 %v1987, %v2106
  %v2108 = vpop.f32.mrb[0].mxu0
  %v2109 = vpop.f32.mrb[0].mxu0
  %v2110 = vpop.f32.mrb[0].mxu0
  %2111 = vdwg.mxu0
  %v2112 = vmax.f32 %v2027, 0.0
  %v2113 = vmax.f32 %v2030, 0.0
  %v2114 = vmax.f32 %v2035, 0.0
  %v2115 = vmax.f32 %v2038, 0.0
  %v2116 = vmax.f32 %v2043, 0.0
  %v2117 = vmax.f32 %v2046, 0.0
  %v2118 = vmax.f32 %v2051, 0.0
  %v2119 = vmax.f32 %v2054, 0.0
  %v2120 = vmax.f32 %v2059, 0.0
  %v2121 = vmax.f32 %v2062, 0.0
  %v2122 = vmax.f32 %v2067, 0.0
  %v2123 = vmax.f32 %v2070, 0.0
  %v2124 = vmax.f32 %v2075, 0.0
  %v2125 = vmax.f32 %v2078, 0.0
  %v2126 = vmax.f32 %v2083, 0.0
  %v2127 = vmax.f32 %v2086, 0.0
  %v2128 = vmax.f32 %v2091, 0.0
  %v2129 = vmax.f32 %v2094, 0.0
  %v2130 = vmax.f32 %v2099, 0.0
  %v2131 = vmax.f32 %v2102, 0.0
  %v2132 = vmax.f32 %v2107, 0.0
  %2133 = vst.msk [vmem:[%s3] sm:$0xff] %vm1238, %v2112
  %2134 = vst.msk [vmem:[%s3 + $0x8] sm:$0xff] %vm1238, %v2113
  %2135 = vst.msk [vmem:[%s3 + $0x10] sm:$0xff] %vm1238, %v2114
  %2136 = vst.msk [vmem:[%s3 + $0x18] sm:$0xff] %vm1238, %v2115
  %2137 = vst.msk [vmem:[%s3 + $0x20] sm:$0xff] %vm1238, %v2116
  %2138 = vst.msk [vmem:[%s3 + $0x28] sm:$0xff] %vm1238, %v2117
  %2139 = vst.msk [vmem:[%s3 + $0x30] sm:$0xff] %vm1238, %v2118
  %2140 = vst.msk [vmem:[%s3 + $0x38] sm:$0xff] %vm1238, %v2119
  %2141 = vst.msk [vmem:[%s3 + $0x40] sm:$0xff] %vm1238, %v2120
  %2142 = vst.msk [vmem:[%s3 + $0x48] sm:$0xff] %vm1238, %v2121
  %2143 = vst.msk [vmem:[%s3 + $0x50] sm:$0xff] %vm1238, %v2122
  %2144 = vst.msk [vmem:[%s3 + $0x58] sm:$0xff] %vm1238, %v2123
  %2145 = vst.msk [vmem:[%s3 + $0x60] sm:$0xff] %vm1238, %v2124
  %2146 = vst.msk [vmem:[%s3 + $0x68] sm:$0xff] %vm1238, %v2125
  %2147 = vst.msk [vmem:[%s3 + $0x70] sm:$0xff] %vm1238, %v2126
  %2148 = vst.msk [vmem:[%s3 + $0x78] sm:$0xff] %vm1238, %v2127
  %2149 = vst.msk [vmem:[%s3 + $0x80] sm:$0xff] %vm1238, %v2128
  %2150 = vst.msk [vmem:[%s3 + $0x88] sm:$0xff] %vm1238, %v2129
  %2151 = vst.msk [vmem:[%s3 + $0x90] sm:$0xff] %vm1238, %v2130
  %2152 = vst.msk [vmem:[%s3 + $0x98] sm:$0xff] %vm1238, %v2131
  %vm2153 = vcmask 517120
  %2154 = vst.msk [vmem:[%s3 + $0xa0] sm:$0x3] %vm2153, %v2132
  // Predicated region
  $region14: #{cnn_cifar_forward.4} parent=0 // pred_check
    _
  $region15: #{cnn_cifar_forward.4} parent=0 // pred_check_branch
    %2156 = sbr.rel (0) target = $region17
  $region16: #{cnn_cifar_forward.4} parent=0 // pred_region
    _
  $region17: #{cnn_cifar_forward.4} parent=0 // pred_fallthru
    _
  // Predicated region
  $region18: #{cnn_cifar_forward.4} parent=0 // pred_check
    _
  $region19: #{cnn_cifar_forward.4} parent=0 // pred_check_branch
    %2158 = sbr.rel (0) target = $region21
  $region20: #{cnn_cifar_forward.4} parent=0 // pred_region
    _
  $region21: #{cnn_cifar_forward.4} parent=0 // pred_fallthru
    _

// kernel: cnn_cifar_forward.5
$region0: #{cnn_cifar_forward.5}
  #allocation0 [shape = 'u32[]', space=smem, size = 0x4, offset = 0x4, fixed_abs, tag = 'smem constant byte address 0x4 - core index']
  #allocation1 [shape = 'u32[144,128]{1,0:T(1,128)}', space=vmem, size = 0x12000, scoped, tag = 'internal scratch']
  %s0 = inlined_call_operand.vmem [shape: f32[2,1024], index: 0, kind: input, shape index: {}]
  %s1 = inlined_call_operand.vmem [shape: bf16[1024,384], index: 1, kind: input, shape index: {}]
  %s2 = inlined_call_operand.vmem [shape: f32[1,384], index: 2, kind: input, shape index: {}]
  %s3 = inlined_call_operand.vmem [shape: bf16[384,192], index: 3, kind: input, shape index: {}]
  %s4 = inlined_call_operand.vmem [shape: f32[1,192], index: 4, kind: input, shape index: {}]
  %s5 = inlined_call_operand.vmem [shape: bf16[192,10], index: 5, kind: input, shape index: {}]
  %s6 = inlined_call_operand.vmem [shape: f32[1,10], index: 6, kind: input, shape index: {}]
  %s7 = inlined_call_operand.hbm [shape: f32[2,10], index: 7, kind: output, shape index: {}]
  %s8 = sld [smem:[#allocation0]]
  $region38: #{cnn_cifar_forward.5} parent=0
    _
  %s10 = ssub.s32 1, %s8
  %s11 = scalar_select 0, %s10, %s8
  $region1: #{cnn_cifar_forward.5} parent=0
    #allocation2 [shape = 'u8[1024]{0}', space=vmem, size = 0x400, scoped, tag = 'output window, operand 0, single buffered']
    #allocation3 [shape = 's32[1]{0}', space=sflag, size = 0x4, scoped, tag = 'scoped memory for cnn_cifar_forward.5']
    %12 = vsyncpa [#allocation3], 0
    // Predicated region
    $region2: #{cnn_cifar_forward.5} parent=1 // pred_check
      _
    $region3: #{cnn_cifar_forward.5} parent=1 // pred_check_branch
      %14 = sbr.rel (0) target = $region5
    $region4: #{cnn_cifar_forward.5} parent=1 // pred_region
      _
    $region5: #{cnn_cifar_forward.5} parent=1 // pred_fallthru
      _
    // Predicated region
    $region6: #{cnn_cifar_forward.5} parent=1 // pred_check
      _
    $region7: #{cnn_cifar_forward.5} parent=1 // pred_check_branch
      %16 = sbr.rel (0) target = $region9
    $region8: #{cnn_cifar_forward.5} parent=1 // pred_region
      _
    $region9: #{cnn_cifar_forward.5} parent=1 // pred_fallthru
      _
    // Predicated region
    $region10: #{cnn_cifar_forward.5} parent=1 // pred_check
      _
    $region11: #{cnn_cifar_forward.5} parent=1 // pred_check_branch
      %18 = sbr.rel (0) target = $region13
    $region12: #{cnn_cifar_forward.5} parent=1 // pred_region
      _
    $region13: #{cnn_cifar_forward.5} parent=1 // pred_fallthru
      _
    // Predicated region
    $region14: #{cnn_cifar_forward.5} parent=1 // pred_check
      _
    $region15: #{cnn_cifar_forward.5} parent=1 // pred_check_branch
      %20 = sbr.rel (0) target = $region17
    $region16: #{cnn_cifar_forward.5} parent=1 // pred_region
      _
    $region17: #{cnn_cifar_forward.5} parent=1 // pred_fallthru
      _
    // Predicated region
    $region18: #{cnn_cifar_forward.5} parent=1 // pred_check
      _
    $region19: #{cnn_cifar_forward.5} parent=1 // pred_check_branch
      %22 = sbr.rel (0) target = $region21
    $region20: #{cnn_cifar_forward.5} parent=1 // pred_region
      _
    $region21: #{cnn_cifar_forward.5} parent=1 // pred_fallthru
      _
    // Predicated region
    $region22: #{cnn_cifar_forward.5} parent=1 // pred_check
      _
    $region23: #{cnn_cifar_forward.5} parent=1 // pred_check_branch
      %24 = sbr.rel (0) target = $region25
    $region24: #{cnn_cifar_forward.5} parent=1 // pred_region
      _
    $region25: #{cnn_cifar_forward.5} parent=1 // pred_fallthru
      _
    // Predicated region
    $region26: #{cnn_cifar_forward.5} parent=1 // pred_check
      _
    $region27: #{cnn_cifar_forward.5} parent=1 // pred_check_branch
      %26 = sbr.rel (0) target = $region29
    $region28: #{cnn_cifar_forward.5} parent=1 // pred_region
      _
    $region29: #{cnn_cifar_forward.5} parent=1 // pred_fallthru
      _
    %v28 = vld [vmem:[%s0] sm:$0xff]
    %v29 = vld [vmem:[%s0 + $0x8] sm:$0xff]
    %v32 = vcombine.high %v28, %v28
    %v34 = vunpack.c.l.s4 1983009808
    %v35 = vunpack.c.0.s8 %v34
    %v36 = vlaneseq
    %v37 = vshrl.u32 %v36, 7
    %v38 = vsub.s32 %v35, %v37
    %v39 = vrot.slane %v28, %v38
    %v41 = vunpack.c.l.s4 1983009808
    %v42 = vunpack.c.0.s8 %v41
    %v43 = vlaneseq
    %v44 = vshrl.u32 %v43, 7
    %v45 = vsub.s32 %v42, %v44
    %v46 = vrot.slane %v32, %v45
    %v47 = vcombine.high %v39, %v39
    %v48 = vcombine.high %v46, %v46
    %v49 = vcombine.high %v29, %v29
    %v51 = vunpack.c.l.s4 1983009808
    %v52 = vunpack.c.0.s8 %v51
    %v53 = vlaneseq
    %v54 = vshrl.u32 %v53, 7
    %v55 = vsub.s32 %v52, %v54
    %v56 = vrot.slane %v29, %v55
    %v58 = vunpack.c.l.s4 1983009808
    %v59 = vunpack.c.0.s8 %v58
    %v60 = vlaneseq
    %v61 = vshrl.u32 %v60, 7
    %v62 = vsub.s32 %v59, %v61
    %v63 = vrot.slane %v49, %v62
    %v64 = vcombine.high %v56, %v56
    %v65 = vcombine.high %v63, %v63
    %v74 = vpack.c.bf16 %v39, %v39
    %v75 = vpack.c.bf16 %v47, %v47
    %v76 = vpack.c.bf16 %v46, %v46
    %v77 = vpack.c.bf16 %v48, %v48
    %v78 = vpack.c.bf16 %v56, %v56
    %v79 = vpack.c.bf16 %v64, %v64
    %v80 = vpack.c.bf16 %v63, %v63
    %v81 = vpack.c.bf16 %v65, %v65
    %v82 = vld [vmem:[%s1] sm:$0xff]
    %v83 = vld [vmem:[%s1 + $0x8] sm:$0xf]
    %v84 = vld [vmem:[%s1 + $0xc] sm:$0xff]
    %v85 = vld [vmem:[%s1 + $0x14] sm:$0xf]
    %v86 = vld [vmem:[%s1 + $0x18] sm:$0xff]
    %v87 = vld [vmem:[%s1 + $0x20] sm:$0xf]
    %v88 = vld [vmem:[%s1 + $0x24] sm:$0xff]
    %v89 = vld [vmem:[%s1 + $0x2c] sm:$0xf]
    %v90 = vld [vmem:[%s1 + $0x30] sm:$0xff]
    %v91 = vld [vmem:[%s1 + $0x38] sm:$0xf]
    %v92 = vld [vmem:[%s1 + $0x3c] sm:$0xff]
    %v93 = vld [vmem:[%s1 + $0x44] sm:$0xf]
    %v94 = vld [vmem:[%s1 + $0x48] sm:$0xff]
    %v95 = vld [vmem:[%s1 + $0x50] sm:$0xf]
    %v96 = vld [vmem:[%s1 + $0x54] sm:$0xff]
    %v97 = vld [vmem:[%s1 + $0x5c] sm:$0xf]
    %v98 = vld [vmem:[%s1 + $0x60] sm:$0xff]
    %v99 = vld [vmem:[%s1 + $0x68] sm:$0xf]
    %v100 = vld [vmem:[%s1 + $0x6c] sm:$0xff]
    %v101 = vld [vmem:[%s1 + $0x74] sm:$0xf]
    %v102 = vld [vmem:[%s1 + $0x78] sm:$0xff]
    %v103 = vld [vmem:[%s1 + $0x80] sm:$0xf]
    %v104 = vld [vmem:[%s1 + $0x84] sm:$0xff]
    %v105 = vld [vmem:[%s1 + $0x8c] sm:$0xf]
    %v106 = vld [vmem:[%s1 + $0x90] sm:$0xff]
    %v107 = vld [vmem:[%s1 + $0x98] sm:$0xf]
    %v108 = vld [vmem:[%s1 + $0x9c] sm:$0xff]
    %v109 = vld [vmem:[%s1 + $0xa4] sm:$0xf]
    %v110 = vld [vmem:[%s1 + $0xa8] sm:$0xff]
    %v111 = vld [vmem:[%s1 + $0xb0] sm:$0xf]
    %v112 = vld [vmem:[%s1 + $0xb4] sm:$0xff]
    %v113 = vld [vmem:[%s1 + $0xbc] sm:$0xf]
    %v114 = vld [vmem:[%s1 + $0xc0] sm:$0xff]
    %v115 = vld [vmem:[%s1 + $0xc8] sm:$0xf]
    %v116 = vld [vmem:[%s1 + $0xcc] sm:$0xff]
    %v117 = vld [vmem:[%s1 + $0xd4] sm:$0xf]
    %v118 = vld [vmem:[%s1 + $0xd8] sm:$0xff]
    %v119 = vld [vmem:[%s1 + $0xe0] sm:$0xf]
    %v120 = vld [vmem:[%s1 + $0xe4] sm:$0xff]
    %v121 = vld [vmem:[%s1 + $0xec] sm:$0xf]
    %v122 = vld [vmem:[%s1 + $0xf0] sm:$0xff]
    %v123 = vld [vmem:[%s1 + $0xf8] sm:$0xf]
    %v124 = vld [vmem:[%s1 + $0xfc] sm:$0xff]
    %v125 = vld [vmem:[%s1 + $0x104] sm:$0xf]
    %v126 = vld [vmem:[%s1 + $0x108] sm:$0xff]
    %v127 = vld [vmem:[%s1 + $0x110] sm:$0xf]
    %v128 = vld [vmem:[%s1 + $0x114] sm:$0xff]
    %v129 = vld [vmem:[%s1 + $0x11c] sm:$0xf]
    %v130 = vld [vmem:[%s1 + $0x120] sm:$0xff]
    %v131 = vld [vmem:[%s1 + $0x128] sm:$0xf]
    %v132 = vld [vmem:[%s1 + $0x12c] sm:$0xff]
    %v133 = vld [vmem:[%s1 + $0x134] sm:$0xf]
    %v134 = vld [vmem:[%s1 + $0x138] sm:$0xff]
    %v135 = vld [vmem:[%s1 + $0x140] sm:$0xf]
    %v136 = vld [vmem:[%s1 + $0x144] sm:$0xff]
    %v137 = vld [vmem:[%s1 + $0x14c] sm:$0xf]
    %v138 = vld [vmem:[%s1 + $0x150] sm:$0xff]
    %v139 = vld [vmem:[%s1 + $0x158] sm:$0xf]
    %v140 = vld [vmem:[%s1 + $0x15c] sm:$0xff]
    %v141 = vld [vmem:[%s1 + $0x164] sm:$0xf]
    %v142 = vld [vmem:[%s1 + $0x168] sm:$0xff]
    %v143 = vld [vmem:[%s1 + $0x170] sm:$0xf]
    %v144 = vld [vmem:[%s1 + $0x174] sm:$0xff]
    %v145 = vld [vmem:[%s1 + $0x17c] sm:$0xf]
    %v146 = vld [vmem:[%s1 + $0x180] sm:$0xff]
    %v147 = vld [vmem:[%s1 + $0x188] sm:$0xf]
    %v148 = vld [vmem:[%s1 + $0x18c] sm:$0xff]
    %v149 = vld [vmem:[%s1 + $0x194] sm:$0xf]
    %v150 = vld [vmem:[%s1 + $0x198] sm:$0xff]
    %v151 = vld [vmem:[%s1 + $0x1a0] sm:$0xf]
    %v152 = vld [vmem:[%s1 + $0x1a4] sm:$0xff]
    %v153 = vld [vmem:[%s1 + $0x1ac] sm:$0xf]
    %v154 = vld [vmem:[%s1 + $0x1b0] sm:$0xff]
    %v155 = vld [vmem:[%s1 + $0x1b8] sm:$0xf]
    %v156 = vld [vmem:[%s1 + $0x1bc] sm:$0xff]
    %v157 = vld [vmem:[%s1 + $0x1c4] sm:$0xf]
    %v158 = vld [vmem:[%s1 + $0x1c8] sm:$0xff]
    %v159 = vld [vmem:[%s1 + $0x1d0] sm:$0xf]
    %v160 = vld [vmem:[%s1 + $0x1d4] sm:$0xff]
    %v161 = vld [vmem:[%s1 + $0x1dc] sm:$0xf]
    %v162 = vld [vmem:[%s1 + $0x1e0] sm:$0xff]
    %v163 = vld [vmem:[%s1 + $0x1e8] sm:$0xf]
    %v164 = vld [vmem:[%s1 + $0x1ec] sm:$0xff]
    %v165 = vld [vmem:[%s1 + $0x1f4] sm:$0xf]
    %v166 = vld [vmem:[%s1 + $0x1f8] sm:$0xff]
    %v167 = vld [vmem:[%s1 + $0x200] sm:$0xf]
    %v168 = vld [vmem:[%s1 + $0x204] sm:$0xff]
    %v169 = vld [vmem:[%s1 + $0x20c] sm:$0xf]
    %v170 = vld [vmem:[%s1 + $0x210] sm:$0xff]
    %v171 = vld [vmem:[%s1 + $0x218] sm:$0xf]
    %v172 = vld [vmem:[%s1 + $0x21c] sm:$0xff]
    %v173 = vld [vmem:[%s1 + $0x224] sm:$0xf]
    %v174 = vld [vmem:[%s1 + $0x228] sm:$0xff]
    %v175 = vld [vmem:[%s1 + $0x230] sm:$0xf]
    %v176 = vld [vmem:[%s1 + $0x234] sm:$0xff]
    %v177 = vld [vmem:[%s1 + $0x23c] sm:$0xf]
    %v178 = vld [vmem:[%s1 + $0x240] sm:$0xff]
    %v179 = vld [vmem:[%s1 + $0x248] sm:$0xf]
    %v180 = vld [vmem:[%s1 + $0x24c] sm:$0xff]
    %v181 = vld [vmem:[%s1 + $0x254] sm:$0xf]
    %v182 = vld [vmem:[%s1 + $0x258] sm:$0xff]
    %v183 = vld [vmem:[%s1 + $0x260] sm:$0xf]
    %v184 = vld [vmem:[%s1 + $0x264] sm:$0xff]
    %v185 = vld [vmem:[%s1 + $0x26c] sm:$0xf]
    %v186 = vld [vmem:[%s1 + $0x270] sm:$0xff]
    %v187 = vld [vmem:[%s1 + $0x278] sm:$0xf]
    %v188 = vld [vmem:[%s1 + $0x27c] sm:$0xff]
    %v189 = vld [vmem:[%s1 + $0x284] sm:$0xf]
    %v190 = vld [vmem:[%s1 + $0x288] sm:$0xff]
    %v191 = vld [vmem:[%s1 + $0x290] sm:$0xf]
    %v192 = vld [vmem:[%s1 + $0x294] sm:$0xff]
    %v193 = vld [vmem:[%s1 + $0x29c] sm:$0xf]
    %v194 = vld [vmem:[%s1 + $0x2a0] sm:$0xff]
    %v195 = vld [vmem:[%s1 + $0x2a8] sm:$0xf]
    %v196 = vld [vmem:[%s1 + $0x2ac] sm:$0xff]
    %v197 = vld [vmem:[%s1 + $0x2b4] sm:$0xf]
    %v198 = vld [vmem:[%s1 + $0x2b8] sm:$0xff]
    %v199 = vld [vmem:[%s1 + $0x2c0] sm:$0xf]
    %v200 = vld [vmem:[%s1 + $0x2c4] sm:$0xff]
    %v201 = vld [vmem:[%s1 + $0x2cc] sm:$0xf]
    %v202 = vld [vmem:[%s1 + $0x2d0] sm:$0xff]
    %v203 = vld [vmem:[%s1 + $0x2d8] sm:$0xf]
    %v204 = vld [vmem:[%s1 + $0x2dc] sm:$0xff]
    %v205 = vld [vmem:[%s1 + $0x2e4] sm:$0xf]
    %v206 = vld [vmem:[%s1 + $0x2e8] sm:$0xff]
    %v207 = vld [vmem:[%s1 + $0x2f0] sm:$0xf]
    %v208 = vld [vmem:[%s1 + $0x2f4] sm:$0xff]
    %v209 = vld [vmem:[%s1 + $0x2fc] sm:$0xf]
    %v210 = vld [vmem:[%s1 + $0x300] sm:$0xff]
    %v211 = vld [vmem:[%s1 + $0x308] sm:$0xf]
    %v212 = vld [vmem:[%s1 + $0x30c] sm:$0xff]
    %v213 = vld [vmem:[%s1 + $0x314] sm:$0xf]
    %v214 = vld [vmem:[%s1 + $0x318] sm:$0xff]
    %v215 = vld [vmem:[%s1 + $0x320] sm:$0xf]
    %v216 = vld [vmem:[%s1 + $0x324] sm:$0xff]
    %v217 = vld [vmem:[%s1 + $0x32c] sm:$0xf]
    %v218 = vld [vmem:[%s1 + $0x330] sm:$0xff]
    %v219 = vld [vmem:[%s1 + $0x338] sm:$0xf]
    %v220 = vld [vmem:[%s1 + $0x33c] sm:$0xff]
    %v221 = vld [vmem:[%s1 + $0x344] sm:$0xf]
    %v222 = vld [vmem:[%s1 + $0x348] sm:$0xff]
    %v223 = vld [vmem:[%s1 + $0x350] sm:$0xf]
    %v224 = vld [vmem:[%s1 + $0x354] sm:$0xff]
    %v225 = vld [vmem:[%s1 + $0x35c] sm:$0xf]
    %v226 = vld [vmem:[%s1 + $0x360] sm:$0xff]
    %v227 = vld [vmem:[%s1 + $0x368] sm:$0xf]
    %v228 = vld [vmem:[%s1 + $0x36c] sm:$0xff]
    %v229 = vld [vmem:[%s1 + $0x374] sm:$0xf]
    %v230 = vld [vmem:[%s1 + $0x378] sm:$0xff]
    %v231 = vld [vmem:[%s1 + $0x380] sm:$0xf]
    %v232 = vld [vmem:[%s1 + $0x384] sm:$0xff]
    %v233 = vld [vmem:[%s1 + $0x38c] sm:$0xf]
    %v234 = vld [vmem:[%s1 + $0x390] sm:$0xff]
    %v235 = vld [vmem:[%s1 + $0x398] sm:$0xf]
    %v236 = vld [vmem:[%s1 + $0x39c] sm:$0xff]
    %v237 = vld [vmem:[%s1 + $0x3a4] sm:$0xf]
    %v238 = vld [vmem:[%s1 + $0x3a8] sm:$0xff]
    %v239 = vld [vmem:[%s1 + $0x3b0] sm:$0xf]
    %v240 = vld [vmem:[%s1 + $0x3b4] sm:$0xff]
    %v241 = vld [vmem:[%s1 + $0x3bc] sm:$0xf]
    %v242 = vld [vmem:[%s1 + $0x3c0] sm:$0xff]
    %v243 = vld [vmem:[%s1 + $0x3c8] sm:$0xf]
    %v244 = vld [vmem:[%s1 + $0x3cc] sm:$0xff]
    %v245 = vld [vmem:[%s1 + $0x3d4] sm:$0xf]
    %v246 = vld [vmem:[%s1 + $0x3d8] sm:$0xff]
    %v247 = vld [vmem:[%s1 + $0x3e0] sm:$0xf]
    %v248 = vld [vmem:[%s1 + $0x3e4] sm:$0xff]
    %v249 = vld [vmem:[%s1 + $0x3ec] sm:$0xf]
    %v250 = vld [vmem:[%s1 + $0x3f0] sm:$0xff]
    %v251 = vld [vmem:[%s1 + $0x3f8] sm:$0xf]
    %v252 = vld [vmem:[%s1 + $0x3fc] sm:$0xff]
    %v253 = vld [vmem:[%s1 + $0x404] sm:$0xf]
    %v254 = vld [vmem:[%s1 + $0x408] sm:$0xff]
    %v255 = vld [vmem:[%s1 + $0x410] sm:$0xf]
    %v256 = vld [vmem:[%s1 + $0x414] sm:$0xff]
    %v257 = vld [vmem:[%s1 + $0x41c] sm:$0xf]
    %v258 = vld [vmem:[%s1 + $0x420] sm:$0xff]
    %v259 = vld [vmem:[%s1 + $0x428] sm:$0xf]
    %v260 = vld [vmem:[%s1 + $0x42c] sm:$0xff]
    %v261 = vld [vmem:[%s1 + $0x434] sm:$0xf]
    %v262 = vld [vmem:[%s1 + $0x438] sm:$0xff]
    %v263 = vld [vmem:[%s1 + $0x440] sm:$0xf]
    %v264 = vld [vmem:[%s1 + $0x444] sm:$0xff]
    %v265 = vld [vmem:[%s1 + $0x44c] sm:$0xf]
    %v266 = vld [vmem:[%s1 + $0x450] sm:$0xff]
    %v267 = vld [vmem:[%s1 + $0x458] sm:$0xf]
    %v268 = vld [vmem:[%s1 + $0x45c] sm:$0xff]
    %v269 = vld [vmem:[%s1 + $0x464] sm:$0xf]
    %v270 = vld [vmem:[%s1 + $0x468] sm:$0xff]
    %v271 = vld [vmem:[%s1 + $0x470] sm:$0xf]
    %v272 = vld [vmem:[%s1 + $0x474] sm:$0xff]
    %v273 = vld [vmem:[%s1 + $0x47c] sm:$0xf]
    %v274 = vld [vmem:[%s1 + $0x480] sm:$0xff]
    %v275 = vld [vmem:[%s1 + $0x488] sm:$0xf]
    %v276 = vld [vmem:[%s1 + $0x48c] sm:$0xff]
    %v277 = vld [vmem:[%s1 + $0x494] sm:$0xf]
    %v278 = vld [vmem:[%s1 + $0x498] sm:$0xff]
    %v279 = vld [vmem:[%s1 + $0x4a0] sm:$0xf]
    %v280 = vld [vmem:[%s1 + $0x4a4] sm:$0xff]
    %v281 = vld [vmem:[%s1 + $0x4ac] sm:$0xf]
    %v282 = vld [vmem:[%s1 + $0x4b0] sm:$0xff]
    %v283 = vld [vmem:[%s1 + $0x4b8] sm:$0xf]
    %v284 = vld [vmem:[%s1 + $0x4bc] sm:$0xff]
    %v285 = vld [vmem:[%s1 + $0x4c4] sm:$0xf]
    %v286 = vld [vmem:[%s1 + $0x4c8] sm:$0xff]
    %v287 = vld [vmem:[%s1 + $0x4d0] sm:$0xf]
    %v288 = vld [vmem:[%s1 + $0x4d4] sm:$0xff]
    %v289 = vld [vmem:[%s1 + $0x4dc] sm:$0xf]
    %v290 = vld [vmem:[%s1 + $0x4e0] sm:$0xff]
    %v291 = vld [vmem:[%s1 + $0x4e8] sm:$0xf]
    %v292 = vld [vmem:[%s1 + $0x4ec] sm:$0xff]
    %v293 = vld [vmem:[%s1 + $0x4f4] sm:$0xf]
    %v294 = vld [vmem:[%s1 + $0x4f8] sm:$0xff]
    %v295 = vld [vmem:[%s1 + $0x500] sm:$0xf]
    %v296 = vld [vmem:[%s1 + $0x504] sm:$0xff]
    %v297 = vld [vmem:[%s1 + $0x50c] sm:$0xf]
    %v298 = vld [vmem:[%s1 + $0x510] sm:$0xff]
    %v299 = vld [vmem:[%s1 + $0x518] sm:$0xf]
    %v300 = vld [vmem:[%s1 + $0x51c] sm:$0xff]
    %v301 = vld [vmem:[%s1 + $0x524] sm:$0xf]
    %v302 = vld [vmem:[%s1 + $0x528] sm:$0xff]
    %v303 = vld [vmem:[%s1 + $0x530] sm:$0xf]
    %v304 = vld [vmem:[%s1 + $0x534] sm:$0xff]
    %v305 = vld [vmem:[%s1 + $0x53c] sm:$0xf]
    %v306 = vld [vmem:[%s1 + $0x540] sm:$0xff]
    %v307 = vld [vmem:[%s1 + $0x548] sm:$0xf]
    %v308 = vld [vmem:[%s1 + $0x54c] sm:$0xff]
    %v309 = vld [vmem:[%s1 + $0x554] sm:$0xf]
    %v310 = vld [vmem:[%s1 + $0x558] sm:$0xff]
    %v311 = vld [vmem:[%s1 + $0x560] sm:$0xf]
    %v312 = vld [vmem:[%s1 + $0x564] sm:$0xff]
    %v313 = vld [vmem:[%s1 + $0x56c] sm:$0xf]
    %v314 = vld [vmem:[%s1 + $0x570] sm:$0xff]
    %v315 = vld [vmem:[%s1 + $0x578] sm:$0xf]
    %v316 = vld [vmem:[%s1 + $0x57c] sm:$0xff]
    %v317 = vld [vmem:[%s1 + $0x584] sm:$0xf]
    %v318 = vld [vmem:[%s1 + $0x588] sm:$0xff]
    %v319 = vld [vmem:[%s1 + $0x590] sm:$0xf]
    %v320 = vld [vmem:[%s1 + $0x594] sm:$0xff]
    %v321 = vld [vmem:[%s1 + $0x59c] sm:$0xf]
    %v322 = vld [vmem:[%s1 + $0x5a0] sm:$0xff]
    %v323 = vld [vmem:[%s1 + $0x5a8] sm:$0xf]
    %v324 = vld [vmem:[%s1 + $0x5ac] sm:$0xff]
    %v325 = vld [vmem:[%s1 + $0x5b4] sm:$0xf]
    %v326 = vld [vmem:[%s1 + $0x5b8] sm:$0xff]
    %v327 = vld [vmem:[%s1 + $0x5c0] sm:$0xf]
    %v328 = vld [vmem:[%s1 + $0x5c4] sm:$0xff]
    %v329 = vld [vmem:[%s1 + $0x5cc] sm:$0xf]
    %v330 = vld [vmem:[%s1 + $0x5d0] sm:$0xff]
    %v331 = vld [vmem:[%s1 + $0x5d8] sm:$0xf]
    %v332 = vld [vmem:[%s1 + $0x5dc] sm:$0xff]
    %v333 = vld [vmem:[%s1 + $0x5e4] sm:$0xf]
    %v334 = vld [vmem:[%s1 + $0x5e8] sm:$0xff]
    %v335 = vld [vmem:[%s1 + $0x5f0] sm:$0xf]
    %v336 = vld [vmem:[%s1 + $0x5f4] sm:$0xff]
    %v337 = vld [vmem:[%s1 + $0x5fc] sm:$0xf]
    %v338 = vld [vmem:[%s2] sm:$0x7]
    %v340 = vlaneseq
    %v341 = vshrl.u32 %v340, 7
    %v342 = vsub.s32 0, %v341
    %v343 = vrot.slane %v338, %v342
    %v344 = vlaneseq
    %v345 = vshrl.u32 %v344, 7
    %v346 = vsub.s32 1, %v345
    %v347 = vrot.slane %v338, %v346
    %v348 = vlaneseq
    %v349 = vshrl.u32 %v348, 7
    %v350 = vsub.s32 2, %v349
    %v351 = vrot.slane %v338, %v350
    %v611 = vunpack.c.l.b16 %v82
    %v612 = vunpack.c.h.b16 %v82
    %v613 = vunpack.c.l.b16 %v83
    %v614 = vunpack.c.l.b16 %v84
    %v615 = vunpack.c.h.b16 %v84
    %v616 = vunpack.c.l.b16 %v85
    %v617 = vunpack.c.l.b16 %v86
    %v618 = vunpack.c.h.b16 %v86
    %v619 = vunpack.c.l.b16 %v87
    %v620 = vunpack.c.l.b16 %v88
    %v621 = vunpack.c.h.b16 %v88
    %v622 = vunpack.c.l.b16 %v89
    %v623 = vunpack.c.l.b16 %v90
    %v624 = vunpack.c.h.b16 %v90
    %v625 = vunpack.c.l.b16 %v91
    %v626 = vunpack.c.l.b16 %v92
    %v627 = vunpack.c.h.b16 %v92
    %v628 = vunpack.c.l.b16 %v93
    %v629 = vunpack.c.l.b16 %v94
    %v630 = vunpack.c.h.b16 %v94
    %v631 = vunpack.c.l.b16 %v95
    %v632 = vunpack.c.l.b16 %v96
    %v633 = vunpack.c.h.b16 %v96
    %v634 = vunpack.c.l.b16 %v97
    %v635 = vunpack.c.l.b16 %v98
    %v636 = vunpack.c.h.b16 %v98
    %v637 = vunpack.c.l.b16 %v99
    %v638 = vunpack.c.l.b16 %v100
    %v639 = vunpack.c.h.b16 %v100
    %v640 = vunpack.c.l.b16 %v101
    %v641 = vunpack.c.l.b16 %v102
    %v642 = vunpack.c.h.b16 %v102
    %v643 = vunpack.c.l.b16 %v103
    %v644 = vunpack.c.l.b16 %v104
    %v645 = vunpack.c.h.b16 %v104
    %v646 = vunpack.c.l.b16 %v105
    %v647 = vunpack.c.l.b16 %v106
    %v648 = vunpack.c.h.b16 %v106
    %v649 = vunpack.c.l.b16 %v107
    %v650 = vunpack.c.l.b16 %v108
    %v651 = vunpack.c.h.b16 %v108
    %v652 = vunpack.c.l.b16 %v109
    %v653 = vunpack.c.l.b16 %v110
    %v654 = vunpack.c.h.b16 %v110
    %v655 = vunpack.c.l.b16 %v111
    %v656 = vunpack.c.l.b16 %v112
    %v657 = vunpack.c.h.b16 %v112
    %v658 = vunpack.c.l.b16 %v113
    %v659 = vunpack.c.l.b16 %v114
    %v660 = vunpack.c.h.b16 %v114
    %v661 = vunpack.c.l.b16 %v115
    %v662 = vunpack.c.l.b16 %v116
    %v663 = vunpack.c.h.b16 %v116
    %v664 = vunpack.c.l.b16 %v117
    %v665 = vunpack.c.l.b16 %v118
    %v666 = vunpack.c.h.b16 %v118
    %v667 = vunpack.c.l.b16 %v119
    %v668 = vunpack.c.l.b16 %v120
    %v669 = vunpack.c.h.b16 %v120
    %v670 = vunpack.c.l.b16 %v121
    %v671 = vunpack.c.l.b16 %v122
    %v672 = vunpack.c.h.b16 %v122
    %v673 = vunpack.c.l.b16 %v123
    %v674 = vunpack.c.l.b16 %v124
    %v675 = vunpack.c.h.b16 %v124
    %v676 = vunpack.c.l.b16 %v125
    %v677 = vunpack.c.l.b16 %v126
    %v678 = vunpack.c.h.b16 %v126
    %v679 = vunpack.c.l.b16 %v127
    %v680 = vunpack.c.l.b16 %v128
    %v681 = vunpack.c.h.b16 %v128
    %v682 = vunpack.c.l.b16 %v129
    %v683 = vunpack.c.l.b16 %v130
    %v684 = vunpack.c.h.b16 %v130
    %v685 = vunpack.c.l.b16 %v131
    %v686 = vunpack.c.l.b16 %v132
    %v687 = vunpack.c.h.b16 %v132
    %v688 = vunpack.c.l.b16 %v133
    %v689 = vunpack.c.l.b16 %v134
    %v690 = vunpack.c.h.b16 %v134
    %v691 = vunpack.c.l.b16 %v135
    %v692 = vunpack.c.l.b16 %v136
    %v693 = vunpack.c.h.b16 %v136
    %v694 = vunpack.c.l.b16 %v137
    %v695 = vunpack.c.l.b16 %v138
    %v696 = vunpack.c.h.b16 %v138
    %v697 = vunpack.c.l.b16 %v139
    %v698 = vunpack.c.l.b16 %v140
    %v699 = vunpack.c.h.b16 %v140
    %v700 = vunpack.c.l.b16 %v141
    %v701 = vunpack.c.l.b16 %v142
    %v702 = vunpack.c.h.b16 %v142
    %v703 = vunpack.c.l.b16 %v143
    %v704 = vunpack.c.l.b16 %v144
    %v705 = vunpack.c.h.b16 %v144
    %v706 = vunpack.c.l.b16 %v145
    %v707 = vunpack.c.l.b16 %v146
    %v708 = vunpack.c.h.b16 %v146
    %v709 = vunpack.c.l.b16 %v147
    %v710 = vunpack.c.l.b16 %v148
    %v711 = vunpack.c.h.b16 %v148
    %v712 = vunpack.c.l.b16 %v149
    %v713 = vunpack.c.l.b16 %v150
    %v714 = vunpack.c.h.b16 %v150
    %v715 = vunpack.c.l.b16 %v151
    %v716 = vunpack.c.l.b16 %v152
    %v717 = vunpack.c.h.b16 %v152
    %v718 = vunpack.c.l.b16 %v153
    %v719 = vunpack.c.l.b16 %v154
    %v720 = vunpack.c.h.b16 %v154
    %v721 = vunpack.c.l.b16 %v155
    %v722 = vunpack.c.l.b16 %v156
    %v723 = vunpack.c.h.b16 %v156
    %v724 = vunpack.c.l.b16 %v157
    %v725 = vunpack.c.l.b16 %v158
    %v726 = vunpack.c.h.b16 %v158
    %v727 = vunpack.c.l.b16 %v159
    %v728 = vunpack.c.l.b16 %v160
    %v729 = vunpack.c.h.b16 %v160
    %v730 = vunpack.c.l.b16 %v161
    %v731 = vunpack.c.l.b16 %v162
    %v732 = vunpack.c.h.b16 %v162
    %v733 = vunpack.c.l.b16 %v163
    %v734 = vunpack.c.l.b16 %v164
    %v735 = vunpack.c.h.b16 %v164
    %v736 = vunpack.c.l.b16 %v165
    %v737 = vunpack.c.l.b16 %v166
    %v738 = vunpack.c.h.b16 %v166
    %v739 = vunpack.c.l.b16 %v167
    %v740 = vunpack.c.l.b16 %v168
    %v741 = vunpack.c.h.b16 %v168
    %v742 = vunpack.c.l.b16 %v169
    %v743 = vunpack.c.l.b16 %v170
    %v744 = vunpack.c.h.b16 %v170
    %v745 = vunpack.c.l.b16 %v171
    %v746 = vunpack.c.l.b16 %v172
    %v747 = vunpack.c.h.b16 %v172
    %v748 = vunpack.c.l.b16 %v173
    %v749 = vunpack.c.l.b16 %v174
    %v750 = vunpack.c.h.b16 %v174
    %v751 = vunpack.c.l.b16 %v175
    %v752 = vunpack.c.l.b16 %v176
    %v753 = vunpack.c.h.b16 %v176
    %v754 = vunpack.c.l.b16 %v177
    %v755 = vunpack.c.l.b16 %v178
    %v756 = vunpack.c.h.b16 %v178
    %v757 = vunpack.c.l.b16 %v179
    %v758 = vunpack.c.l.b16 %v180
    %v759 = vunpack.c.h.b16 %v180
    %v760 = vunpack.c.l.b16 %v181
    %v761 = vunpack.c.l.b16 %v182
    %v762 = vunpack.c.h.b16 %v182
    %v763 = vunpack.c.l.b16 %v183
    %v764 = vunpack.c.l.b16 %v184
    %v765 = vunpack.c.h.b16 %v184
    %v766 = vunpack.c.l.b16 %v185
    %v767 = vunpack.c.l.b16 %v186
    %v768 = vunpack.c.h.b16 %v186
    %v769 = vunpack.c.l.b16 %v187
    %v770 = vunpack.c.l.b16 %v188
    %v771 = vunpack.c.h.b16 %v188
    %v772 = vunpack.c.l.b16 %v189
    %v773 = vunpack.c.l.b16 %v190
    %v774 = vunpack.c.h.b16 %v190
    %v775 = vunpack.c.l.b16 %v191
    %v776 = vunpack.c.l.b16 %v192
    %v777 = vunpack.c.h.b16 %v192
    %v778 = vunpack.c.l.b16 %v193
    %v779 = vunpack.c.l.b16 %v194
    %v780 = vunpack.c.h.b16 %v194
    %v781 = vunpack.c.l.b16 %v195
    %v782 = vunpack.c.l.b16 %v196
    %v783 = vunpack.c.h.b16 %v196
    %v784 = vunpack.c.l.b16 %v197
    %v785 = vunpack.c.l.b16 %v198
    %v786 = vunpack.c.h.b16 %v198
    %v787 = vunpack.c.l.b16 %v199
    %v788 = vunpack.c.l.b16 %v200
    %v789 = vunpack.c.h.b16 %v200
    %v790 = vunpack.c.l.b16 %v201
    %v791 = vunpack.c.l.b16 %v202
    %v792 = vunpack.c.h.b16 %v202
    %v793 = vunpack.c.l.b16 %v203
    %v794 = vunpack.c.l.b16 %v204
    %v795 = vunpack.c.h.b16 %v204
    %v796 = vunpack.c.l.b16 %v205
    %v797 = vunpack.c.l.b16 %v206
    %v798 = vunpack.c.h.b16 %v206
    %v799 = vunpack.c.l.b16 %v207
    %v800 = vunpack.c.l.b16 %v208
    %v801 = vunpack.c.h.b16 %v208
    %v802 = vunpack.c.l.b16 %v209
    %v803 = vunpack.c.l.b16 %v210
    %v804 = vunpack.c.h.b16 %v210
    %v805 = vunpack.c.l.b16 %v211
    %v806 = vunpack.c.l.b16 %v212
    %v807 = vunpack.c.h.b16 %v212
    %v808 = vunpack.c.l.b16 %v213
    %v809 = vunpack.c.l.b16 %v214
    %v810 = vunpack.c.h.b16 %v214
    %v811 = vunpack.c.l.b16 %v215
    %v812 = vunpack.c.l.b16 %v216
    %v813 = vunpack.c.h.b16 %v216
    %v814 = vunpack.c.l.b16 %v217
    %v815 = vunpack.c.l.b16 %v218
    %v816 = vunpack.c.h.b16 %v218
    %v817 = vunpack.c.l.b16 %v219
    %v818 = vunpack.c.l.b16 %v220
    %v819 = vunpack.c.h.b16 %v220
    %v820 = vunpack.c.l.b16 %v221
    %v821 = vunpack.c.l.b16 %v222
    %v822 = vunpack.c.h.b16 %v222
    %v823 = vunpack.c.l.b16 %v223
    %v824 = vunpack.c.l.b16 %v224
    %v825 = vunpack.c.h.b16 %v224
    %v826 = vunpack.c.l.b16 %v225
    %v827 = vunpack.c.l.b16 %v226
    %v828 = vunpack.c.h.b16 %v226
    %v829 = vunpack.c.l.b16 %v227
    %v830 = vunpack.c.l.b16 %v228
    %v831 = vunpack.c.h.b16 %v228
    %v832 = vunpack.c.l.b16 %v229
    %v833 = vunpack.c.l.b16 %v230
    %v834 = vunpack.c.h.b16 %v230
    %v835 = vunpack.c.l.b16 %v231
    %v836 = vunpack.c.l.b16 %v232
    %v837 = vunpack.c.h.b16 %v232
    %v838 = vunpack.c.l.b16 %v233
    %v839 = vunpack.c.l.b16 %v234
    %v840 = vunpack.c.h.b16 %v234
    %v841 = vunpack.c.l.b16 %v235
    %v842 = vunpack.c.l.b16 %v236
    %v843 = vunpack.c.h.b16 %v236
    %v844 = vunpack.c.l.b16 %v237
    %v845 = vunpack.c.l.b16 %v238
    %v846 = vunpack.c.h.b16 %v238
    %v847 = vunpack.c.l.b16 %v239
    %v848 = vunpack.c.l.b16 %v240
    %v849 = vunpack.c.h.b16 %v240
    %v850 = vunpack.c.l.b16 %v241
    %v851 = vunpack.c.l.b16 %v242
    %v852 = vunpack.c.h.b16 %v242
    %v853 = vunpack.c.l.b16 %v243
    %v854 = vunpack.c.l.b16 %v244
    %v855 = vunpack.c.h.b16 %v244
    %v856 = vunpack.c.l.b16 %v245
    %v857 = vunpack.c.l.b16 %v246
    %v858 = vunpack.c.h.b16 %v246
    %v859 = vunpack.c.l.b16 %v247
    %v860 = vunpack.c.l.b16 %v248
    %v861 = vunpack.c.h.b16 %v248
    %v862 = vunpack.c.l.b16 %v249
    %v863 = vunpack.c.l.b16 %v250
    %v864 = vunpack.c.h.b16 %v250
    %v865 = vunpack.c.l.b16 %v251
    %v866 = vunpack.c.l.b16 %v252
    %v867 = vunpack.c.h.b16 %v252
    %v868 = vunpack.c.l.b16 %v253
    %v869 = vunpack.c.l.b16 %v254
    %v870 = vunpack.c.h.b16 %v254
    %v871 = vunpack.c.l.b16 %v255
    %v872 = vunpack.c.l.b16 %v256
    %v873 = vunpack.c.h.b16 %v256
    %v874 = vunpack.c.l.b16 %v257
    %v875 = vunpack.c.l.b16 %v258
    %v876 = vunpack.c.h.b16 %v258
    %v877 = vunpack.c.l.b16 %v259
    %v878 = vunpack.c.l.b16 %v260
    %v879 = vunpack.c.h.b16 %v260
    %v880 = vunpack.c.l.b16 %v261
    %v881 = vunpack.c.l.b16 %v262
    %v882 = vunpack.c.h.b16 %v262
    %v883 = vunpack.c.l.b16 %v263
    %v884 = vunpack.c.l.b16 %v264
    %v885 = vunpack.c.h.b16 %v264
    %v886 = vunpack.c.l.b16 %v265
    %v887 = vunpack.c.l.b16 %v266
    %v888 = vunpack.c.h.b16 %v266
    %v889 = vunpack.c.l.b16 %v267
    %v890 = vunpack.c.l.b16 %v268
    %v891 = vunpack.c.h.b16 %v268
    %v892 = vunpack.c.l.b16 %v269
    %v893 = vunpack.c.l.b16 %v270
    %v894 = vunpack.c.h.b16 %v270
    %v895 = vunpack.c.l.b16 %v271
    %v896 = vunpack.c.l.b16 %v272
    %v897 = vunpack.c.h.b16 %v272
    %v898 = vunpack.c.l.b16 %v273
    %v899 = vunpack.c.l.b16 %v274
    %v900 = vunpack.c.h.b16 %v274
    %v901 = vunpack.c.l.b16 %v275
    %v902 = vunpack.c.l.b16 %v276
    %v903 = vunpack.c.h.b16 %v276
    %v904 = vunpack.c.l.b16 %v277
    %v905 = vunpack.c.l.b16 %v278
    %v906 = vunpack.c.h.b16 %v278
    %v907 = vunpack.c.l.b16 %v279
    %v908 = vunpack.c.l.b16 %v280
    %v909 = vunpack.c.h.b16 %v280
    %v910 = vunpack.c.l.b16 %v281
    %v911 = vunpack.c.l.b16 %v282
    %v912 = vunpack.c.h.b16 %v282
    %v913 = vunpack.c.l.b16 %v283
    %v914 = vunpack.c.l.b16 %v284
    %v915 = vunpack.c.h.b16 %v284
    %v916 = vunpack.c.l.b16 %v285
    %v917 = vunpack.c.l.b16 %v286
    %v918 = vunpack.c.h.b16 %v286
    %v919 = vunpack.c.l.b16 %v287
    %v920 = vunpack.c.l.b16 %v288
    %v921 = vunpack.c.h.b16 %v288
    %v922 = vunpack.c.l.b16 %v289
    %v923 = vunpack.c.l.b16 %v290
    %v924 = vunpack.c.h.b16 %v290
    %v925 = vunpack.c.l.b16 %v291
    %v926 = vunpack.c.l.b16 %v292
    %v927 = vunpack.c.h.b16 %v292
    %v928 = vunpack.c.l.b16 %v293
    %v929 = vunpack.c.l.b16 %v294
    %v930 = vunpack.c.h.b16 %v294
    %v931 = vunpack.c.l.b16 %v295
    %v932 = vunpack.c.l.b16 %v296
    %v933 = vunpack.c.h.b16 %v296
    %v934 = vunpack.c.l.b16 %v297
    %v935 = vunpack.c.l.b16 %v298
    %v936 = vunpack.c.h.b16 %v298
    %v937 = vunpack.c.l.b16 %v299
    %v938 = vunpack.c.l.b16 %v300
    %v939 = vunpack.c.h.b16 %v300
    %v940 = vunpack.c.l.b16 %v301
    %v941 = vunpack.c.l.b16 %v302
    %v942 = vunpack.c.h.b16 %v302
    %v943 = vunpack.c.l.b16 %v303
    %v944 = vunpack.c.l.b16 %v304
    %v945 = vunpack.c.h.b16 %v304
    %v946 = vunpack.c.l.b16 %v305
    %v947 = vunpack.c.l.b16 %v306
    %v948 = vunpack.c.h.b16 %v306
    %v949 = vunpack.c.l.b16 %v307
    %v950 = vunpack.c.l.b16 %v308
    %v951 = vunpack.c.h.b16 %v308
    %v952 = vunpack.c.l.b16 %v309
    %v953 = vunpack.c.l.b16 %v310
    %v954 = vunpack.c.h.b16 %v310
    %v955 = vunpack.c.l.b16 %v311
    %v956 = vunpack.c.l.b16 %v312
    %v957 = vunpack.c.h.b16 %v312
    %v958 = vunpack.c.l.b16 %v313
    %v959 = vunpack.c.l.b16 %v314
    %v960 = vunpack.c.h.b16 %v314
    %v961 = vunpack.c.l.b16 %v315
    %v962 = vunpack.c.l.b16 %v316
    %v963 = vunpack.c.h.b16 %v316
    %v964 = vunpack.c.l.b16 %v317
    %v965 = vunpack.c.l.b16 %v318
    %v966 = vunpack.c.h.b16 %v318
    %v967 = vunpack.c.l.b16 %v319
    %v968 = vunpack.c.l.b16 %v320
    %v969 = vunpack.c.h.b16 %v320
    %v970 = vunpack.c.l.b16 %v321
    %v971 = vunpack.c.l.b16 %v322
    %v972 = vunpack.c.h.b16 %v322
    %v973 = vunpack.c.l.b16 %v323
    %v974 = vunpack.c.l.b16 %v324
    %v975 = vunpack.c.h.b16 %v324
    %v976 = vunpack.c.l.b16 %v325
    %v977 = vunpack.c.l.b16 %v326
    %v978 = vunpack.c.h.b16 %v326
    %v979 = vunpack.c.l.b16 %v327
    %v980 = vunpack.c.l.b16 %v328
    %v981 = vunpack.c.h.b16 %v328
    %v982 = vunpack.c.l.b16 %v329
    %v983 = vunpack.c.l.b16 %v330
    %v984 = vunpack.c.h.b16 %v330
    %v985 = vunpack.c.l.b16 %v331
    %v986 = vunpack.c.l.b16 %v332
    %v987 = vunpack.c.h.b16 %v332
    %v988 = vunpack.c.l.b16 %v333
    %v989 = vunpack.c.l.b16 %v334
    %v990 = vunpack.c.h.b16 %v334
    %v991 = vunpack.c.l.b16 %v335
    %v992 = vunpack.c.l.b16 %v336
    %v993 = vunpack.c.h.b16 %v336
    %v994 = vunpack.c.l.b16 %v337
    %v995 = vpack.c.b16 %v614, %v611
    %v996 = vpack.c.b16 %v615, %v612
    %v997 = vpack.c.b16 %v616, %v613
    %v998 = vpack.c.b16 %v620, %v617
    %v999 = vpack.c.b16 %v621, %v618
    %v1000 = vpack.c.b16 %v622, %v619
    %v1001 = vpack.c.b16 %v626, %v623
    %v1002 = vpack.c.b16 %v627, %v624
    %v1003 = vpack.c.b16 %v628, %v625
    %v1004 = vpack.c.b16 %v632, %v629
    %v1005 = vpack.c.b16 %v633, %v630
    %v1006 = vpack.c.b16 %v634, %v631
    %v1007 = vpack.c.b16 %v638, %v635
    %v1008 = vpack.c.b16 %v639, %v636
    %v1009 = vpack.c.b16 %v640, %v637
    %v1010 = vpack.c.b16 %v644, %v641
    %v1011 = vpack.c.b16 %v645, %v642
    %v1012 = vpack.c.b16 %v646, %v643
    %v1013 = vpack.c.b16 %v650, %v647
    %v1014 = vpack.c.b16 %v651, %v648
    %v1015 = vpack.c.b16 %v652, %v649
    %v1016 = vpack.c.b16 %v656, %v653
    %v1017 = vpack.c.b16 %v657, %v654
    %v1018 = vpack.c.b16 %v658, %v655
    %v1019 = vpack.c.b16 %v662, %v659
    %v1020 = vpack.c.b16 %v663, %v660
    %v1021 = vpack.c.b16 %v664, %v661
    %v1022 = vpack.c.b16 %v668, %v665
    %v1023 = vpack.c.b16 %v669, %v666
    %v1024 = vpack.c.b16 %v670, %v667
    %v1025 = vpack.c.b16 %v674, %v671
    %v1026 = vpack.c.b16 %v675, %v672
    %v1027 = vpack.c.b16 %v676, %v673
    %v1028 = vpack.c.b16 %v680, %v677
    %v1029 = vpack.c.b16 %v681, %v678
    %v1030 = vpack.c.b16 %v682, %v679
    %v1031 = vpack.c.b16 %v686, %v683
    %v1032 = vpack.c.b16 %v687, %v684
    %v1033 = vpack.c.b16 %v688, %v685
    %v1034 = vpack.c.b16 %v692, %v689
    %v1035 = vpack.c.b16 %v693, %v690
    %v1036 = vpack.c.b16 %v694, %v691
    %v1037 = vpack.c.b16 %v698, %v695
    %v1038 = vpack.c.b16 %v699, %v696
    %v1039 = vpack.c.b16 %v700, %v697
    %v1040 = vpack.c.b16 %v704, %v701
    %v1041 = vpack.c.b16 %v705, %v702
    %v1042 = vpack.c.b16 %v706, %v703
    %v1043 = vpack.c.b16 %v710, %v707
    %v1044 = vpack.c.b16 %v711, %v708
    %v1045 = vpack.c.b16 %v712, %v709
    %v1046 = vpack.c.b16 %v716, %v713
    %v1047 = vpack.c.b16 %v717, %v714
    %v1048 = vpack.c.b16 %v718, %v715
    %v1049 = vpack.c.b16 %v722, %v719
    %v1050 = vpack.c.b16 %v723, %v720
    %v1051 = vpack.c.b16 %v724, %v721
    %v1052 = vpack.c.b16 %v728, %v725
    %v1053 = vpack.c.b16 %v729, %v726
    %v1054 = vpack.c.b16 %v730, %v727
    %v1055 = vpack.c.b16 %v734, %v731
    %v1056 = vpack.c.b16 %v735, %v732
    %v1057 = vpack.c.b16 %v736, %v733
    %v1058 = vpack.c.b16 %v740, %v737
    %v1059 = vpack.c.b16 %v741, %v738
    %v1060 = vpack.c.b16 %v742, %v739
    %v1061 = vpack.c.b16 %v746, %v743
    %v1062 = vpack.c.b16 %v747, %v744
    %v1063 = vpack.c.b16 %v748, %v745
    %v1064 = vpack.c.b16 %v752, %v749
    %v1065 = vpack.c.b16 %v753, %v750
    %v1066 = vpack.c.b16 %v754, %v751
    %v1067 = vpack.c.b16 %v758, %v755
    %v1068 = vpack.c.b16 %v759, %v756
    %v1069 = vpack.c.b16 %v760, %v757
    %v1070 = vpack.c.b16 %v764, %v761
    %v1071 = vpack.c.b16 %v765, %v762
    %v1072 = vpack.c.b16 %v766, %v763
    %v1073 = vpack.c.b16 %v770, %v767
    %v1074 = vpack.c.b16 %v771, %v768
    %v1075 = vpack.c.b16 %v772, %v769
    %v1076 = vpack.c.b16 %v776, %v773
    %v1077 = vpack.c.b16 %v777, %v774
    %v1078 = vpack.c.b16 %v778, %v775
    %v1079 = vpack.c.b16 %v782, %v779
    %v1080 = vpack.c.b16 %v783, %v780
    %v1081 = vpack.c.b16 %v784, %v781
    %v1082 = vpack.c.b16 %v788, %v785
    %v1083 = vpack.c.b16 %v789, %v786
    %v1084 = vpack.c.b16 %v790, %v787
    %v1085 = vpack.c.b16 %v794, %v791
    %v1086 = vpack.c.b16 %v795, %v792
    %v1087 = vpack.c.b16 %v796, %v793
    %v1088 = vpack.c.b16 %v800, %v797
    %v1089 = vpack.c.b16 %v801, %v798
    %v1090 = vpack.c.b16 %v802, %v799
    %v1091 = vpack.c.b16 %v806, %v803
    %v1092 = vpack.c.b16 %v807, %v804
    %v1093 = vpack.c.b16 %v808, %v805
    %v1094 = vpack.c.b16 %v812, %v809
    %v1095 = vpack.c.b16 %v813, %v810
    %v1096 = vpack.c.b16 %v814, %v811
    %v1097 = vpack.c.b16 %v818, %v815
    %v1098 = vpack.c.b16 %v819, %v816
    %v1099 = vpack.c.b16 %v820, %v817
    %v1100 = vpack.c.b16 %v824, %v821
    %v1101 = vpack.c.b16 %v825, %v822
    %v1102 = vpack.c.b16 %v826, %v823
    %v1103 = vpack.c.b16 %v830, %v827
    %v1104 = vpack.c.b16 %v831, %v828
    %v1105 = vpack.c.b16 %v832, %v829
    %v1106 = vpack.c.b16 %v836, %v833
    %v1107 = vpack.c.b16 %v837, %v834
    %v1108 = vpack.c.b16 %v838, %v835
    %v1109 = vpack.c.b16 %v842, %v839
    %v1110 = vpack.c.b16 %v843, %v840
    %v1111 = vpack.c.b16 %v844, %v841
    %v1112 = vpack.c.b16 %v848, %v845
    %v1113 = vpack.c.b16 %v849, %v846
    %v1114 = vpack.c.b16 %v850, %v847
    %v1115 = vpack.c.b16 %v854, %v851
    %v1116 = vpack.c.b16 %v855, %v852
    %v1117 = vpack.c.b16 %v856, %v853
    %v1118 = vpack.c.b16 %v860, %v857
    %v1119 = vpack.c.b16 %v861, %v858
    %v1120 = vpack.c.b16 %v862, %v859
    %v1121 = vpack.c.b16 %v866, %v863
    %v1122 = vpack.c.b16 %v867, %v864
    %v1123 = vpack.c.b16 %v868, %v865
    %v1124 = vpack.c.b16 %v872, %v869
    %v1125 = vpack.c.b16 %v873, %v870
    %v1126 = vpack.c.b16 %v874, %v871
    %v1127 = vpack.c.b16 %v878, %v875
    %v1128 = vpack.c.b16 %v879, %v876
    %v1129 = vpack.c.b16 %v880, %v877
    %v1130 = vpack.c.b16 %v884, %v881
    %v1131 = vpack.c.b16 %v885, %v882
    %v1132 = vpack.c.b16 %v886, %v883
    %v1133 = vpack.c.b16 %v890, %v887
    %v1134 = vpack.c.b16 %v891, %v888
    %v1135 = vpack.c.b16 %v892, %v889
    %v1136 = vpack.c.b16 %v896, %v893
    %v1137 = vpack.c.b16 %v897, %v894
    %v1138 = vpack.c.b16 %v898, %v895
    %v1139 = vpack.c.b16 %v902, %v899
    %v1140 = vpack.c.b16 %v903, %v900
    %v1141 = vpack.c.b16 %v904, %v901
    %v1142 = vpack.c.b16 %v908, %v905
    %v1143 = vpack.c.b16 %v909, %v906
    %v1144 = vpack.c.b16 %v910, %v907
    %v1145 = vpack.c.b16 %v914, %v911
    %v1146 = vpack.c.b16 %v915, %v912
    %v1147 = vpack.c.b16 %v916, %v913
    %v1148 = vpack.c.b16 %v920, %v917
    %v1149 = vpack.c.b16 %v921, %v918
    %v1150 = vpack.c.b16 %v922, %v919
    %v1151 = vpack.c.b16 %v926, %v923
    %v1152 = vpack.c.b16 %v927, %v924
    %v1153 = vpack.c.b16 %v928, %v925
    %v1154 = vpack.c.b16 %v932, %v929
    %v1155 = vpack.c.b16 %v933, %v930
    %v1156 = vpack.c.b16 %v934, %v931
    %v1157 = vpack.c.b16 %v938, %v935
    %v1158 = vpack.c.b16 %v939, %v936
    %v1159 = vpack.c.b16 %v940, %v937
    %v1160 = vpack.c.b16 %v944, %v941
    %v1161 = vpack.c.b16 %v945, %v942
    %v1162 = vpack.c.b16 %v946, %v943
    %v1163 = vpack.c.b16 %v950, %v947
    %v1164 = vpack.c.b16 %v951, %v948
    %v1165 = vpack.c.b16 %v952, %v949
    %v1166 = vpack.c.b16 %v956, %v953
    %v1167 = vpack.c.b16 %v957, %v954
    %v1168 = vpack.c.b16 %v958, %v955
    %v1169 = vpack.c.b16 %v962, %v959
    %v1170 = vpack.c.b16 %v963, %v960
    %v1171 = vpack.c.b16 %v964, %v961
    %v1172 = vpack.c.b16 %v968, %v965
    %v1173 = vpack.c.b16 %v969, %v966
    %v1174 = vpack.c.b16 %v970, %v967
    %v1175 = vpack.c.b16 %v974, %v971
    %v1176 = vpack.c.b16 %v975, %v972
    %v1177 = vpack.c.b16 %v976, %v973
    %v1178 = vpack.c.b16 %v980, %v977
    %v1179 = vpack.c.b16 %v981, %v978
    %v1180 = vpack.c.b16 %v982, %v979
    %v1181 = vpack.c.b16 %v986, %v983
    %v1182 = vpack.c.b16 %v987, %v984
    %v1183 = vpack.c.b16 %v988, %v985
    %v1184 = vpack.c.b16 %v992, %v989
    %v1185 = vpack.c.b16 %v993, %v990
    %v1186 = vpack.c.b16 %v994, %v991
    %1379 = vmatprep.subr.bf16.mxu0 %v996
    %1380 = vmatpush1.bf16.msra.mxu0 %v995
    %1381 = vmatprep.subr.bf16.mxu0 %v999
    %1382 = vmatpush1.bf16.msra.mxu0 %v998
    %1383 = vmatprep.subr.bf16.mxu0 %v1002
    %1384 = vmatpush1.bf16.msra.mxu0 %v1001
    %1385 = vmatprep.subr.bf16.mxu0 %v1005
    %1386 = vmatpush1.bf16.msra.mxu0 %v1004
    %1387 = vmatprep.subr.bf16.mxu0 %v1008
    %1388 = vmatpush1.bf16.msra.mxu0 %v1007
    %1389 = vmatprep.subr.bf16.mxu0 %v1011
    %1390 = vmatpush1.bf16.msra.mxu0 %v1010
    %1391 = vmatprep.subr.bf16.mxu0 %v1014
    %1392 = vmatpush1.bf16.msra.mxu0 %v1013
    %1393 = vmatprep.subr.bf16.mxu0 %v1017
    %1394 = vmatpush1.bf16.msra.mxu0 %v1016
    %1395 = vmatprep.subr.bf16.mxu0 %v1020
    %1396 = vmatpush1.bf16.msra.mxu0 %v1019
    %1397 = vmatprep.subr.bf16.mxu0 %v1023
    %1398 = vmatpush1.bf16.msra.mxu0 %v1022
    %1399 = vmatprep.subr.bf16.mxu0 %v1026
    %1400 = vmatpush1.bf16.msra.mxu0 %v1025
    %1401 = vmatprep.subr.bf16.mxu0 %v1029
    %1402 = vmatpush1.bf16.msra.mxu0 %v1028
    %1403 = vmatprep.subr.bf16.mxu0 %v1032
    %1404 = vmatpush1.bf16.msra.mxu0 %v1031
    %1405 = vmatprep.subr.bf16.mxu0 %v1035
    %1406 = vmatpush1.bf16.msra.mxu0 %v1034
    %1407 = vmatprep.subr.bf16.mxu0 %v1038
    %1408 = vmatpush1.bf16.msra.mxu0 %v1037
    %1409 = vmatprep.subr.bf16.mxu0 %v1041
    %1410 = vmatpush1.bf16.msra.mxu0 %v1040
    %1411 = vmatprep.mubr.bf16.mxu0 %v75
    %1412 = vmatmul.mubr.bf16.gmra.mrb[0].mxu0 %v74
    %v1413 = vpop.f32.mrb[0].mxu0
    %v1414 = vadd.f32 %v343, %v1413
    %v1415 = vpop.f32.mrb[0].mxu0
    %v1416 = vadd.f32 %v347, %v1415
    %v1417 = vpop.f32.mrb[0].mxu0
    %v1418 = vpop.f32.mrb[0].mxu0
    %1419 = vdwg.mxu0
    %1420 = vmatprep.subr.bf16.mxu0 %v1044
    %1421 = vmatpush1.bf16.msra.mxu0 %v1043
    %1422 = vmatprep.subr.bf16.mxu0 %v1047
    %1423 = vmatpush1.bf16.msra.mxu0 %v1046
    %1424 = vmatprep.subr.bf16.mxu0 %v1050
    %1425 = vmatpush1.bf16.msra.mxu0 %v1049
    %1426 = vmatprep.subr.bf16.mxu0 %v1053
    %1427 = vmatpush1.bf16.msra.mxu0 %v1052
    %1428 = vmatprep.subr.bf16.mxu0 %v1056
    %1429 = vmatpush1.bf16.msra.mxu0 %v1055
    %1430 = vmatprep.subr.bf16.mxu0 %v1059
    %1431 = vmatpush1.bf16.msra.mxu0 %v1058
    %1432 = vmatprep.subr.bf16.mxu0 %v1062
    %1433 = vmatpush1.bf16.msra.mxu0 %v1061
    %1434 = vmatprep.subr.bf16.mxu0 %v1065
    %1435 = vmatpush1.bf16.msra.mxu0 %v1064
    %1436 = vmatprep.subr.bf16.mxu0 %v1068
    %1437 = vmatpush1.bf16.msra.mxu0 %v1067
    %1438 = vmatprep.subr.bf16.mxu0 %v1071
    %1439 = vmatpush1.bf16.msra.mxu0 %v1070
    %1440 = vmatprep.subr.bf16.mxu0 %v1074
    %1441 = vmatpush1.bf16.msra.mxu0 %v1073
    %1442 = vmatprep.subr.bf16.mxu0 %v1077
    %1443 = vmatpush1.bf16.msra.mxu0 %v1076
    %1444 = vmatprep.subr.bf16.mxu0 %v1080
    %1445 = vmatpush1.bf16.msra.mxu0 %v1079
    %1446 = vmatprep.subr.bf16.mxu0 %v1083
    %1447 = vmatpush1.bf16.msra.mxu0 %v1082
    %1448 = vmatprep.subr.bf16.mxu0 %v1086
    %1449 = vmatpush1.bf16.msra.mxu0 %v1085
    %1450 = vmatprep.subr.bf16.mxu0 %v1089
    %1451 = vmatpush1.bf16.msra.mxu0 %v1088
    %1452 = vmatprep.mubr.bf16.mxu0 %v77
    %1453 = vmatmul.mubr.bf16.gmra.mrb[0].mxu0 %v76
    %v1454 = vpop.f32.mrb[0].mxu0
    %v1455 = vadd.f32 %v1414, %v1454
    %v1456 = vpop.f32.mrb[0].mxu0
    %v1457 = vadd.f32 %v1416, %v1456
    %v1458 = vpop.f32.mrb[0].mxu0
    %v1459 = vpop.f32.mrb[0].mxu0
    %1460 = vdwg.mxu0
    %1461 = vmatprep.subr.bf16.mxu0 %v1092
    %1462 = vmatpush1.bf16.msra.mxu0 %v1091
    %1463 = vmatprep.subr.bf16.mxu0 %v1095
    %1464 = vmatpush1.bf16.msra.mxu0 %v1094
    %1465 = vmatprep.subr.bf16.mxu0 %v1098
    %1466 = vmatpush1.bf16.msra.mxu0 %v1097
    %1467 = vmatprep.subr.bf16.mxu0 %v1101
    %1468 = vmatpush1.bf16.msra.mxu0 %v1100
    %1469 = vmatprep.subr.bf16.mxu0 %v1104
    %1470 = vmatpush1.bf16.msra.mxu0 %v1103
    %1471 = vmatprep.subr.bf16.mxu0 %v1107
    %1472 = vmatpush1.bf16.msra.mxu0 %v1106
    %1473 = vmatprep.subr.bf16.mxu0 %v1110
    %1474 = vmatpush1.bf16.msra.mxu0 %v1109
    %1475 = vmatprep.subr.bf16.mxu0 %v1113
    %1476 = vmatpush1.bf16.msra.mxu0 %v1112
    %1477 = vmatprep.subr.bf16.mxu0 %v1116
    %1478 = vmatpush1.bf16.msra.mxu0 %v1115
    %1479 = vmatprep.subr.bf16.mxu0 %v1119
    %1480 = vmatpush1.bf16.msra.mxu0 %v1118
    %1481 = vmatprep.subr.bf16.mxu0 %v1122
    %1482 = vmatpush1.bf16.msra.mxu0 %v1121
    %1483 = vmatprep.subr.bf16.mxu0 %v1125
    %1484 = vmatpush1.bf16.msra.mxu0 %v1124
    %1485 = vmatprep.subr.bf16.mxu0 %v1128
    %1486 = vmatpush1.bf16.msra.mxu0 %v1127
    %1487 = vmatprep.subr.bf16.mxu0 %v1131
    %1488 = vmatpush1.bf16.msra.mxu0 %v1130
    %1489 = vmatprep.subr.bf16.mxu0 %v1134
    %1490 = vmatpush1.bf16.msra.mxu0 %v1133
    %1491 = vmatprep.subr.bf16.mxu0 %v1137
    %1492 = vmatpush1.bf16.msra.mxu0 %v1136
    %1493 = vmatprep.mubr.bf16.mxu0 %v79
    %1494 = vmatmul.mubr.bf16.gmra.mrb[0].mxu0 %v78
    %v1495 = vpop.f32.mrb[0].mxu0
    %v1496 = vadd.f32 %v1455, %v1495
    %v1497 = vpop.f32.mrb[0].mxu0
    %v1498 = vadd.f32 %v1457, %v1497
    %v1499 = vpop.f32.mrb[0].mxu0
    %v1500 = vpop.f32.mrb[0].mxu0
    %1501 = vdwg.mxu0
    %1502 = vmatprep.subr.bf16.mxu0 %v1140
    %1503 = vmatpush1.bf16.msra.mxu0 %v1139
    %1504 = vmatprep.subr.bf16.mxu0 %v1143
    %1505 = vmatpush1.bf16.msra.mxu0 %v1142
    %1506 = vmatprep.subr.bf16.mxu0 %v1146
    %1507 = vmatpush1.bf16.msra.mxu0 %v1145
    %1508 = vmatprep.subr.bf16.mxu0 %v1149
    %1509 = vmatpush1.bf16.msra.mxu0 %v1148
    %1510 = vmatprep.subr.bf16.mxu0 %v1152
    %1511 = vmatpush1.bf16.msra.mxu0 %v1151
    %1512 = vmatprep.subr.bf16.mxu0 %v1155
    %1513 = vmatpush1.bf16.msra.mxu0 %v1154
    %1514 = vmatprep.subr.bf16.mxu0 %v1158
    %1515 = vmatpush1.bf16.msra.mxu0 %v1157
    %1516 = vmatprep.subr.bf16.mxu0 %v1161
    %1517 = vmatpush1.bf16.msra.mxu0 %v1160
    %1518 = vmatprep.subr.bf16.mxu0 %v1164
    %1519 = vmatpush1.bf16.msra.mxu0 %v1163
    %1520 = vmatprep.subr.bf16.mxu0 %v1167
    %1521 = vmatpush1.bf16.msra.mxu0 %v1166
    %1522 = vmatprep.subr.bf16.mxu0 %v1170
    %1523 = vmatpush1.bf16.msra.mxu0 %v1169
    %1524 = vmatprep.subr.bf16.mxu0 %v1173
    %1525 = vmatpush1.bf16.msra.mxu0 %v1172
    %1526 = vmatprep.subr.bf16.mxu0 %v1176
    %1527 = vmatpush1.bf16.msra.mxu0 %v1175
    %1528 = vmatprep.subr.bf16.mxu0 %v1179
    %1529 = vmatpush1.bf16.msra.mxu0 %v1178
    %1530 = vmatprep.subr.bf16.mxu0 %v1182
    %1531 = vmatpush1.bf16.msra.mxu0 %v1181
    %1532 = vmatprep.subr.bf16.mxu0 %v1185
    %1533 = vmatpush1.bf16.msra.mxu0 %v1184
    %1534 = vmatprep.mubr.bf16.mxu0 %v81
    %1535 = vmatmul.mubr.bf16.gmra.mrb[0].mxu0 %v80
    %v1536 = vpop.f32.mrb[0].mxu0
    %v1537 = vadd.f32 %v1496, %v1536
    %v1538 = vpop.f32.mrb[0].mxu0
    %v1539 = vadd.f32 %v1498, %v1538
    %v1540 = vpop.f32.mrb[0].mxu0
    %v1541 = vpop.f32.mrb[0].mxu0
    %1542 = vdwg.mxu0
    %1543 = vmatprep.subr.bf16.mxu0 0
    %1544 = vmatpush1.bf16.msra.mxu0 %v997
    %1545 = vmatprep.subr.bf16.mxu0 0
    %1546 = vmatpush1.bf16.msra.mxu0 %v1000
    %1547 = vmatprep.subr.bf16.mxu0 0
    %1548 = vmatpush1.bf16.msra.mxu0 %v1003
    %1549 = vmatprep.subr.bf16.mxu0 0
    %1550 = vmatpush1.bf16.msra.mxu0 %v1006
    %1551 = vmatprep.subr.bf16.mxu0 0
    %1552 = vmatpush1.bf16.msra.mxu0 %v1009
    %1553 = vmatprep.subr.bf16.mxu0 0
    %1554 = vmatpush1.bf16.msra.mxu0 %v1012
    %1555 = vmatprep.subr.bf16.mxu0 0
    %1556 = vmatpush1.bf16.msra.mxu0 %v1015
    %1557 = vmatprep.subr.bf16.mxu0 0
    %1558 = vmatpush1.bf16.msra.mxu0 %v1018
    %1559 = vmatprep.subr.bf16.mxu0 0
    %1560 = vmatpush1.bf16.msra.mxu0 %v1021
    %1561 = vmatprep.subr.bf16.mxu0 0
    %1562 = vmatpush1.bf16.msra.mxu0 %v1024
    %1563 = vmatprep.subr.bf16.mxu0 0
    %1564 = vmatpush1.bf16.msra.mxu0 %v1027
    %1565 = vmatprep.subr.bf16.mxu0 0
    %1566 = vmatpush1.bf16.msra.mxu0 %v1030
    %1567 = vmatprep.subr.bf16.mxu0 0
    %1568 = vmatpush1.bf16.msra.mxu0 %v1033
    %1569 = vmatprep.subr.bf16.mxu0 0
    %1570 = vmatpush1.bf16.msra.mxu0 %v1036
    %1571 = vmatprep.subr.bf16.mxu0 0
    %1572 = vmatpush1.bf16.msra.mxu0 %v1039
    %1573 = vmatprep.subr.bf16.mxu0 0
    %1574 = vmatpush1.bf16.msra.mxu0 %v1042
    %1575 = vmatprep.mubr.bf16.mxu0 %v75
    %1576 = vmatmul.mubr.bf16.gmra.mrb[0].mxu0 %v74
    %v1577 = vpop.f32.mrb[0].mxu0
    %v1578 = vadd.f32 %v351, %v1577
    %v1579 = vpop.f32.mrb[0].mxu0
    %v1580 = vpop.f32.mrb[0].mxu0
    %v1581 = vpop.f32.mrb[0].mxu0
    %1582 = vdwg.mxu0
    %1583 = vmatprep.subr.bf16.mxu0 0
    %1584 = vmatpush1.bf16.msra.mxu0 %v1045
    %1585 = vmatprep.subr.bf16.mxu0 0
    %1586 = vmatpush1.bf16.msra.mxu0 %v1048
    %1587 = vmatprep.subr.bf16.mxu0 0
    %1588 = vmatpush1.bf16.msra.mxu0 %v1051
    %1589 = vmatprep.subr.bf16.mxu0 0
    %1590 = vmatpush1.bf16.msra.mxu0 %v1054
    %1591 = vmatprep.subr.bf16.mxu0 0
    %1592 = vmatpush1.bf16.msra.mxu0 %v1057
    %1593 = vmatprep.subr.bf16.mxu0 0
    %1594 = vmatpush1.bf16.msra.mxu0 %v1060
    %1595 = vmatprep.subr.bf16.mxu0 0
    %1596 = vmatpush1.bf16.msra.mxu0 %v1063
    %1597 = vmatprep.subr.bf16.mxu0 0
    %1598 = vmatpush1.bf16.msra.mxu0 %v1066
    %1599 = vmatprep.subr.bf16.mxu0 0
    %1600 = vmatpush1.bf16.msra.mxu0 %v1069
    %1601 = vmatprep.subr.bf16.mxu0 0
    %1602 = vmatpush1.bf16.msra.mxu0 %v1072
    %1603 = vmatprep.subr.bf16.mxu0 0
    %1604 = vmatpush1.bf16.msra.mxu0 %v1075
    %1605 = vmatprep.subr.bf16.mxu0 0
    %1606 = vmatpush1.bf16.msra.mxu0 %v1078
    %1607 = vmatprep.subr.bf16.mxu0 0
    %1608 = vmatpush1.bf16.msra.mxu0 %v1081
    %1609 = vmatprep.subr.bf16.mxu0 0
    %1610 = vmatpush1.bf16.msra.mxu0 %v1084
    %1611 = vmatprep.subr.bf16.mxu0 0
    %1612 = vmatpush1.bf16.msra.mxu0 %v1087
    %1613 = vmatprep.subr.bf16.mxu0 0
    %1614 = vmatpush1.bf16.msra.mxu0 %v1090
    %1615 = vmatprep.mubr.bf16.mxu0 %v77
    %1616 = vmatmul.mubr.bf16.gmra.mrb[0].mxu0 %v76
    %v1617 = vpop.f32.mrb[0].mxu0
    %v1618 = vadd.f32 %v1578, %v1617
    %v1619 = vpop.f32.mrb[0].mxu0
    %v1620 = vpop.f32.mrb[0].mxu0
    %v1621 = vpop.f32.mrb[0].mxu0
    %1622 = vdwg.mxu0
    %1623 = vmatprep.subr.bf16.mxu0 0
    %1624 = vmatpush1.bf16.msra.mxu0 %v1093
    %1625 = vmatprep.subr.bf16.mxu0 0
    %1626 = vmatpush1.bf16.msra.mxu0 %v1096
    %1627 = vmatprep.subr.bf16.mxu0 0
    %1628 = vmatpush1.bf16.msra.mxu0 %v1099
    %1629 = vmatprep.subr.bf16.mxu0 0
    %1630 = vmatpush1.bf16.msra.mxu0 %v1102
    %1631 = vmatprep.subr.bf16.mxu0 0
    %1632 = vmatpush1.bf16.msra.mxu0 %v1105
    %1633 = vmatprep.subr.bf16.mxu0 0
    %1634 = vmatpush1.bf16.msra.mxu0 %v1108
    %1635 = vmatprep.subr.bf16.mxu0 0
    %1636 = vmatpush1.bf16.msra.mxu0 %v1111
    %1637 = vmatprep.subr.bf16.mxu0 0
    %1638 = vmatpush1.bf16.msra.mxu0 %v1114
    %1639 = vmatprep.subr.bf16.mxu0 0
    %1640 = vmatpush1.bf16.msra.mxu0 %v1117
    %1641 = vmatprep.subr.bf16.mxu0 0
    %1642 = vmatpush1.bf16.msra.mxu0 %v1120
    %1643 = vmatprep.subr.bf16.mxu0 0
    %1644 = vmatpush1.bf16.msra.mxu0 %v1123
    %1645 = vmatprep.subr.bf16.mxu0 0
    %1646 = vmatpush1.bf16.msra.mxu0 %v1126
    %1647 = vmatprep.subr.bf16.mxu0 0
    %1648 = vmatpush1.bf16.msra.mxu0 %v1129
    %1649 = vmatprep.subr.bf16.mxu0 0
    %1650 = vmatpush1.bf16.msra.mxu0 %v1132
    %1651 = vmatprep.subr.bf16.mxu0 0
    %1652 = vmatpush1.bf16.msra.mxu0 %v1135
    %1653 = vmatprep.subr.bf16.mxu0 0
    %1654 = vmatpush1.bf16.msra.mxu0 %v1138
    %1655 = vmatprep.mubr.bf16.mxu0 %v79
    %1656 = vmatmul.mubr.bf16.gmra.mrb[0].mxu0 %v78
    %v1657 = vpop.f32.mrb[0].mxu0
    %v1658 = vadd.f32 %v1618, %v1657
    %v1659 = vpop.f32.mrb[0].mxu0
    %v1660 = vpop.f32.mrb[0].mxu0
    %v1661 = vpop.f32.mrb[0].mxu0
    %1662 = vdwg.mxu0
    %1663 = vmatprep.subr.bf16.mxu0 0
    %1664 = vmatpush1.bf16.msra.mxu0 %v1141
    %1665 = vmatprep.subr.bf16.mxu0 0
    %1666 = vmatpush1.bf16.msra.mxu0 %v1144
    %1667 = vmatprep.subr.bf16.mxu0 0
    %1668 = vmatpush1.bf16.msra.mxu0 %v1147
    %1669 = vmatprep.subr.bf16.mxu0 0
    %1670 = vmatpush1.bf16.msra.mxu0 %v1150
    %1671 = vmatprep.subr.bf16.mxu0 0
    %1672 = vmatpush1.bf16.msra.mxu0 %v1153
    %1673 = vmatprep.subr.bf16.mxu0 0
    %1674 = vmatpush1.bf16.msra.mxu0 %v1156
    %1675 = vmatprep.subr.bf16.mxu0 0
    %1676 = vmatpush1.bf16.msra.mxu0 %v1159
    %1677 = vmatprep.subr.bf16.mxu0 0
    %1678 = vmatpush1.bf16.msra.mxu0 %v1162
    %1679 = vmatprep.subr.bf16.mxu0 0
    %1680 = vmatpush1.bf16.msra.mxu0 %v1165
    %1681 = vmatprep.subr.bf16.mxu0 0
    %1682 = vmatpush1.bf16.msra.mxu0 %v1168
    %1683 = vmatprep.subr.bf16.mxu0 0
    %1684 = vmatpush1.bf16.msra.mxu0 %v1171
    %1685 = vmatprep.subr.bf16.mxu0 0
    %1686 = vmatpush1.bf16.msra.mxu0 %v1174
    %1687 = vmatprep.subr.bf16.mxu0 0
    %1688 = vmatpush1.bf16.msra.mxu0 %v1177
    %1689 = vmatprep.subr.bf16.mxu0 0
    %1690 = vmatpush1.bf16.msra.mxu0 %v1180
    %1691 = vmatprep.subr.bf16.mxu0 0
    %1692 = vmatpush1.bf16.msra.mxu0 %v1183
    %1693 = vmatprep.subr.bf16.mxu0 0
    %1694 = vmatpush1.bf16.msra.mxu0 %v1186
    %1695 = vmatprep.mubr.bf16.mxu0 %v81
    %1696 = vmatmul.mubr.bf16.gmra.mrb[0].mxu0 %v80
    %v1697 = vpop.f32.mrb[0].mxu0
    %v1698 = vadd.f32 %v1658, %v1697
    %v1699 = vpop.f32.mrb[0].mxu0
    %v1700 = vpop.f32.mrb[0].mxu0
    %v1701 = vpop.f32.mrb[0].mxu0
    %1702 = vdwg.mxu0
    %v1703 = vmax.f32 %v1537, 0.0
    %v1704 = vmax.f32 %v1539, 0.0
    %v1705 = vmax.f32 %v1698, 0.0
    %v1706 = vpack.c.bf16 %v1703, %v1703
    %v1707 = vpack.c.bf16 %v1704, %v1704
    %v1708 = vpack.c.bf16 %v1705, %v1705
    %v1709 = vld [vmem:[%s3] sm:$0xff]
    %v1710 = vld [vmem:[%s3 + $0x8] sm:$0xff]
    %v1711 = vld [vmem:[%s3 + $0x10] sm:$0xff]
    %v1712 = vld [vmem:[%s3 + $0x18] sm:$0xff]
    %v1713 = vld [vmem:[%s3 + $0x20] sm:$0xff]
    %v1714 = vld [vmem:[%s3 + $0x28] sm:$0xff]
    %v1715 = vld [vmem:[%s3 + $0x30] sm:$0xff]
    %v1716 = vld [vmem:[%s3 + $0x38] sm:$0xff]
    %v1717 = vld [vmem:[%s3 + $0x40] sm:$0xff]
    %v1718 = vld [vmem:[%s3 + $0x48] sm:$0xff]
    %v1719 = vld [vmem:[%s3 + $0x50] sm:$0xff]
    %v1720 = vld [vmem:[%s3 + $0x58] sm:$0xff]
    %v1721 = vld [vmem:[%s3 + $0x60] sm:$0xff]
    %v1722 = vld [vmem:[%s3 + $0x68] sm:$0xff]
    %v1723 = vld [vmem:[%s3 + $0x70] sm:$0xff]
    %v1724 = vld [vmem:[%s3 + $0x78] sm:$0xff]
    %v1725 = vld [vmem:[%s3 + $0x80] sm:$0xff]
    %v1726 = vld [vmem:[%s3 + $0x88] sm:$0xff]
    %v1727 = vld [vmem:[%s3 + $0x90] sm:$0xff]
    %v1728 = vld [vmem:[%s3 + $0x98] sm:$0xff]
    %v1729 = vld [vmem:[%s3 + $0xa0] sm:$0xff]
    %v1730 = vld [vmem:[%s3 + $0xa8] sm:$0xff]
    %v1731 = vld [vmem:[%s3 + $0xb0] sm:$0xff]
    %v1732 = vld [vmem:[%s3 + $0xb8] sm:$0xff]
    %v1733 = vld [vmem:[%s3 + $0xc0] sm:$0xff]
    %v1734 = vld [vmem:[%s3 + $0xc8] sm:$0xff]
    %v1735 = vld [vmem:[%s3 + $0xd0] sm:$0xff]
    %v1736 = vld [vmem:[%s3 + $0xd8] sm:$0xff]
    %v1737 = vld [vmem:[%s3 + $0xe0] sm:$0xff]
    %v1738 = vld [vmem:[%s3 + $0xe8] sm:$0xff]
    %v1739 = vld [vmem:[%s3 + $0xf0] sm:$0xff]
    %v1740 = vld [vmem:[%s3 + $0xf8] sm:$0xff]
    %v1741 = vld [vmem:[%s3 + $0x100] sm:$0xff]
    %v1742 = vld [vmem:[%s3 + $0x108] sm:$0xff]
    %v1743 = vld [vmem:[%s3 + $0x110] sm:$0xff]
    %v1744 = vld [vmem:[%s3 + $0x118] sm:$0xff]
    %v1745 = vld [vmem:[%s3 + $0x120] sm:$0xff]
    %v1746 = vld [vmem:[%s3 + $0x128] sm:$0xff]
    %v1747 = vld [vmem:[%s3 + $0x130] sm:$0xff]
    %v1748 = vld [vmem:[%s3 + $0x138] sm:$0xff]
    %v1749 = vld [vmem:[%s3 + $0x140] sm:$0xff]
    %v1750 = vld [vmem:[%s3 + $0x148] sm:$0xff]
    %v1751 = vld [vmem:[%s3 + $0x150] sm:$0xff]
    %v1752 = vld [vmem:[%s3 + $0x158] sm:$0xff]
    %v1753 = vld [vmem:[%s3 + $0x160] sm:$0xff]
    %v1754 = vld [vmem:[%s3 + $0x168] sm:$0xff]
    %v1755 = vld [vmem:[%s3 + $0x170] sm:$0xff]
    %v1756 = vld [vmem:[%s3 + $0x178] sm:$0xff]
    %v1757 = vld [vmem:[%s4] sm:$0x3]
    %v1759 = vlaneseq
    %v1760 = vshrl.u32 %v1759, 7
    %v1761 = vsub.s32 0, %v1760
    %v1762 = vrot.slane %v1757, %v1761
    %v1763 = vlaneseq
    %v1764 = vshrl.u32 %v1763, 7
    %v1765 = vsub.s32 1, %v1764
    %v1766 = vrot.slane %v1757, %v1765
    %v1817 = vunpack.c.l.b16 %v1709
    %v1818 = vunpack.c.h.b16 %v1709
    %v1819 = vunpack.c.l.b16 %v1710
    %v1820 = vunpack.c.h.b16 %v1710
    %v1821 = vunpack.c.l.b16 %v1711
    %v1822 = vunpack.c.h.b16 %v1711
    %v1823 = vunpack.c.l.b16 %v1712
    %v1824 = vunpack.c.h.b16 %v1712
    %v1825 = vunpack.c.l.b16 %v1713
    %v1826 = vunpack.c.h.b16 %v1713
    %v1827 = vunpack.c.l.b16 %v1714
    %v1828 = vunpack.c.h.b16 %v1714
    %v1829 = vunpack.c.l.b16 %v1715
    %v1830 = vunpack.c.h.b16 %v1715
    %v1831 = vunpack.c.l.b16 %v1716
    %v1832 = vunpack.c.h.b16 %v1716
    %v1833 = vunpack.c.l.b16 %v1717
    %v1834 = vunpack.c.h.b16 %v1717
    %v1835 = vunpack.c.l.b16 %v1718
    %v1836 = vunpack.c.h.b16 %v1718
    %v1837 = vunpack.c.l.b16 %v1719
    %v1838 = vunpack.c.h.b16 %v1719
    %v1839 = vunpack.c.l.b16 %v1720
    %v1840 = vunpack.c.h.b16 %v1720
    %v1841 = vunpack.c.l.b16 %v1721
    %v1842 = vunpack.c.h.b16 %v1721
    %v1843 = vunpack.c.l.b16 %v1722
    %v1844 = vunpack.c.h.b16 %v1722
    %v1845 = vunpack.c.l.b16 %v1723
    %v1846 = vunpack.c.h.b16 %v1723
    %v1847 = vunpack.c.l.b16 %v1724
    %v1848 = vunpack.c.h.b16 %v1724
    %v1849 = vunpack.c.l.b16 %v1725
    %v1850 = vunpack.c.h.b16 %v1725
    %v1851 = vunpack.c.l.b16 %v1726
    %v1852 = vunpack.c.h.b16 %v1726
    %v1853 = vunpack.c.l.b16 %v1727
    %v1854 = vunpack.c.h.b16 %v1727
    %v1855 = vunpack.c.l.b16 %v1728
    %v1856 = vunpack.c.h.b16 %v1728
    %v1857 = vunpack.c.l.b16 %v1729
    %v1858 = vunpack.c.h.b16 %v1729
    %v1859 = vunpack.c.l.b16 %v1730
    %v1860 = vunpack.c.h.b16 %v1730
    %v1861 = vunpack.c.l.b16 %v1731
    %v1862 = vunpack.c.h.b16 %v1731
    %v1863 = vunpack.c.l.b16 %v1732
    %v1864 = vunpack.c.h.b16 %v1732
    %v1865 = vunpack.c.l.b16 %v1733
    %v1866 = vunpack.c.h.b16 %v1733
    %v1867 = vunpack.c.l.b16 %v1734
    %v1868 = vunpack.c.h.b16 %v1734
    %v1869 = vunpack.c.l.b16 %v1735
    %v1870 = vunpack.c.h.b16 %v1735
    %v1871 = vunpack.c.l.b16 %v1736
    %v1872 = vunpack.c.h.b16 %v1736
    %v1873 = vunpack.c.l.b16 %v1737
    %v1874 = vunpack.c.h.b16 %v1737
    %v1875 = vunpack.c.l.b16 %v1738
    %v1876 = vunpack.c.h.b16 %v1738
    %v1877 = vunpack.c.l.b16 %v1739
    %v1878 = vunpack.c.h.b16 %v1739
    %v1879 = vunpack.c.l.b16 %v1740
    %v1880 = vunpack.c.h.b16 %v1740
    %v1881 = vunpack.c.l.b16 %v1741
    %v1882 = vunpack.c.h.b16 %v1741
    %v1883 = vunpack.c.l.b16 %v1742
    %v1884 = vunpack.c.h.b16 %v1742
    %v1885 = vunpack.c.l.b16 %v1743
    %v1886 = vunpack.c.h.b16 %v1743
    %v1887 = vunpack.c.l.b16 %v1744
    %v1888 = vunpack.c.h.b16 %v1744
    %v1889 = vunpack.c.l.b16 %v1745
    %v1890 = vunpack.c.h.b16 %v1745
    %v1891 = vunpack.c.l.b16 %v1746
    %v1892 = vunpack.c.h.b16 %v1746
    %v1893 = vunpack.c.l.b16 %v1747
    %v1894 = vunpack.c.h.b16 %v1747
    %v1895 = vunpack.c.l.b16 %v1748
    %v1896 = vunpack.c.h.b16 %v1748
    %v1897 = vunpack.c.l.b16 %v1749
    %v1898 = vunpack.c.h.b16 %v1749
    %v1899 = vunpack.c.l.b16 %v1750
    %v1900 = vunpack.c.h.b16 %v1750
    %v1901 = vunpack.c.l.b16 %v1751
    %v1902 = vunpack.c.h.b16 %v1751
    %v1903 = vunpack.c.l.b16 %v1752
    %v1904 = vunpack.c.h.b16 %v1752
    %v1905 = vunpack.c.l.b16 %v1753
    %v1906 = vunpack.c.h.b16 %v1753
    %v1907 = vunpack.c.l.b16 %v1754
    %v1908 = vunpack.c.h.b16 %v1754
    %v1909 = vunpack.c.l.b16 %v1755
    %v1910 = vunpack.c.h.b16 %v1755
    %v1911 = vunpack.c.l.b16 %v1756
    %v1912 = vunpack.c.h.b16 %v1756
    %v1913 = vpack.c.b16 %v1819, %v1817
    %v1914 = vpack.c.b16 %v1820, %v1818
    %v1915 = vpack.c.b16 %v1823, %v1821
    %v1916 = vpack.c.b16 %v1824, %v1822
    %v1917 = vpack.c.b16 %v1827, %v1825
    %v1918 = vpack.c.b16 %v1828, %v1826
    %v1919 = vpack.c.b16 %v1831, %v1829
    %v1920 = vpack.c.b16 %v1832, %v1830
    %v1921 = vpack.c.b16 %v1835, %v1833
    %v1922 = vpack.c.b16 %v1836, %v1834
    %v1923 = vpack.c.b16 %v1839, %v1837
    %v1924 = vpack.c.b16 %v1840, %v1838
    %v1925 = vpack.c.b16 %v1843, %v1841
    %v1926 = vpack.c.b16 %v1844, %v1842
    %v1927 = vpack.c.b16 %v1847, %v1845
    %v1928 = vpack.c.b16 %v1848, %v1846
    %v1929 = vpack.c.b16 %v1851, %v1849
    %v1930 = vpack.c.b16 %v1852, %v1850
    %v1931 = vpack.c.b16 %v1855, %v1853
    %v1932 = vpack.c.b16 %v1856, %v1854
    %v1933 = vpack.c.b16 %v1859, %v1857
    %v1934 = vpack.c.b16 %v1860, %v1858
    %v1935 = vpack.c.b16 %v1863, %v1861
    %v1936 = vpack.c.b16 %v1864, %v1862
    %v1937 = vpack.c.b16 %v1867, %v1865
    %v1938 = vpack.c.b16 %v1868, %v1866
    %v1939 = vpack.c.b16 %v1871, %v1869
    %v1940 = vpack.c.b16 %v1872, %v1870
    %v1941 = vpack.c.b16 %v1875, %v1873
    %v1942 = vpack.c.b16 %v1876, %v1874
    %v1943 = vpack.c.b16 %v1879, %v1877
    %v1944 = vpack.c.b16 %v1880, %v1878
    %v1945 = vpack.c.b16 %v1883, %v1881
    %v1946 = vpack.c.b16 %v1884, %v1882
    %v1947 = vpack.c.b16 %v1887, %v1885
    %v1948 = vpack.c.b16 %v1888, %v1886
    %v1949 = vpack.c.b16 %v1891, %v1889
    %v1950 = vpack.c.b16 %v1892, %v1890
    %v1951 = vpack.c.b16 %v1895, %v1893
    %v1952 = vpack.c.b16 %v1896, %v1894
    %v1953 = vpack.c.b16 %v1899, %v1897
    %v1954 = vpack.c.b16 %v1900, %v1898
    %v1955 = vpack.c.b16 %v1903, %v1901
    %v1956 = vpack.c.b16 %v1904, %v1902
    %v1957 = vpack.c.b16 %v1907, %v1905
    %v1958 = vpack.c.b16 %v1908, %v1906
    %v1959 = vpack.c.b16 %v1911, %v1909
    %v1960 = vpack.c.b16 %v1912, %v1910
    %2009 = vmatprep.subr.bf16.mxu0 %v1914
    %2010 = vmatpush1.bf16.msra.mxu0 %v1913
    %2011 = vmatprep.subr.bf16.mxu0 %v1916
    %2012 = vmatpush1.bf16.msra.mxu0 %v1915
    %2013 = vmatprep.subr.bf16.mxu0 %v1918
    %2014 = vmatpush1.bf16.msra.mxu0 %v1917
    %2015 = vmatprep.subr.bf16.mxu0 %v1920
    %2016 = vmatpush1.bf16.msra.mxu0 %v1919
    %2017 = vmatprep.subr.bf16.mxu0 %v1922
    %2018 = vmatpush1.bf16.msra.mxu0 %v1921
    %2019 = vmatprep.subr.bf16.mxu0 %v1924
    %2020 = vmatpush1.bf16.msra.mxu0 %v1923
    %2021 = vmatprep.subr.bf16.mxu0 %v1926
    %2022 = vmatpush1.bf16.msra.mxu0 %v1925
    %2023 = vmatprep.subr.bf16.mxu0 %v1928
    %2024 = vmatpush1.bf16.msra.mxu0 %v1927
    %2025 = vmatprep.subr.bf16.mxu0 %v1930
    %2026 = vmatpush1.bf16.msra.mxu0 %v1929
    %2027 = vmatprep.subr.bf16.mxu0 %v1932
    %2028 = vmatpush1.bf16.msra.mxu0 %v1931
    %2029 = vmatprep.subr.bf16.mxu0 %v1934
    %2030 = vmatpush1.bf16.msra.mxu0 %v1933
    %2031 = vmatprep.subr.bf16.mxu0 %v1936
    %2032 = vmatpush1.bf16.msra.mxu0 %v1935
    %2033 = vmatprep.subr.bf16.mxu0 %v1938
    %2034 = vmatpush1.bf16.msra.mxu0 %v1937
    %2035 = vmatprep.subr.bf16.mxu0 %v1940
    %2036 = vmatpush1.bf16.msra.mxu0 %v1939
    %2037 = vmatprep.subr.bf16.mxu0 %v1942
    %2038 = vmatpush1.bf16.msra.mxu0 %v1941
    %2039 = vmatprep.subr.bf16.mxu0 %v1944
    %2040 = vmatpush1.bf16.msra.mxu0 %v1943
    %2041 = vmatprep.mubr.bf16.mxu0 %v1707
    %2042 = vmatmul.mubr.bf16.gmra.mrb[0].mxu0 %v1706
    %v2043 = vpop.f32.mrb[0].mxu0
    %v2044 = vadd.f32 %v1762, %v2043
    %v2045 = vpop.f32.mrb[0].mxu0
    %v2046 = vadd.f32 %v1766, %v2045
    %v2047 = vpop.f32.mrb[0].mxu0
    %v2048 = vpop.f32.mrb[0].mxu0
    %2049 = vdwg.mxu0
    %2050 = vmatprep.subr.bf16.mxu0 %v1946
    %2051 = vmatpush1.bf16.msra.mxu0 %v1945
    %2052 = vmatprep.subr.bf16.mxu0 %v1948
    %2053 = vmatpush1.bf16.msra.mxu0 %v1947
    %2054 = vmatprep.subr.bf16.mxu0 %v1950
    %2055 = vmatpush1.bf16.msra.mxu0 %v1949
    %2056 = vmatprep.subr.bf16.mxu0 %v1952
    %2057 = vmatpush1.bf16.msra.mxu0 %v1951
    %2058 = vmatprep.subr.bf16.mxu0 %v1954
    %2059 = vmatpush1.bf16.msra.mxu0 %v1953
    %2060 = vmatprep.subr.bf16.mxu0 %v1956
    %2061 = vmatpush1.bf16.msra.mxu0 %v1955
    %2062 = vmatprep.subr.bf16.mxu0 %v1958
    %2063 = vmatpush1.bf16.msra.mxu0 %v1957
    %2064 = vmatprep.subr.bf16.mxu0 %v1960
    %2065 = vmatpush1.bf16.msra.mxu0 %v1959
    %2066 = vmatprep.subr.bf16.mxu0 0
    %2067 = vmatpush1.bf16.msra.mxu0 0
    %2068 = vmatprep.subr.bf16.mxu0 0
    %2069 = vmatpush1.bf16.msra.mxu0 0
    %2070 = vmatprep.subr.bf16.mxu0 0
    %2071 = vmatpush1.bf16.msra.mxu0 0
    %2072 = vmatprep.subr.bf16.mxu0 0
    %2073 = vmatpush1.bf16.msra.mxu0 0
    %2074 = vmatprep.subr.bf16.mxu0 0
    %2075 = vmatpush1.bf16.msra.mxu0 0
    %2076 = vmatprep.subr.bf16.mxu0 0
    %2077 = vmatpush1.bf16.msra.mxu0 0
    %2078 = vmatprep.subr.bf16.mxu0 0
    %2079 = vmatpush1.bf16.msra.mxu0 0
    %2080 = vmatprep.subr.bf16.mxu0 0
    %2081 = vmatpush1.bf16.msra.mxu0 0
    %2082 = vmatprep.mubr.bf16.mxu0 0
    %2083 = vmatmul.mubr.bf16.gmra.mrb[0].mxu0 %v1708
    %v2084 = vpop.f32.mrb[0].mxu0
    %v2085 = vadd.f32 %v2044, %v2084
    %v2086 = vpop.f32.mrb[0].mxu0
    %v2087 = vadd.f32 %v2046, %v2086
    %v2088 = vpop.f32.mrb[0].mxu0
    %v2089 = vpop.f32.mrb[0].mxu0
    %2090 = vdwg.mxu0
    %v2091 = vmax.f32 %v2085, 0.0
    %v2092 = vmax.f32 %v2087, 0.0
    %v2093 = vpack.c.bf16 %v2091, %v2091
    %v2094 = vpack.c.bf16 %v2092, %v2092
    %v2095 = vld [vmem:[%s5] sm:$0xf]
    %v2096 = vld [vmem:[%s5 + $0x4] sm:$0xf]
    %v2097 = vld [vmem:[%s5 + $0x8] sm:$0xf]
    %v2098 = vld [vmem:[%s5 + $0xc] sm:$0xf]
    %v2099 = vld [vmem:[%s5 + $0x10] sm:$0xf]
    %v2100 = vld [vmem:[%s5 + $0x14] sm:$0xf]
    %v2101 = vld [vmem:[%s5 + $0x18] sm:$0xf]
    %v2102 = vld [vmem:[%s5 + $0x1c] sm:$0xf]
    %v2103 = vld [vmem:[%s5 + $0x20] sm:$0xf]
    %v2104 = vld [vmem:[%s5 + $0x24] sm:$0xf]
    %v2105 = vld [vmem:[%s5 + $0x28] sm:$0xf]
    %v2106 = vld [vmem:[%s5 + $0x2c] sm:$0xf]
    %v2107 = vld [vmem:[%s5 + $0x30] sm:$0xf]
    %v2108 = vld [vmem:[%s5 + $0x34] sm:$0xf]
    %v2109 = vld [vmem:[%s5 + $0x38] sm:$0xf]
    %v2110 = vld [vmem:[%s5 + $0x3c] sm:$0xf]
    %v2111 = vld [vmem:[%s5 + $0x40] sm:$0xf]
    %v2112 = vld [vmem:[%s5 + $0x44] sm:$0xf]
    %v2113 = vld [vmem:[%s5 + $0x48] sm:$0xf]
    %v2114 = vld [vmem:[%s5 + $0x4c] sm:$0xf]
    %v2115 = vld [vmem:[%s5 + $0x50] sm:$0xf]
    %v2116 = vld [vmem:[%s5 + $0x54] sm:$0xf]
    %v2117 = vld [vmem:[%s5 + $0x58] sm:$0xf]
    %v2118 = vld [vmem:[%s5 + $0x5c] sm:$0xf]
    %v2119 = vld [vmem:[%s6] sm:$0x1]
    %v2121 = vlaneseq
    %v2122 = vshrl.u32 %v2121, 7
    %v2123 = vsub.s32 0, %v2122
    %v2124 = vrot.slane %v2119, %v2123
    %v2150 = vunpack.c.l.b16 %v2095
    %v2151 = vunpack.c.l.b16 %v2096
    %v2152 = vunpack.c.l.b16 %v2097
    %v2153 = vunpack.c.l.b16 %v2098
    %v2154 = vunpack.c.l.b16 %v2099
    %v2155 = vunpack.c.l.b16 %v2100
    %v2156 = vunpack.c.l.b16 %v2101
    %v2157 = vunpack.c.l.b16 %v2102
    %v2158 = vunpack.c.l.b16 %v2103
    %v2159 = vunpack.c.l.b16 %v2104
    %v2160 = vunpack.c.l.b16 %v2105
    %v2161 = vunpack.c.l.b16 %v2106
    %v2162 = vunpack.c.l.b16 %v2107
    %v2163 = vunpack.c.l.b16 %v2108
    %v2164 = vunpack.c.l.b16 %v2109
    %v2165 = vunpack.c.l.b16 %v2110
    %v2166 = vunpack.c.l.b16 %v2111
    %v2167 = vunpack.c.l.b16 %v2112
    %v2168 = vunpack.c.l.b16 %v2113
    %v2169 = vunpack.c.l.b16 %v2114
    %v2170 = vunpack.c.l.b16 %v2115
    %v2171 = vunpack.c.l.b16 %v2116
    %v2172 = vunpack.c.l.b16 %v2117
    %v2173 = vunpack.c.l.b16 %v2118
    %v2174 = vpack.c.b16 %v2151, %v2150
    %v2175 = vpack.c.b16 %v2153, %v2152
    %v2176 = vpack.c.b16 %v2155, %v2154
    %v2177 = vpack.c.b16 %v2157, %v2156
    %v2178 = vpack.c.b16 %v2159, %v2158
    %v2179 = vpack.c.b16 %v2161, %v2160
    %v2180 = vpack.c.b16 %v2163, %v2162
    %v2181 = vpack.c.b16 %v2165, %v2164
    %v2182 = vpack.c.b16 %v2167, %v2166
    %v2183 = vpack.c.b16 %v2169, %v2168
    %v2184 = vpack.c.b16 %v2171, %v2170
    %v2185 = vpack.c.b16 %v2173, %v2172
    %vm2198 = vcmask 523264
    %v2200 = vsel %vm2198, %v2094, 0
    %2202 = vmatprep.subr.bf16.mxu0 0
    %2203 = vmatpush1.bf16.msra.mxu0 %v2174
    %2204 = vmatprep.subr.bf16.mxu0 0
    %2205 = vmatpush1.bf16.msra.mxu0 %v2175
    %2206 = vmatprep.subr.bf16.mxu0 0
    %2207 = vmatpush1.bf16.msra.mxu0 %v2176
    %2208 = vmatprep.subr.bf16.mxu0 0
    %2209 = vmatpush1.bf16.msra.mxu0 %v2177
    %2210 = vmatprep.subr.bf16.mxu0 0
    %2211 = vmatpush1.bf16.msra.mxu0 %v2178
    %2212 = vmatprep.subr.bf16.mxu0 0
    %2213 = vmatpush1.bf16.msra.mxu0 %v2179
    %2214 = vmatprep.subr.bf16.mxu0 0
    %2215 = vmatpush1.bf16.msra.mxu0 %v2180
    %2216 = vmatprep.subr.bf16.mxu0 0
    %2217 = vmatpush1.bf16.msra.mxu0 %v2181
    %2218 = vmatprep.subr.bf16.mxu0 0
    %2219 = vmatpush1.bf16.msra.mxu0 %v2182
    %2220 = vmatprep.subr.bf16.mxu0 0
    %2221 = vmatpush1.bf16.msra.mxu0 %v2183
    %2222 = vmatprep.subr.bf16.mxu0 0
    %2223 = vmatpush1.bf16.msra.mxu0 %v2184
    %2224 = vmatprep.subr.bf16.mxu0 0
    %2225 = vmatpush1.bf16.msra.mxu0 %v2185
    %2226 = vmatprep.subr.bf16.mxu0 0
    %2227 = vmatpush1.bf16.msra.mxu0 0
    %2228 = vmatprep.subr.bf16.mxu0 0
    %2229 = vmatpush1.bf16.msra.mxu0 0
    %2230 = vmatprep.subr.bf16.mxu0 0
    %2231 = vmatpush1.bf16.msra.mxu0 0
    %2232 = vmatprep.subr.bf16.mxu0 0
    %2233 = vmatpush1.bf16.msra.mxu0 0
    %2234 = vmatprep.mubr.bf16.mxu0 %v2200
    %2235 = vmatmul.mubr.bf16.gmra.mrb[0].mxu0 %v2093
    %v2236 = vpop.f32.mrb[0].mxu0
    %v2237 = vadd.f32 %v2124, %v2236
    %v2238 = vpop.f32.mrb[0].mxu0
    %v2239 = vpop.f32.mrb[0].mxu0
    %v2240 = vpop.f32.mrb[0].mxu0
    %2241 = vdwg.mxu0
    %vm2242 = vcmask 74752
    %v2243 = vsel %vm2242, %v2237, -inf
    %2244 = vmax.xlane.f32.xlu0 %v2243
    %v2245 = vpop.xlane.xlu0 %2244
    %v2246 = vsub.f32 %v2237, %v2245
    %v2247 = vmul.f32 %v2246, 1.442695
    %v2248 = vpow.pop %v2247
    %v2249 = vsel %vm2242, %v2248, 0.0
    %2250 = vadd.xlane.f32.xlu0 %v2249
    %v2251 = vpop.xlane.xlu0 %2250
    %v2252 = vlog2.pop %v2251
    %v2253 = vmul.f32 %v2252, 0.6931472
    %v2254 = vsub.f32 %v2246, %v2253
    %2255 = vst.msk [vmem:[#allocation2] sm:$0x3] %vm2242, %v2254
    // Predicated region
    $region30: #{cnn_cifar_forward.5} parent=1 // pred_check
      _
    $region31: #{cnn_cifar_forward.5} parent=1 // pred_check_branch
      %2257 = sbr.rel (0) target = $region33
    $region32: #{cnn_cifar_forward.5} parent=1 // pred_region
      %s2259 = ssub.s32 32, 32
      %2260 = vsyncadd [#allocation3], %s2259
      %s2262 = sshll.u32 [#allocation2], 4
      %s2263 = int_to_ptr.vmem [resolvable:$true] %s2262
      %2265 = dma.vmem_to_hbm [thread:$0]  %s2263, 32, %s7, [#allocation3]
    $region33: #{cnn_cifar_forward.5} parent=1 // pred_fallthru
      _
    // Predicated region
    $region34: #{cnn_cifar_forward.5} parent=1 // pred_check
      _
    $region35: #{cnn_cifar_forward.5} parent=1 // pred_check_branch
      %2267 = sbr.rel (0) target = $region37
    $region36: #{cnn_cifar_forward.5} parent=1 // pred_region
      %2268 = dma.done [#allocation3], 32
    $region37: #{cnn_cifar_forward.5} parent=1 // pred_fallthru
      _
    %2269 = vsyncpa [#allocation3], 1

</llo_original>
